<compile_context>
chip_gen: v7x
topology: tpu7x:2x2x1
jax: 0.10.0
libtpu: 0.0.40
codegen_flags: <defaults>
</compile_context>

<pallas_src>
import numpy as np
import jax
import jax.numpy as jnp
from jax import lax
from jax.experimental import pallas as pl
from jax.experimental.pallas import tpu as pltpu


def _round_up(x, m):
    return (x + m - 1) // m * m


def _pad_gate_weight_T(w, H, Hp):
    """Torch GRU weight (3H, H) -> transposed, per-gate lane-padded (Hp, 3*Hp)."""
    w3 = w.reshape(3, H, H)                                      # (gate, out, in)
    wp = jnp.zeros((3, Hp, Hp), w.dtype).at[:, :H, :H].set(w3)
    return wp.transpose(2, 0, 1).reshape(Hp, 3 * Hp)             # (in, gate*out)


def _pad_gate_bias(b, H, Hp):
    b3 = b.reshape(3, H)
    return jnp.zeros((3, Hp), b.dtype).at[:, :H].set(b3).reshape(3 * Hp)


def _pick_time_chunk(T, Bp, Hp, budget_bytes=24 << 20):
    """Largest time chunk whose streamed blocks (gi+out, 2 dirs, double-buffered)
    fit a conservative VMEM budget (sized for v7x's smaller VMEM)."""
    t_cap = _round_up(max(T, 1), 8)
    tc = min(t_cap, 64)
    per_step_bytes = 2 * 2 * Bp * (3 * Hp + Hp) * 4
    while tc > 8 and tc * per_step_bytes > budget_bytes:
        tc //= 2
    return min(tc, t_cap)


def _vmem_limit_bytes(Tc, Bp, Hp):
    f32, bf16 = 4, 2
    stream = 2 * 2 * Tc * Bp * (3 * Hp + Hp) * f32     # gi_f/gi_b + out_f/out_b (dbl-buf)
    hid = 2 * 2 * Bp * Hp * f32
    weights = 2 * 2 * Hp * 3 * Hp * bf16
    small = 2 * 2 * (Bp + 2 * Hp) * f32
    scratch = 2 * Bp * Hp * f32
    total = stream + hid + weights + small + scratch + (2 << 20)
    return int(min(max(total * 3 // 2, 32 << 20), 64 << 20))


def _make_bigru_kernel(Tc, num_chunks, Hp, unroll):
    def kernel(lens_ref, gi_f_ref, gi_b_ref, w_hh_f_ref, w_hh_b_ref,
               bhn_f_ref, bhn_b_ref, out_f_ref, out_b_ref, hid_ref,
               hf_scr, hb_scr):
        c = pl.program_id(0)

        @pl.when(c == 0)
        def _():
            hf_scr[...] = jnp.zeros_like(hf_scr)
            hb_scr[...] = jnp.zeros_like(hb_scr)

        # Hoisted loads (off the serial per-step path).
        lens = lens_ref[...]                      # (Bp, 1) int32
        w_f = w_hh_f_ref[...]                     # (Hp, 3Hp) bf16
        w_b = w_hh_b_ref[...]
        bhn_f = bhn_f_ref[...]                    # (1, Hp) f32
        bhn_b = bhn_b_ref[...]

        fwd_base = c * Tc
        bwd_base = (num_chunks - 1 - c) * Tc

        def cell(gi_t, h, w_bf, bhn):
            # Only the recurrent matmul is on the serial critical path; bf16
            # operands, f32 accumulation, f32 gate math.
            gh = jnp.dot(h.astype(jnp.bfloat16), w_bf,
                         preferred_element_type=jnp.float32)
            r = jax.nn.sigmoid(gi_t[:, 0:Hp] + gh[:, 0:Hp])
            z = jax.nn.sigmoid(gi_t[:, Hp:2 * Hp] + gh[:, Hp:2 * Hp])
            n = jnp.tanh(gi_t[:, 2 * Hp:3 * Hp] + r * (gh[:, 2 * Hp:3 * Hp] + bhn))
            return n + z * (h - n)                # == (1 - z) * n + z * h

        def body(j, carry):
            h_f, h_b = carry
            jb = Tc - 1 - j
            # The two directions are independent -> their MXU/EUP/VPU work overlaps.
            h_f_new = cell(gi_f_ref[j], h_f, w_f, bhn_f)
            h_b_new = cell(gi_b_ref[jb], h_b, w_b, bhn_b)
            mask_f = (fwd_base + j) < lens        # (Bp, 1)
            mask_b = (bwd_base + jb) < lens
            out_f_ref[j] = jnp.where(mask_f, h_f_new, 0.0)     # zero-pad outputs
            out_b_ref[jb] = jnp.where(mask_b, h_b_new, 0.0)
            return (jnp.where(mask_f, h_f_new, h_f),           # freeze finished seqs
                    jnp.where(mask_b, h_b_new, h_b))

        h_f, h_b = lax.fori_loop(0, Tc, body, (hf_scr[...], hb_scr[...]),
                                 unroll=unroll)
        hf_scr[...] = h_f
        hb_scr[...] = h_b
        # hid block index is constant across the grid -> only the last chunk's
        # values (the true final states) are written back to HBM.
        hid_ref[0] = h_f
        hid_ref[1] = h_b

    return kernel


def _bigru_pallas(lens_col, gi_f, gi_b, w_hh_f_bf, w_hh_b_bf, bhn_f, bhn_b, Tc):
    T_pad, Bp, G = gi_f.shape
    Hp = G // 3
    num_chunks = T_pad // Tc
    unroll = True if Tc <= 16 else 8
    kernel = _make_bigru_kernel(Tc, num_chunks, Hp, unroll)

    grid_spec = pltpu.PrefetchScalarGridSpec(
        num_scalar_prefetch=0,
        grid=(num_chunks,),
        in_specs=[
            pl.BlockSpec((Bp, 1), lambda c: (0, 0)),                         # lens
            pl.BlockSpec((Tc, Bp, 3 * Hp), lambda c: (c, 0, 0)),             # gi_f (fwd order)
            pl.BlockSpec((Tc, Bp, 3 * Hp),
                         lambda c: (num_chunks - 1 - c, 0, 0)),              # gi_b (rev order)
            pl.BlockSpec((Hp, 3 * Hp), lambda c: (0, 0)),                    # W_hh fwd (bf16)
            pl.BlockSpec((Hp, 3 * Hp), lambda c: (0, 0)),                    # W_hh bwd (bf16)
            pl.BlockSpec((1, Hp), lambda c: (0, 0)),                         # b_hh_n fwd
            pl.BlockSpec((1, Hp), lambda c: (0, 0)),                         # b_hh_n bwd
        ],
        out_specs=(
            pl.BlockSpec((Tc, Bp, Hp), lambda c: (c, 0, 0)),                 # out_f
            pl.BlockSpec((Tc, Bp, Hp), lambda c: (num_chunks - 1 - c, 0, 0)),# out_b
            pl.BlockSpec((2, Bp, Hp), lambda c: (0, 0, 0)),                  # hidden
        ),
        scratch_shapes=[pltpu.VMEM((Bp, Hp), jnp.float32),    # fwd recurrent state
                        pltpu.VMEM((Bp, Hp), jnp.float32)],   # bwd recurrent state
    )
    out_f, out_b, hid = pl.pallas_call(
        kernel,
        grid_spec=grid_spec,
        out_shape=(
            jax.ShapeDtypeStruct((T_pad, Bp, Hp), jnp.float32),
            jax.ShapeDtypeStruct((T_pad, Bp, Hp), jnp.float32),
            jax.ShapeDtypeStruct((2, Bp, Hp), jnp.float32),
        ),
        compiler_params=pltpu.CompilerParams(
            dimension_semantics=("arbitrary",),
            vmem_limit_bytes=_vmem_limit_bytes(Tc, Bp, Hp),
        ),
    )(lens_col, gi_f, gi_b, w_hh_f_bf, w_hh_b_bf, bhn_f, bhn_b)
    return out_f, out_b, hid


def encoder_rnn_forward(params, input_seqs, input_lengths):
    """Pallas implementation of EncoderRNN.forward (n_layers=1 => dropout inactive)."""
    emb_tbl = params["embedding"]
    H = emb_tbl.shape[1]
    T, B = input_seqs.shape
    Hp = _round_up(H, 128)   # lane alignment
    Bp = _round_up(B, 8)     # sublane alignment
    Tc = _pick_time_chunk(T, Bp, Hp)
    T_pad = _round_up(T, Tc)

    # glue: embedding gather + padding to aligned shapes (padded entries are zero)
    embedded = emb_tbl[input_seqs]                               # (T, B, H)
    embedded = jnp.pad(embedded, ((0, T_pad - T), (0, Bp - B), (0, Hp - H)))
    emb_bf = embedded.astype(jnp.bfloat16)

    # Hoisted input projection (one big MXU matmul per direction, bf16 operands,
    # f32 accumulation). b_hh_r and b_hh_z are folded into the projection bias;
    # only b_hh_n must stay inside the cell (because of the r* term).
    def gi_for(w_ih, b_ih, b_hh):
        w_T = _pad_gate_weight_T(w_ih, H, Hp).astype(jnp.bfloat16)        # (Hp, 3Hp)
        bias = _pad_gate_bias(b_ih, H, Hp) \
            + _pad_gate_bias(b_hh, H, Hp).at[2 * Hp:].set(0.0)            # (3Hp,)
        return jnp.einsum('tbh,hk->tbk', emb_bf, w_T,
                          preferred_element_type=jnp.float32) + bias      # (T_pad,Bp,3Hp)

    gi_f = gi_for(params["w_ih_f"], params["b_ih_f"], params["b_hh_f"])
    gi_b = gi_for(params["w_ih_b"], params["b_ih_b"], params["b_hh_b"])

    w_hh_f_bf = _pad_gate_weight_T(params["w_hh_f"], H, Hp).astype(jnp.bfloat16)
    w_hh_b_bf = _pad_gate_weight_T(params["w_hh_b"], H, Hp).astype(jnp.bfloat16)

    def bhn(b_hh):
        return jnp.zeros((1, Hp), jnp.float32).at[0, :H].set(b_hh[2 * H:3 * H])

    # lengths as a tiny (Bp,1) int32 column; padded batch rows get length 0.
    lens = jnp.zeros((Bp,), jnp.int32).at[:B].set(input_lengths.astype(jnp.int32))
    lens_col = lens[:, None]

    out_f, out_b, hid = _bigru_pallas(lens_col, gi_f, gi_b, w_hh_f_bf, w_hh_b_bf,
                                      bhn(params["b_hh_f"]), bhn(params["b_hh_b"]), Tc)
    outputs = out_f[:T, :B, :H] + out_b[:T, :B, :H]   # single vectorized fwd+bwd add
    hidden = hid[:, :B, :H]
    return outputs, hidden


# ---------------- pure-JAX reference (for correctness check) ----------------
def _gru_dir_ref(x, lens, w_ih, w_hh, b_ih, b_hh, reverse):
    T, B, H = x.shape

    def step(h, t):
        xt = x[t]
        gi = xt @ w_ih.T + b_ih
        gh = h @ w_hh.T + b_hh
        r = jax.nn.sigmoid(gi[:, :H] + gh[:, :H])
        z = jax.nn.sigmoid(gi[:, H:2 * H] + gh[:, H:2 * H])
        n = jnp.tanh(gi[:, 2 * H:] + r * gh[:, 2 * H:])
        h_new = (1.0 - z) * n + z * h
        mask = (t < lens)[:, None]
        h_upd = jnp.where(mask, h_new, h)
        return h_upd, (t, jnp.where(mask, h_new, 0.0))

    ts = jnp.arange(T - 1, -1, -1) if reverse else jnp.arange(T)
    h_n, (tidx, outs) = jax.lax.scan(step, jnp.zeros((B, H), jnp.float32), ts)
    out = jnp.zeros((T, B, H), jnp.float32).at[tidx].set(outs)
    return out, h_n


def _reference_forward(params, input_seqs, input_lengths):
    embedded = params["embedding"][input_seqs]
    lens = input_lengths.astype(jnp.int32)
    of, hf = _gru_dir_ref(embedded, lens, params["w_ih_f"], params["w_hh_f"],
                          params["b_ih_f"], params["b_hh_f"], False)
    ob, hb = _gru_dir_ref(embedded, lens, params["w_ih_b"], params["w_hh_b"],
                          params["b_ih_b"], params["b_hh_b"], True)
    return of + ob, jnp.stack([hf, hb], axis=0)


def init_params(key, vocab_size, hidden_size):
    ks = jax.random.split(key, 9)
    k = 1.0 / np.sqrt(hidden_size)
    u = lambda kk, shape: jax.random.uniform(kk, shape, jnp.float32, minval=-k, maxval=k)
    return {
        "embedding": jax.random.normal(ks[0], (vocab_size, hidden_size), jnp.float32),
        "w_ih_f": u(ks[1], (3 * hidden_size, hidden_size)),
        "w_hh_f": u(ks[2], (3 * hidden_size, hidden_size)),
        "b_ih_f": u(ks[3], (3 * hidden_size,)),
        "b_hh_f": u(ks[4], (3 * hidden_size,)),
        "w_ih_b": u(ks[5], (3 * hidden_size, hidden_size)),
        "w_hh_b": u(ks[6], (3 * hidden_size, hidden_size)),
        "b_ih_b": u(ks[7], (3 * hidden_size,)),
        "b_hh_b": u(ks[8], (3 * hidden_size,)),
    }


if __name__ == "__main__":
    VOCAB, HIDDEN, T, B = 20, 32, 8, 4

    key = jax.random.PRNGKey(0)
    k_param, k_tok = jax.random.split(key)
    params = init_params(k_param, VOCAB, HIDDEN)

    input_seqs = jax.random.randint(k_tok, (T, B), 0, VOCAB, dtype=jnp.int32)
    input_lengths = jnp.array([8, 7, 5, 3], dtype=jnp.int32)  # sorted desc, max == T

    outputs, hidden = jax.jit(encoder_rnn_forward)(params, input_seqs, input_lengths)
    jax.block_until_ready((outputs, hidden))

    ref_out, ref_hid = _reference_forward(params, input_seqs, input_lengths)
    # bf16 MXU operands (f32 accumulation / gate math) -> looser tolerance.
    np.testing.assert_allclose(np.asarray(outputs), np.asarray(ref_out), atol=5e-2, rtol=5e-2)
    np.testing.assert_allclose(np.asarray(hidden), np.asarray(ref_hid), atol=5e-2, rtol=5e-2)

    print("KERNEL_OK")
</pallas_src>

<mosaic_0001>
module attributes {stable_mosaic.version = 11 : i64} {
  func.func @kernel(%arg0: i32, %arg1: memref<8x1xi32, #tpu.memory_space<vmem>>, %arg2: memref<8x8x384xf32, #tpu.memory_space<vmem>>, %arg3: memref<8x8x384xf32, #tpu.memory_space<vmem>>, %arg4: memref<128x384xbf16, #tpu.memory_space<vmem>>, %arg5: memref<128x384xbf16, #tpu.memory_space<vmem>>, %arg6: memref<1x128xf32, #tpu.memory_space<vmem>>, %arg7: memref<1x128xf32, #tpu.memory_space<vmem>>, %arg8: memref<8x8x128xf32, #tpu.memory_space<vmem>>, %arg9: memref<8x8x128xf32, #tpu.memory_space<vmem>>, %arg10: memref<2x8x128xf32, #tpu.memory_space<vmem>>, %arg11: memref<8x128xf32, #tpu.memory_space<vmem>>, %arg12: memref<8x128xf32, #tpu.memory_space<vmem>>) attributes {dimension_semantics = [#tpu.dimension_semantics<arbitrary>], iteration_bounds = array<i64: 1>, scalar_prefetch = 0 : i64, scratch_operands = 2 : i64, tpu.core_type = #tpu.core_type<tc>, window_params = [{pipeline_mode = #tpu.pipeline_mode<synchronous>, transform_indices = @transform_0, window_bounds = array<i64: 8, 1>}, {transform_indices = @transform_1, window_bounds = array<i64: 8, 8, 384>}, {transform_indices = @transform_2, window_bounds = array<i64: 8, 8, 384>}, {pipeline_mode = #tpu.pipeline_mode<synchronous>, transform_indices = @transform_3, window_bounds = array<i64: 128, 384>}, {pipeline_mode = #tpu.pipeline_mode<synchronous>, transform_indices = @transform_4, window_bounds = array<i64: 128, 384>}, {pipeline_mode = #tpu.pipeline_mode<synchronous>, transform_indices = @transform_5, window_bounds = array<i64: 1, 128>}, {pipeline_mode = #tpu.pipeline_mode<synchronous>, transform_indices = @transform_6, window_bounds = array<i64: 1, 128>}, {transform_indices = @transform_7, window_bounds = array<i64: 8, 8, 128>}, {transform_indices = @transform_8, window_bounds = array<i64: 8, 8, 128>}, {pipeline_mode = #tpu.pipeline_mode<synchronous>, transform_indices = @transform_9, window_bounds = array<i64: 2, 8, 128>}]} {
    %c0_i32 = arith.constant 0 : i32
    %0 = arith.cmpi eq, %arg0, %c0_i32 : i32
    %1 = arith.extui %0 : i1 to i32
    %c0_i32_0 = arith.constant 0 : i32
    %2 = arith.cmpi ne, %1, %c0_i32_0 : i32
    scf.if %2 {
      %cst_162 = arith.constant 0.000000e+00 : f32
      %749 = vector.broadcast %cst_162 : f32 to vector<8x128xf32>
      %c0_163 = arith.constant 0 : index
      %c0_164 = arith.constant 0 : index
      %750 = vector.load %arg11[%c0_163, %c0_164] : memref<8x128xf32, #tpu.memory_space<vmem>>, vector<8x128xf32>
      tpu.vector_store %arg11[%c0_163, %c0_164], %749 {strides = array<i32>} : memref<8x128xf32, #tpu.memory_space<vmem>>, vector<8x128xf32>,
      %cst_165 = arith.constant 0.000000e+00 : f32
      %751 = vector.broadcast %cst_165 : f32 to vector<8x128xf32>
      %c0_166 = arith.constant 0 : index
      %c0_167 = arith.constant 0 : index
      %752 = vector.load %arg12[%c0_166, %c0_167] : memref<8x128xf32, #tpu.memory_space<vmem>>, vector<8x128xf32>
      tpu.vector_store %arg12[%c0_166, %c0_167], %751 {strides = array<i32>} : memref<8x128xf32, #tpu.memory_space<vmem>>, vector<8x128xf32>,
    } else {
    }
    %c0 = arith.constant 0 : index
    %c0_1 = arith.constant 0 : index
    %3 = vector.load %arg1[%c0, %c0_1] : memref<8x1xi32, #tpu.memory_space<vmem>>, vector<8x1xi32>
    %c0_2 = arith.constant 0 : index
    %c0_3 = arith.constant 0 : index
    %4 = vector.load %arg4[%c0_2, %c0_3] : memref<128x384xbf16, #tpu.memory_space<vmem>>, vector<128x384xbf16>
    %c0_4 = arith.constant 0 : index
    %c0_5 = arith.constant 0 : index
    %5 = vector.load %arg5[%c0_4, %c0_5] : memref<128x384xbf16, #tpu.memory_space<vmem>>, vector<128x384xbf16>
    %c0_6 = arith.constant 0 : index
    %c0_7 = arith.constant 0 : index
    %6 = vector.load %arg6[%c0_6, %c0_7] : memref<1x128xf32, #tpu.memory_space<vmem>>, vector<1x128xf32>
    %c0_8 = arith.constant 0 : index
    %c0_9 = arith.constant 0 : index
    %7 = vector.load %arg7[%c0_8, %c0_9] : memref<1x128xf32, #tpu.memory_space<vmem>>, vector<1x128xf32>
    %c8_i32 = arith.constant 8 : i32
    %8 = arith.muli %arg0, %c8_i32 : i32
    %c0_i32_10 = arith.constant 0 : i32
    %9 = arith.subi %c0_i32_10, %arg0 : i32
    %c8_i32_11 = arith.constant 8 : i32
    %10 = arith.muli %9, %c8_i32_11 : i32
    %c0_12 = arith.constant 0 : index
    %c0_13 = arith.constant 0 : index
    %11 = vector.load %arg11[%c0_12, %c0_13] : memref<8x128xf32, #tpu.memory_space<vmem>>, vector<8x128xf32>
    %c0_14 = arith.constant 0 : index
    %c0_15 = arith.constant 0 : index
    %12 = vector.load %arg12[%c0_14, %c0_15] : memref<8x128xf32, #tpu.memory_space<vmem>>, vector<8x128xf32>
    %c0_i32_16 = arith.constant 0 : i32
    %c7_i32 = arith.constant 7 : i32
    %13 = arith.subi %c7_i32, %c0_i32_16 : i32
    %14 = arith.index_cast %c0_i32_16 : i32 to index
    %c0_17 = arith.constant 0 : index
    %c0_18 = arith.constant 0 : index
    %15 = vector.load %arg2[%14, %c0_17, %c0_18] : memref<8x8x384xf32, #tpu.memory_space<vmem>>, vector<1x8x384xf32>
    %16 = vector.shape_cast %15 : vector<1x8x384xf32> to vector<8x384xf32>
    %17 = arith.truncf %11 : vector<8x128xf32> to vector<8x128xbf16>
    %cst = arith.constant dense<0.000000e+00> : vector<8x384xf32>
    %18 = tpu.matmul %17, %4, %cst {dimension_numbers = #tpu.dot_dimension_numbers<[1], [0], [0], [1], [0, 0, 1, 1], [], []>} : vector<8x128xbf16>, vector<128x384xbf16>, vector<8x384xf32> -> vector<8x384xf32>
    %19 = vector.extract_strided_slice %16 {offsets = [0, 0], sizes = [8, 128], strides = [1, 1]} : vector<8x384xf32> to vector<8x128xf32>
    %20 = vector.extract_strided_slice %18 {offsets = [0, 0], sizes = [8, 128], strides = [1, 1]} : vector<8x384xf32> to vector<8x128xf32>
    %21 = arith.addf %19, %20 : vector<8x128xf32>
    %22 = arith.negf %21 : vector<8x128xf32>
    %23 = math.exp %22 : vector<8x128xf32>
    %cst_19 = arith.constant 1.000000e+00 : f32
    %24 = vector.broadcast %cst_19 : f32 to vector<8x128xf32>
    %25 = arith.addf %24, %23 : vector<8x128xf32>
    %26 = arith.divf %24, %25 : vector<8x128xf32>
    %27 = vector.extract_strided_slice %16 {offsets = [0, 128], sizes = [8, 128], strides = [1, 1]} : vector<8x384xf32> to vector<8x128xf32>
    %28 = vector.extract_strided_slice %18 {offsets = [0, 128], sizes = [8, 128], strides = [1, 1]} : vector<8x384xf32> to vector<8x128xf32>
    %29 = arith.addf %27, %28 : vector<8x128xf32>
    %30 = arith.negf %29 : vector<8x128xf32>
    %31 = math.exp %30 : vector<8x128xf32>
    %cst_20 = arith.constant 1.000000e+00 : f32
    %32 = vector.broadcast %cst_20 : f32 to vector<8x128xf32>
    %33 = arith.addf %32, %31 : vector<8x128xf32>
    %34 = arith.divf %32, %33 : vector<8x128xf32>
    %35 = vector.extract_strided_slice %16 {offsets = [0, 256], sizes = [8, 128], strides = [1, 1]} : vector<8x384xf32> to vector<8x128xf32>
    %36 = vector.extract_strided_slice %18 {offsets = [0, 256], sizes = [8, 128], strides = [1, 1]} : vector<8x384xf32> to vector<8x128xf32>
    %37 = vector.broadcast %6 : vector<1x128xf32> to vector<8x128xf32>
    %38 = arith.addf %36, %37 : vector<8x128xf32>
    %39 = arith.mulf %26, %38 : vector<8x128xf32>
    %40 = arith.addf %35, %39 : vector<8x128xf32>
    %41 = math.tanh %40 : vector<8x128xf32>
    %42 = arith.subf %11, %41 : vector<8x128xf32>
    %43 = arith.mulf %34, %42 : vector<8x128xf32>
    %44 = arith.addf %41, %43 : vector<8x128xf32>
    %45 = arith.index_cast %13 : i32 to index
    %c0_21 = arith.constant 0 : index
    %c0_22 = arith.constant 0 : index
    %46 = vector.load %arg3[%45, %c0_21, %c0_22] : memref<8x8x384xf32, #tpu.memory_space<vmem>>, vector<1x8x384xf32>
    %47 = vector.shape_cast %46 : vector<1x8x384xf32> to vector<8x384xf32>
    %48 = arith.truncf %12 : vector<8x128xf32> to vector<8x128xbf16>
    %cst_23 = arith.constant dense<0.000000e+00> : vector<8x384xf32>
    %49 = tpu.matmul %48, %5, %cst_23 {dimension_numbers = #tpu.dot_dimension_numbers<[1], [0], [0], [1], [0, 0, 1, 1], [], []>} : vector<8x128xbf16>, vector<128x384xbf16>, vector<8x384xf32> -> vector<8x384xf32>
    %50 = vector.extract_strided_slice %47 {offsets = [0, 0], sizes = [8, 128], strides = [1, 1]} : vector<8x384xf32> to vector<8x128xf32>
    %51 = vector.extract_strided_slice %49 {offsets = [0, 0], sizes = [8, 128], strides = [1, 1]} : vector<8x384xf32> to vector<8x128xf32>
    %52 = arith.addf %50, %51 : vector<8x128xf32>
    %53 = arith.negf %52 : vector<8x128xf32>
    %54 = math.exp %53 : vector<8x128xf32>
    %cst_24 = arith.constant 1.000000e+00 : f32
    %55 = vector.broadcast %cst_24 : f32 to vector<8x128xf32>
    %56 = arith.addf %55, %54 : vector<8x128xf32>
    %57 = arith.divf %55, %56 : vector<8x128xf32>
    %58 = vector.extract_strided_slice %47 {offsets = [0, 128], sizes = [8, 128], strides = [1, 1]} : vector<8x384xf32> to vector<8x128xf32>
    %59 = vector.extract_strided_slice %49 {offsets = [0, 128], sizes = [8, 128], strides = [1, 1]} : vector<8x384xf32> to vector<8x128xf32>
    %60 = arith.addf %58, %59 : vector<8x128xf32>
    %61 = arith.negf %60 : vector<8x128xf32>
    %62 = math.exp %61 : vector<8x128xf32>
    %cst_25 = arith.constant 1.000000e+00 : f32
    %63 = vector.broadcast %cst_25 : f32 to vector<8x128xf32>
    %64 = arith.addf %63, %62 : vector<8x128xf32>
    %65 = arith.divf %63, %64 : vector<8x128xf32>
    %66 = vector.extract_strided_slice %47 {offsets = [0, 256], sizes = [8, 128], strides = [1, 1]} : vector<8x384xf32> to vector<8x128xf32>
    %67 = vector.extract_strided_slice %49 {offsets = [0, 256], sizes = [8, 128], strides = [1, 1]} : vector<8x384xf32> to vector<8x128xf32>
    %68 = vector.broadcast %7 : vector<1x128xf32> to vector<8x128xf32>
    %69 = arith.addf %67, %68 : vector<8x128xf32>
    %70 = arith.mulf %57, %69 : vector<8x128xf32>
    %71 = arith.addf %66, %70 : vector<8x128xf32>
    %72 = math.tanh %71 : vector<8x128xf32>
    %73 = arith.subf %12, %72 : vector<8x128xf32>
    %74 = arith.mulf %65, %73 : vector<8x128xf32>
    %75 = arith.addf %72, %74 : vector<8x128xf32>
    %76 = arith.addi %8, %c0_i32_16 : i32
    %77 = vector.broadcast %76 : i32 to vector<8x1xi32>
    %78 = arith.cmpi slt, %77, %3 : vector<8x1xi32>
    %79 = arith.addi %10, %13 : i32
    %80 = vector.broadcast %79 : i32 to vector<8x1xi32>
    %81 = arith.cmpi slt, %80, %3 : vector<8x1xi32>
    %cst_26 = arith.constant 0.000000e+00 : f32
    %82 = vector.shape_cast %78 : vector<8x1xi1> to vector<8x1xi1>
    %83 = vector.broadcast %82 : vector<8x1xi1> to vector<8x128xi1>
    %84 = vector.broadcast %cst_26 : f32 to vector<8x128xf32>
    %85 = arith.select %83, %44, %84 : vector<8x128xi1>, vector<8x128xf32>
    %86 = arith.index_cast %c0_i32_16 : i32 to index
    %c0_27 = arith.constant 0 : index
    %c0_28 = arith.constant 0 : index
    %87 = vector.load %arg8[%86, %c0_27, %c0_28] : memref<8x8x128xf32, #tpu.memory_space<vmem>>, vector<1x8x128xf32>
    %88 = vector.shape_cast %87 : vector<1x8x128xf32> to vector<8x128xf32>
    %89 = vector.shape_cast %85 : vector<8x128xf32> to vector<1x8x128xf32>
    tpu.vector_store %arg8[%86, %c0_27, %c0_28], %89 {strides = array<i32>} : memref<8x8x128xf32, #tpu.memory_space<vmem>>, vector<1x8x128xf32>,
    %cst_29 = arith.constant 0.000000e+00 : f32
    %90 = vector.shape_cast %81 : vector<8x1xi1> to vector<8x1xi1>
    %91 = vector.broadcast %90 : vector<8x1xi1> to vector<8x128xi1>
    %92 = vector.broadcast %cst_29 : f32 to vector<8x128xf32>
    %93 = arith.select %91, %75, %92 : vector<8x128xi1>, vector<8x128xf32>
    %94 = arith.index_cast %13 : i32 to index
    %c0_30 = arith.constant 0 : index
    %c0_31 = arith.constant 0 : index
    %95 = vector.load %arg9[%94, %c0_30, %c0_31] : memref<8x8x128xf32, #tpu.memory_space<vmem>>, vector<1x8x128xf32>
    %96 = vector.shape_cast %95 : vector<1x8x128xf32> to vector<8x128xf32>
    %97 = vector.shape_cast %93 : vector<8x128xf32> to vector<1x8x128xf32>
    tpu.vector_store %arg9[%94, %c0_30, %c0_31], %97 {strides = array<i32>} : memref<8x8x128xf32, #tpu.memory_space<vmem>>, vector<1x8x128xf32>,
    %98 = vector.shape_cast %78 : vector<8x1xi1> to vector<8x1xi1>
    %99 = vector.broadcast %98 : vector<8x1xi1> to vector<8x128xi1>
    %100 = arith.select %99, %44, %11 : vector<8x128xi1>, vector<8x128xf32>
    %101 = vector.shape_cast %81 : vector<8x1xi1> to vector<8x1xi1>
    %102 = vector.broadcast %101 : vector<8x1xi1> to vector<8x128xi1>
    %103 = arith.select %102, %75, %12 : vector<8x128xi1>, vector<8x128xf32>
    %c1_i32 = arith.constant 1 : i32
    %c7_i32_32 = arith.constant 7 : i32
    %104 = arith.subi %c7_i32_32, %c1_i32 : i32
    %105 = arith.index_cast %c1_i32 : i32 to index
    %c0_33 = arith.constant 0 : index
    %c0_34 = arith.constant 0 : index
    %106 = vector.load %arg2[%105, %c0_33, %c0_34] : memref<8x8x384xf32, #tpu.memory_space<vmem>>, vector<1x8x384xf32>
    %107 = vector.shape_cast %106 : vector<1x8x384xf32> to vector<8x384xf32>
    %108 = arith.truncf %100 : vector<8x128xf32> to vector<8x128xbf16>
    %cst_35 = arith.constant dense<0.000000e+00> : vector<8x384xf32>
    %109 = tpu.matmul %108, %4, %cst_35 {dimension_numbers = #tpu.dot_dimension_numbers<[1], [0], [0], [1], [0, 0, 1, 1], [], []>} : vector<8x128xbf16>, vector<128x384xbf16>, vector<8x384xf32> -> vector<8x384xf32>
    %110 = vector.extract_strided_slice %107 {offsets = [0, 0], sizes = [8, 128], strides = [1, 1]} : vector<8x384xf32> to vector<8x128xf32>
    %111 = vector.extract_strided_slice %109 {offsets = [0, 0], sizes = [8, 128], strides = [1, 1]} : vector<8x384xf32> to vector<8x128xf32>
    %112 = arith.addf %110, %111 : vector<8x128xf32>
    %113 = arith.negf %112 : vector<8x128xf32>
    %114 = math.exp %113 : vector<8x128xf32>
    %cst_36 = arith.constant 1.000000e+00 : f32
    %115 = vector.broadcast %cst_36 : f32 to vector<8x128xf32>
    %116 = arith.addf %115, %114 : vector<8x128xf32>
    %117 = arith.divf %115, %116 : vector<8x128xf32>
    %118 = vector.extract_strided_slice %107 {offsets = [0, 128], sizes = [8, 128], strides = [1, 1]} : vector<8x384xf32> to vector<8x128xf32>
    %119 = vector.extract_strided_slice %109 {offsets = [0, 128], sizes = [8, 128], strides = [1, 1]} : vector<8x384xf32> to vector<8x128xf32>
    %120 = arith.addf %118, %119 : vector<8x128xf32>
    %121 = arith.negf %120 : vector<8x128xf32>
    %122 = math.exp %121 : vector<8x128xf32>
    %cst_37 = arith.constant 1.000000e+00 : f32
    %123 = vector.broadcast %cst_37 : f32 to vector<8x128xf32>
    %124 = arith.addf %123, %122 : vector<8x128xf32>
    %125 = arith.divf %123, %124 : vector<8x128xf32>
    %126 = vector.extract_strided_slice %107 {offsets = [0, 256], sizes = [8, 128], strides = [1, 1]} : vector<8x384xf32> to vector<8x128xf32>
    %127 = vector.extract_strided_slice %109 {offsets = [0, 256], sizes = [8, 128], strides = [1, 1]} : vector<8x384xf32> to vector<8x128xf32>
    %128 = vector.broadcast %6 : vector<1x128xf32> to vector<8x128xf32>
    %129 = arith.addf %127, %128 : vector<8x128xf32>
    %130 = arith.mulf %117, %129 : vector<8x128xf32>
    %131 = arith.addf %126, %130 : vector<8x128xf32>
    %132 = math.tanh %131 : vector<8x128xf32>
    %133 = arith.subf %100, %132 : vector<8x128xf32>
    %134 = arith.mulf %125, %133 : vector<8x128xf32>
    %135 = arith.addf %132, %134 : vector<8x128xf32>
    %136 = arith.index_cast %104 : i32 to index
    %c0_38 = arith.constant 0 : index
    %c0_39 = arith.constant 0 : index
    %137 = vector.load %arg3[%136, %c0_38, %c0_39] : memref<8x8x384xf32, #tpu.memory_space<vmem>>, vector<1x8x384xf32>
    %138 = vector.shape_cast %137 : vector<1x8x384xf32> to vector<8x384xf32>
    %139 = arith.truncf %103 : vector<8x128xf32> to vector<8x128xbf16>
    %cst_40 = arith.constant dense<0.000000e+00> : vector<8x384xf32>
    %140 = tpu.matmul %139, %5, %cst_40 {dimension_numbers = #tpu.dot_dimension_numbers<[1], [0], [0], [1], [0, 0, 1, 1], [], []>} : vector<8x128xbf16>, vector<128x384xbf16>, vector<8x384xf32> -> vector<8x384xf32>
    %141 = vector.extract_strided_slice %138 {offsets = [0, 0], sizes = [8, 128], strides = [1, 1]} : vector<8x384xf32> to vector<8x128xf32>
    %142 = vector.extract_strided_slice %140 {offsets = [0, 0], sizes = [8, 128], strides = [1, 1]} : vector<8x384xf32> to vector<8x128xf32>
    %143 = arith.addf %141, %142 : vector<8x128xf32>
    %144 = arith.negf %143 : vector<8x128xf32>
    %145 = math.exp %144 : vector<8x128xf32>
    %cst_41 = arith.constant 1.000000e+00 : f32
    %146 = vector.broadcast %cst_41 : f32 to vector<8x128xf32>
    %147 = arith.addf %146, %145 : vector<8x128xf32>
    %148 = arith.divf %146, %147 : vector<8x128xf32>
    %149 = vector.extract_strided_slice %138 {offsets = [0, 128], sizes = [8, 128], strides = [1, 1]} : vector<8x384xf32> to vector<8x128xf32>
    %150 = vector.extract_strided_slice %140 {offsets = [0, 128], sizes = [8, 128], strides = [1, 1]} : vector<8x384xf32> to vector<8x128xf32>
    %151 = arith.addf %149, %150 : vector<8x128xf32>
    %152 = arith.negf %151 : vector<8x128xf32>
    %153 = math.exp %152 : vector<8x128xf32>
    %cst_42 = arith.constant 1.000000e+00 : f32
    %154 = vector.broadcast %cst_42 : f32 to vector<8x128xf32>
    %155 = arith.addf %154, %153 : vector<8x128xf32>
    %156 = arith.divf %154, %155 : vector<8x128xf32>
    %157 = vector.extract_strided_slice %138 {offsets = [0, 256], sizes = [8, 128], strides = [1, 1]} : vector<8x384xf32> to vector<8x128xf32>
    %158 = vector.extract_strided_slice %140 {offsets = [0, 256], sizes = [8, 128], strides = [1, 1]} : vector<8x384xf32> to vector<8x128xf32>
    %159 = vector.broadcast %7 : vector<1x128xf32> to vector<8x128xf32>
    %160 = arith.addf %158, %159 : vector<8x128xf32>
    %161 = arith.mulf %148, %160 : vector<8x128xf32>
    %162 = arith.addf %157, %161 : vector<8x128xf32>
    %163 = math.tanh %162 : vector<8x128xf32>
    %164 = arith.subf %103, %163 : vector<8x128xf32>
    %165 = arith.mulf %156, %164 : vector<8x128xf32>
    %166 = arith.addf %163, %165 : vector<8x128xf32>
    %167 = arith.addi %8, %c1_i32 : i32
    %168 = vector.broadcast %167 : i32 to vector<8x1xi32>
    %169 = arith.cmpi slt, %168, %3 : vector<8x1xi32>
    %170 = arith.addi %10, %104 : i32
    %171 = vector.broadcast %170 : i32 to vector<8x1xi32>
    %172 = arith.cmpi slt, %171, %3 : vector<8x1xi32>
    %cst_43 = arith.constant 0.000000e+00 : f32
    %173 = vector.shape_cast %169 : vector<8x1xi1> to vector<8x1xi1>
    %174 = vector.broadcast %173 : vector<8x1xi1> to vector<8x128xi1>
    %175 = vector.broadcast %cst_43 : f32 to vector<8x128xf32>
    %176 = arith.select %174, %135, %175 : vector<8x128xi1>, vector<8x128xf32>
    %177 = arith.index_cast %c1_i32 : i32 to index
    %c0_44 = arith.constant 0 : index
    %c0_45 = arith.constant 0 : index
    %178 = vector.load %arg8[%177, %c0_44, %c0_45] : memref<8x8x128xf32, #tpu.memory_space<vmem>>, vector<1x8x128xf32>
    %179 = vector.shape_cast %178 : vector<1x8x128xf32> to vector<8x128xf32>
    %180 = vector.shape_cast %176 : vector<8x128xf32> to vector<1x8x128xf32>
    tpu.vector_store %arg8[%177, %c0_44, %c0_45], %180 {strides = array<i32>} : memref<8x8x128xf32, #tpu.memory_space<vmem>>, vector<1x8x128xf32>,
    %cst_46 = arith.constant 0.000000e+00 : f32
    %181 = vector.shape_cast %172 : vector<8x1xi1> to vector<8x1xi1>
    %182 = vector.broadcast %181 : vector<8x1xi1> to vector<8x128xi1>
    %183 = vector.broadcast %cst_46 : f32 to vector<8x128xf32>
    %184 = arith.select %182, %166, %183 : vector<8x128xi1>, vector<8x128xf32>
    %185 = arith.index_cast %104 : i32 to index
    %c0_47 = arith.constant 0 : index
    %c0_48 = arith.constant 0 : index
    %186 = vector.load %arg9[%185, %c0_47, %c0_48] : memref<8x8x128xf32, #tpu.memory_space<vmem>>, vector<1x8x128xf32>
    %187 = vector.shape_cast %186 : vector<1x8x128xf32> to vector<8x128xf32>
    %188 = vector.shape_cast %184 : vector<8x128xf32> to vector<1x8x128xf32>
    tpu.vector_store %arg9[%185, %c0_47, %c0_48], %188 {strides = array<i32>} : memref<8x8x128xf32, #tpu.memory_space<vmem>>, vector<1x8x128xf32>,
    %189 = vector.shape_cast %169 : vector<8x1xi1> to vector<8x1xi1>
    %190 = vector.broadcast %189 : vector<8x1xi1> to vector<8x128xi1>
    %191 = arith.select %190, %135, %100 : vector<8x128xi1>, vector<8x128xf32>
    %192 = vector.shape_cast %172 : vector<8x1xi1> to vector<8x1xi1>
    %193 = vector.broadcast %192 : vector<8x1xi1> to vector<8x128xi1>
    %194 = arith.select %193, %166, %103 : vector<8x128xi1>, vector<8x128xf32>
    %c2_i32 = arith.constant 2 : i32
    %c7_i32_49 = arith.constant 7 : i32
    %195 = arith.subi %c7_i32_49, %c2_i32 : i32
    %196 = arith.index_cast %c2_i32 : i32 to index
    %c0_50 = arith.constant 0 : index
    %c0_51 = arith.constant 0 : index
    %197 = vector.load %arg2[%196, %c0_50, %c0_51] : memref<8x8x384xf32, #tpu.memory_space<vmem>>, vector<1x8x384xf32>
    %198 = vector.shape_cast %197 : vector<1x8x384xf32> to vector<8x384xf32>
    %199 = arith.truncf %191 : vector<8x128xf32> to vector<8x128xbf16>
    %cst_52 = arith.constant dense<0.000000e+00> : vector<8x384xf32>
    %200 = tpu.matmul %199, %4, %cst_52 {dimension_numbers = #tpu.dot_dimension_numbers<[1], [0], [0], [1], [0, 0, 1, 1], [], []>} : vector<8x128xbf16>, vector<128x384xbf16>, vector<8x384xf32> -> vector<8x384xf32>
    %201 = vector.extract_strided_slice %198 {offsets = [0, 0], sizes = [8, 128], strides = [1, 1]} : vector<8x384xf32> to vector<8x128xf32>
    %202 = vector.extract_strided_slice %200 {offsets = [0, 0], sizes = [8, 128], strides = [1, 1]} : vector<8x384xf32> to vector<8x128xf32>
    %203 = arith.addf %201, %202 : vector<8x128xf32>
    %204 = arith.negf %203 : vector<8x128xf32>
    %205 = math.exp %204 : vector<8x128xf32>
    %cst_53 = arith.constant 1.000000e+00 : f32
    %206 = vector.broadcast %cst_53 : f32 to vector<8x128xf32>
    %207 = arith.addf %206, %205 : vector<8x128xf32>
    %208 = arith.divf %206, %207 : vector<8x128xf32>
    %209 = vector.extract_strided_slice %198 {offsets = [0, 128], sizes = [8, 128], strides = [1, 1]} : vector<8x384xf32> to vector<8x128xf32>
    %210 = vector.extract_strided_slice %200 {offsets = [0, 128], sizes = [8, 128], strides = [1, 1]} : vector<8x384xf32> to vector<8x128xf32>
    %211 = arith.addf %209, %210 : vector<8x128xf32>
    %212 = arith.negf %211 : vector<8x128xf32>
    %213 = math.exp %212 : vector<8x128xf32>
    %cst_54 = arith.constant 1.000000e+00 : f32
    %214 = vector.broadcast %cst_54 : f32 to vector<8x128xf32>
    %215 = arith.addf %214, %213 : vector<8x128xf32>
    %216 = arith.divf %214, %215 : vector<8x128xf32>
    %217 = vector.extract_strided_slice %198 {offsets = [0, 256], sizes = [8, 128], strides = [1, 1]} : vector<8x384xf32> to vector<8x128xf32>
    %218 = vector.extract_strided_slice %200 {offsets = [0, 256], sizes = [8, 128], strides = [1, 1]} : vector<8x384xf32> to vector<8x128xf32>
    %219 = vector.broadcast %6 : vector<1x128xf32> to vector<8x128xf32>
    %220 = arith.addf %218, %219 : vector<8x128xf32>
    %221 = arith.mulf %208, %220 : vector<8x128xf32>
    %222 = arith.addf %217, %221 : vector<8x128xf32>
    %223 = math.tanh %222 : vector<8x128xf32>
    %224 = arith.subf %191, %223 : vector<8x128xf32>
    %225 = arith.mulf %216, %224 : vector<8x128xf32>
    %226 = arith.addf %223, %225 : vector<8x128xf32>
    %227 = arith.index_cast %195 : i32 to index
    %c0_55 = arith.constant 0 : index
    %c0_56 = arith.constant 0 : index
    %228 = vector.load %arg3[%227, %c0_55, %c0_56] : memref<8x8x384xf32, #tpu.memory_space<vmem>>, vector<1x8x384xf32>
    %229 = vector.shape_cast %228 : vector<1x8x384xf32> to vector<8x384xf32>
    %230 = arith.truncf %194 : vector<8x128xf32> to vector<8x128xbf16>
    %cst_57 = arith.constant dense<0.000000e+00> : vector<8x384xf32>
    %231 = tpu.matmul %230, %5, %cst_57 {dimension_numbers = #tpu.dot_dimension_numbers<[1], [0], [0], [1], [0, 0, 1, 1], [], []>} : vector<8x128xbf16>, vector<128x384xbf16>, vector<8x384xf32> -> vector<8x384xf32>
    %232 = vector.extract_strided_slice %229 {offsets = [0, 0], sizes = [8, 128], strides = [1, 1]} : vector<8x384xf32> to vector<8x128xf32>
    %233 = vector.extract_strided_slice %231 {offsets = [0, 0], sizes = [8, 128], strides = [1, 1]} : vector<8x384xf32> to vector<8x128xf32>
    %234 = arith.addf %232, %233 : vector<8x128xf32>
    %235 = arith.negf %234 : vector<8x128xf32>
    %236 = math.exp %235 : vector<8x128xf32>
    %cst_58 = arith.constant 1.000000e+00 : f32
    %237 = vector.broadcast %cst_58 : f32 to vector<8x128xf32>
    %238 = arith.addf %237, %236 : vector<8x128xf32>
    %239 = arith.divf %237, %238 : vector<8x128xf32>
    %240 = vector.extract_strided_slice %229 {offsets = [0, 128], sizes = [8, 128], strides = [1, 1]} : vector<8x384xf32> to vector<8x128xf32>
    %241 = vector.extract_strided_slice %231 {offsets = [0, 128], sizes = [8, 128], strides = [1, 1]} : vector<8x384xf32> to vector<8x128xf32>
    %242 = arith.addf %240, %241 : vector<8x128xf32>
    %243 = arith.negf %242 : vector<8x128xf32>
    %244 = math.exp %243 : vector<8x128xf32>
    %cst_59 = arith.constant 1.000000e+00 : f32
    %245 = vector.broadcast %cst_59 : f32 to vector<8x128xf32>
    %246 = arith.addf %245, %244 : vector<8x128xf32>
    %247 = arith.divf %245, %246 : vector<8x128xf32>
    %248 = vector.extract_strided_slice %229 {offsets = [0, 256], sizes = [8, 128], strides = [1, 1]} : vector<8x384xf32> to vector<8x128xf32>
    %249 = vector.extract_strided_slice %231 {offsets = [0, 256], sizes = [8, 128], strides = [1, 1]} : vector<8x384xf32> to vector<8x128xf32>
    %250 = vector.broadcast %7 : vector<1x128xf32> to vector<8x128xf32>
    %251 = arith.addf %249, %250 : vector<8x128xf32>
    %252 = arith.mulf %239, %251 : vector<8x128xf32>
    %253 = arith.addf %248, %252 : vector<8x128xf32>
    %254 = math.tanh %253 : vector<8x128xf32>
    %255 = arith.subf %194, %254 : vector<8x128xf32>
    %256 = arith.mulf %247, %255 : vector<8x128xf32>
    %257 = arith.addf %254, %256 : vector<8x128xf32>
    %258 = arith.addi %8, %c2_i32 : i32
    %259 = vector.broadcast %258 : i32 to vector<8x1xi32>
    %260 = arith.cmpi slt, %259, %3 : vector<8x1xi32>
    %261 = arith.addi %10, %195 : i32
    %262 = vector.broadcast %261 : i32 to vector<8x1xi32>
    %263 = arith.cmpi slt, %262, %3 : vector<8x1xi32>
    %cst_60 = arith.constant 0.000000e+00 : f32
    %264 = vector.shape_cast %260 : vector<8x1xi1> to vector<8x1xi1>
    %265 = vector.broadcast %264 : vector<8x1xi1> to vector<8x128xi1>
    %266 = vector.broadcast %cst_60 : f32 to vector<8x128xf32>
    %267 = arith.select %265, %226, %266 : vector<8x128xi1>, vector<8x128xf32>
    %268 = arith.index_cast %c2_i32 : i32 to index
    %c0_61 = arith.constant 0 : index
    %c0_62 = arith.constant 0 : index
    %269 = vector.load %arg8[%268, %c0_61, %c0_62] : memref<8x8x128xf32, #tpu.memory_space<vmem>>, vector<1x8x128xf32>
    %270 = vector.shape_cast %269 : vector<1x8x128xf32> to vector<8x128xf32>
    %271 = vector.shape_cast %267 : vector<8x128xf32> to vector<1x8x128xf32>
    tpu.vector_store %arg8[%268, %c0_61, %c0_62], %271 {strides = array<i32>} : memref<8x8x128xf32, #tpu.memory_space<vmem>>, vector<1x8x128xf32>,
    %cst_63 = arith.constant 0.000000e+00 : f32
    %272 = vector.shape_cast %263 : vector<8x1xi1> to vector<8x1xi1>
    %273 = vector.broadcast %272 : vector<8x1xi1> to vector<8x128xi1>
    %274 = vector.broadcast %cst_63 : f32 to vector<8x128xf32>
    %275 = arith.select %273, %257, %274 : vector<8x128xi1>, vector<8x128xf32>
    %276 = arith.index_cast %195 : i32 to index
    %c0_64 = arith.constant 0 : index
    %c0_65 = arith.constant 0 : index
    %277 = vector.load %arg9[%276, %c0_64, %c0_65] : memref<8x8x128xf32, #tpu.memory_space<vmem>>, vector<1x8x128xf32>
    %278 = vector.shape_cast %277 : vector<1x8x128xf32> to vector<8x128xf32>
    %279 = vector.shape_cast %275 : vector<8x128xf32> to vector<1x8x128xf32>
    tpu.vector_store %arg9[%276, %c0_64, %c0_65], %279 {strides = array<i32>} : memref<8x8x128xf32, #tpu.memory_space<vmem>>, vector<1x8x128xf32>,
    %280 = vector.shape_cast %260 : vector<8x1xi1> to vector<8x1xi1>
    %281 = vector.broadcast %280 : vector<8x1xi1> to vector<8x128xi1>
    %282 = arith.select %281, %226, %191 : vector<8x128xi1>, vector<8x128xf32>
    %283 = vector.shape_cast %263 : vector<8x1xi1> to vector<8x1xi1>
    %284 = vector.broadcast %283 : vector<8x1xi1> to vector<8x128xi1>
    %285 = arith.select %284, %257, %194 : vector<8x128xi1>, vector<8x128xf32>
    %c3_i32 = arith.constant 3 : i32
    %c7_i32_66 = arith.constant 7 : i32
    %286 = arith.subi %c7_i32_66, %c3_i32 : i32
    %287 = arith.index_cast %c3_i32 : i32 to index
    %c0_67 = arith.constant 0 : index
    %c0_68 = arith.constant 0 : index
    %288 = vector.load %arg2[%287, %c0_67, %c0_68] : memref<8x8x384xf32, #tpu.memory_space<vmem>>, vector<1x8x384xf32>
    %289 = vector.shape_cast %288 : vector<1x8x384xf32> to vector<8x384xf32>
    %290 = arith.truncf %282 : vector<8x128xf32> to vector<8x128xbf16>
    %cst_69 = arith.constant dense<0.000000e+00> : vector<8x384xf32>
    %291 = tpu.matmul %290, %4, %cst_69 {dimension_numbers = #tpu.dot_dimension_numbers<[1], [0], [0], [1], [0, 0, 1, 1], [], []>} : vector<8x128xbf16>, vector<128x384xbf16>, vector<8x384xf32> -> vector<8x384xf32>
    %292 = vector.extract_strided_slice %289 {offsets = [0, 0], sizes = [8, 128], strides = [1, 1]} : vector<8x384xf32> to vector<8x128xf32>
    %293 = vector.extract_strided_slice %291 {offsets = [0, 0], sizes = [8, 128], strides = [1, 1]} : vector<8x384xf32> to vector<8x128xf32>
    %294 = arith.addf %292, %293 : vector<8x128xf32>
    %295 = arith.negf %294 : vector<8x128xf32>
    %296 = math.exp %295 : vector<8x128xf32>
    %cst_70 = arith.constant 1.000000e+00 : f32
    %297 = vector.broadcast %cst_70 : f32 to vector<8x128xf32>
    %298 = arith.addf %297, %296 : vector<8x128xf32>
    %299 = arith.divf %297, %298 : vector<8x128xf32>
    %300 = vector.extract_strided_slice %289 {offsets = [0, 128], sizes = [8, 128], strides = [1, 1]} : vector<8x384xf32> to vector<8x128xf32>
    %301 = vector.extract_strided_slice %291 {offsets = [0, 128], sizes = [8, 128], strides = [1, 1]} : vector<8x384xf32> to vector<8x128xf32>
    %302 = arith.addf %300, %301 : vector<8x128xf32>
    %303 = arith.negf %302 : vector<8x128xf32>
    %304 = math.exp %303 : vector<8x128xf32>
    %cst_71 = arith.constant 1.000000e+00 : f32
    %305 = vector.broadcast %cst_71 : f32 to vector<8x128xf32>
    %306 = arith.addf %305, %304 : vector<8x128xf32>
    %307 = arith.divf %305, %306 : vector<8x128xf32>
    %308 = vector.extract_strided_slice %289 {offsets = [0, 256], sizes = [8, 128], strides = [1, 1]} : vector<8x384xf32> to vector<8x128xf32>
    %309 = vector.extract_strided_slice %291 {offsets = [0, 256], sizes = [8, 128], strides = [1, 1]} : vector<8x384xf32> to vector<8x128xf32>
    %310 = vector.broadcast %6 : vector<1x128xf32> to vector<8x128xf32>
    %311 = arith.addf %309, %310 : vector<8x128xf32>
    %312 = arith.mulf %299, %311 : vector<8x128xf32>
    %313 = arith.addf %308, %312 : vector<8x128xf32>
    %314 = math.tanh %313 : vector<8x128xf32>
    %315 = arith.subf %282, %314 : vector<8x128xf32>
    %316 = arith.mulf %307, %315 : vector<8x128xf32>
    %317 = arith.addf %314, %316 : vector<8x128xf32>
    %318 = arith.index_cast %286 : i32 to index
    %c0_72 = arith.constant 0 : index
    %c0_73 = arith.constant 0 : index
    %319 = vector.load %arg3[%318, %c0_72, %c0_73] : memref<8x8x384xf32, #tpu.memory_space<vmem>>, vector<1x8x384xf32>
    %320 = vector.shape_cast %319 : vector<1x8x384xf32> to vector<8x384xf32>
    %321 = arith.truncf %285 : vector<8x128xf32> to vector<8x128xbf16>
    %cst_74 = arith.constant dense<0.000000e+00> : vector<8x384xf32>
    %322 = tpu.matmul %321, %5, %cst_74 {dimension_numbers = #tpu.dot_dimension_numbers<[1], [0], [0], [1], [0, 0, 1, 1], [], []>} : vector<8x128xbf16>, vector<128x384xbf16>, vector<8x384xf32> -> vector<8x384xf32>
    %323 = vector.extract_strided_slice %320 {offsets = [0, 0], sizes = [8, 128], strides = [1, 1]} : vector<8x384xf32> to vector<8x128xf32>
    %324 = vector.extract_strided_slice %322 {offsets = [0, 0], sizes = [8, 128], strides = [1, 1]} : vector<8x384xf32> to vector<8x128xf32>
    %325 = arith.addf %323, %324 : vector<8x128xf32>
    %326 = arith.negf %325 : vector<8x128xf32>
    %327 = math.exp %326 : vector<8x128xf32>
    %cst_75 = arith.constant 1.000000e+00 : f32
    %328 = vector.broadcast %cst_75 : f32 to vector<8x128xf32>
    %329 = arith.addf %328, %327 : vector<8x128xf32>
    %330 = arith.divf %328, %329 : vector<8x128xf32>
    %331 = vector.extract_strided_slice %320 {offsets = [0, 128], sizes = [8, 128], strides = [1, 1]} : vector<8x384xf32> to vector<8x128xf32>
    %332 = vector.extract_strided_slice %322 {offsets = [0, 128], sizes = [8, 128], strides = [1, 1]} : vector<8x384xf32> to vector<8x128xf32>
    %333 = arith.addf %331, %332 : vector<8x128xf32>
    %334 = arith.negf %333 : vector<8x128xf32>
    %335 = math.exp %334 : vector<8x128xf32>
    %cst_76 = arith.constant 1.000000e+00 : f32
    %336 = vector.broadcast %cst_76 : f32 to vector<8x128xf32>
    %337 = arith.addf %336, %335 : vector<8x128xf32>
    %338 = arith.divf %336, %337 : vector<8x128xf32>
    %339 = vector.extract_strided_slice %320 {offsets = [0, 256], sizes = [8, 128], strides = [1, 1]} : vector<8x384xf32> to vector<8x128xf32>
    %340 = vector.extract_strided_slice %322 {offsets = [0, 256], sizes = [8, 128], strides = [1, 1]} : vector<8x384xf32> to vector<8x128xf32>
    %341 = vector.broadcast %7 : vector<1x128xf32> to vector<8x128xf32>
    %342 = arith.addf %340, %341 : vector<8x128xf32>
    %343 = arith.mulf %330, %342 : vector<8x128xf32>
    %344 = arith.addf %339, %343 : vector<8x128xf32>
    %345 = math.tanh %344 : vector<8x128xf32>
    %346 = arith.subf %285, %345 : vector<8x128xf32>
    %347 = arith.mulf %338, %346 : vector<8x128xf32>
    %348 = arith.addf %345, %347 : vector<8x128xf32>
    %349 = arith.addi %8, %c3_i32 : i32
    %350 = vector.broadcast %349 : i32 to vector<8x1xi32>
    %351 = arith.cmpi slt, %350, %3 : vector<8x1xi32>
    %352 = arith.addi %10, %286 : i32
    %353 = vector.broadcast %352 : i32 to vector<8x1xi32>
    %354 = arith.cmpi slt, %353, %3 : vector<8x1xi32>
    %cst_77 = arith.constant 0.000000e+00 : f32
    %355 = vector.shape_cast %351 : vector<8x1xi1> to vector<8x1xi1>
    %356 = vector.broadcast %355 : vector<8x1xi1> to vector<8x128xi1>
    %357 = vector.broadcast %cst_77 : f32 to vector<8x128xf32>
    %358 = arith.select %356, %317, %357 : vector<8x128xi1>, vector<8x128xf32>
    %359 = arith.index_cast %c3_i32 : i32 to index
    %c0_78 = arith.constant 0 : index
    %c0_79 = arith.constant 0 : index
    %360 = vector.load %arg8[%359, %c0_78, %c0_79] : memref<8x8x128xf32, #tpu.memory_space<vmem>>, vector<1x8x128xf32>
    %361 = vector.shape_cast %360 : vector<1x8x128xf32> to vector<8x128xf32>
    %362 = vector.shape_cast %358 : vector<8x128xf32> to vector<1x8x128xf32>
    tpu.vector_store %arg8[%359, %c0_78, %c0_79], %362 {strides = array<i32>} : memref<8x8x128xf32, #tpu.memory_space<vmem>>, vector<1x8x128xf32>,
    %cst_80 = arith.constant 0.000000e+00 : f32
    %363 = vector.shape_cast %354 : vector<8x1xi1> to vector<8x1xi1>
    %364 = vector.broadcast %363 : vector<8x1xi1> to vector<8x128xi1>
    %365 = vector.broadcast %cst_80 : f32 to vector<8x128xf32>
    %366 = arith.select %364, %348, %365 : vector<8x128xi1>, vector<8x128xf32>
    %367 = arith.index_cast %286 : i32 to index
    %c0_81 = arith.constant 0 : index
    %c0_82 = arith.constant 0 : index
    %368 = vector.load %arg9[%367, %c0_81, %c0_82] : memref<8x8x128xf32, #tpu.memory_space<vmem>>, vector<1x8x128xf32>
    %369 = vector.shape_cast %368 : vector<1x8x128xf32> to vector<8x128xf32>
    %370 = vector.shape_cast %366 : vector<8x128xf32> to vector<1x8x128xf32>
    tpu.vector_store %arg9[%367, %c0_81, %c0_82], %370 {strides = array<i32>} : memref<8x8x128xf32, #tpu.memory_space<vmem>>, vector<1x8x128xf32>,
    %371 = vector.shape_cast %351 : vector<8x1xi1> to vector<8x1xi1>
    %372 = vector.broadcast %371 : vector<8x1xi1> to vector<8x128xi1>
    %373 = arith.select %372, %317, %282 : vector<8x128xi1>, vector<8x128xf32>
    %374 = vector.shape_cast %354 : vector<8x1xi1> to vector<8x1xi1>
    %375 = vector.broadcast %374 : vector<8x1xi1> to vector<8x128xi1>
    %376 = arith.select %375, %348, %285 : vector<8x128xi1>, vector<8x128xf32>
    %c4_i32 = arith.constant 4 : i32
    %c7_i32_83 = arith.constant 7 : i32
    %377 = arith.subi %c7_i32_83, %c4_i32 : i32
    %378 = arith.index_cast %c4_i32 : i32 to index
    %c0_84 = arith.constant 0 : index
    %c0_85 = arith.constant 0 : index
    %379 = vector.load %arg2[%378, %c0_84, %c0_85] : memref<8x8x384xf32, #tpu.memory_space<vmem>>, vector<1x8x384xf32>
    %380 = vector.shape_cast %379 : vector<1x8x384xf32> to vector<8x384xf32>
    %381 = arith.truncf %373 : vector<8x128xf32> to vector<8x128xbf16>
    %cst_86 = arith.constant dense<0.000000e+00> : vector<8x384xf32>
    %382 = tpu.matmul %381, %4, %cst_86 {dimension_numbers = #tpu.dot_dimension_numbers<[1], [0], [0], [1], [0, 0, 1, 1], [], []>} : vector<8x128xbf16>, vector<128x384xbf16>, vector<8x384xf32> -> vector<8x384xf32>
    %383 = vector.extract_strided_slice %380 {offsets = [0, 0], sizes = [8, 128], strides = [1, 1]} : vector<8x384xf32> to vector<8x128xf32>
    %384 = vector.extract_strided_slice %382 {offsets = [0, 0], sizes = [8, 128], strides = [1, 1]} : vector<8x384xf32> to vector<8x128xf32>
    %385 = arith.addf %383, %384 : vector<8x128xf32>
    %386 = arith.negf %385 : vector<8x128xf32>
    %387 = math.exp %386 : vector<8x128xf32>
    %cst_87 = arith.constant 1.000000e+00 : f32
    %388 = vector.broadcast %cst_87 : f32 to vector<8x128xf32>
    %389 = arith.addf %388, %387 : vector<8x128xf32>
    %390 = arith.divf %388, %389 : vector<8x128xf32>
    %391 = vector.extract_strided_slice %380 {offsets = [0, 128], sizes = [8, 128], strides = [1, 1]} : vector<8x384xf32> to vector<8x128xf32>
    %392 = vector.extract_strided_slice %382 {offsets = [0, 128], sizes = [8, 128], strides = [1, 1]} : vector<8x384xf32> to vector<8x128xf32>
    %393 = arith.addf %391, %392 : vector<8x128xf32>
    %394 = arith.negf %393 : vector<8x128xf32>
    %395 = math.exp %394 : vector<8x128xf32>
    %cst_88 = arith.constant 1.000000e+00 : f32
    %396 = vector.broadcast %cst_88 : f32 to vector<8x128xf32>
    %397 = arith.addf %396, %395 : vector<8x128xf32>
    %398 = arith.divf %396, %397 : vector<8x128xf32>
    %399 = vector.extract_strided_slice %380 {offsets = [0, 256], sizes = [8, 128], strides = [1, 1]} : vector<8x384xf32> to vector<8x128xf32>
    %400 = vector.extract_strided_slice %382 {offsets = [0, 256], sizes = [8, 128], strides = [1, 1]} : vector<8x384xf32> to vector<8x128xf32>
    %401 = vector.broadcast %6 : vector<1x128xf32> to vector<8x128xf32>
    %402 = arith.addf %400, %401 : vector<8x128xf32>
    %403 = arith.mulf %390, %402 : vector<8x128xf32>
    %404 = arith.addf %399, %403 : vector<8x128xf32>
    %405 = math.tanh %404 : vector<8x128xf32>
    %406 = arith.subf %373, %405 : vector<8x128xf32>
    %407 = arith.mulf %398, %406 : vector<8x128xf32>
    %408 = arith.addf %405, %407 : vector<8x128xf32>
    %409 = arith.index_cast %377 : i32 to index
    %c0_89 = arith.constant 0 : index
    %c0_90 = arith.constant 0 : index
    %410 = vector.load %arg3[%409, %c0_89, %c0_90] : memref<8x8x384xf32, #tpu.memory_space<vmem>>, vector<1x8x384xf32>
    %411 = vector.shape_cast %410 : vector<1x8x384xf32> to vector<8x384xf32>
    %412 = arith.truncf %376 : vector<8x128xf32> to vector<8x128xbf16>
    %cst_91 = arith.constant dense<0.000000e+00> : vector<8x384xf32>
    %413 = tpu.matmul %412, %5, %cst_91 {dimension_numbers = #tpu.dot_dimension_numbers<[1], [0], [0], [1], [0, 0, 1, 1], [], []>} : vector<8x128xbf16>, vector<128x384xbf16>, vector<8x384xf32> -> vector<8x384xf32>
    %414 = vector.extract_strided_slice %411 {offsets = [0, 0], sizes = [8, 128], strides = [1, 1]} : vector<8x384xf32> to vector<8x128xf32>
    %415 = vector.extract_strided_slice %413 {offsets = [0, 0], sizes = [8, 128], strides = [1, 1]} : vector<8x384xf32> to vector<8x128xf32>
    %416 = arith.addf %414, %415 : vector<8x128xf32>
    %417 = arith.negf %416 : vector<8x128xf32>
    %418 = math.exp %417 : vector<8x128xf32>
    %cst_92 = arith.constant 1.000000e+00 : f32
    %419 = vector.broadcast %cst_92 : f32 to vector<8x128xf32>
    %420 = arith.addf %419, %418 : vector<8x128xf32>
    %421 = arith.divf %419, %420 : vector<8x128xf32>
    %422 = vector.extract_strided_slice %411 {offsets = [0, 128], sizes = [8, 128], strides = [1, 1]} : vector<8x384xf32> to vector<8x128xf32>
    %423 = vector.extract_strided_slice %413 {offsets = [0, 128], sizes = [8, 128], strides = [1, 1]} : vector<8x384xf32> to vector<8x128xf32>
    %424 = arith.addf %422, %423 : vector<8x128xf32>
    %425 = arith.negf %424 : vector<8x128xf32>
    %426 = math.exp %425 : vector<8x128xf32>
    %cst_93 = arith.constant 1.000000e+00 : f32
    %427 = vector.broadcast %cst_93 : f32 to vector<8x128xf32>
    %428 = arith.addf %427, %426 : vector<8x128xf32>
    %429 = arith.divf %427, %428 : vector<8x128xf32>
    %430 = vector.extract_strided_slice %411 {offsets = [0, 256], sizes = [8, 128], strides = [1, 1]} : vector<8x384xf32> to vector<8x128xf32>
    %431 = vector.extract_strided_slice %413 {offsets = [0, 256], sizes = [8, 128], strides = [1, 1]} : vector<8x384xf32> to vector<8x128xf32>
    %432 = vector.broadcast %7 : vector<1x128xf32> to vector<8x128xf32>
    %433 = arith.addf %431, %432 : vector<8x128xf32>
    %434 = arith.mulf %421, %433 : vector<8x128xf32>
    %435 = arith.addf %430, %434 : vector<8x128xf32>
    %436 = math.tanh %435 : vector<8x128xf32>
    %437 = arith.subf %376, %436 : vector<8x128xf32>
    %438 = arith.mulf %429, %437 : vector<8x128xf32>
    %439 = arith.addf %436, %438 : vector<8x128xf32>
    %440 = arith.addi %8, %c4_i32 : i32
    %441 = vector.broadcast %440 : i32 to vector<8x1xi32>
    %442 = arith.cmpi slt, %441, %3 : vector<8x1xi32>
    %443 = arith.addi %10, %377 : i32
    %444 = vector.broadcast %443 : i32 to vector<8x1xi32>
    %445 = arith.cmpi slt, %444, %3 : vector<8x1xi32>
    %cst_94 = arith.constant 0.000000e+00 : f32
    %446 = vector.shape_cast %442 : vector<8x1xi1> to vector<8x1xi1>
    %447 = vector.broadcast %446 : vector<8x1xi1> to vector<8x128xi1>
    %448 = vector.broadcast %cst_94 : f32 to vector<8x128xf32>
    %449 = arith.select %447, %408, %448 : vector<8x128xi1>, vector<8x128xf32>
    %450 = arith.index_cast %c4_i32 : i32 to index
    %c0_95 = arith.constant 0 : index
    %c0_96 = arith.constant 0 : index
    %451 = vector.load %arg8[%450, %c0_95, %c0_96] : memref<8x8x128xf32, #tpu.memory_space<vmem>>, vector<1x8x128xf32>
    %452 = vector.shape_cast %451 : vector<1x8x128xf32> to vector<8x128xf32>
    %453 = vector.shape_cast %449 : vector<8x128xf32> to vector<1x8x128xf32>
    tpu.vector_store %arg8[%450, %c0_95, %c0_96], %453 {strides = array<i32>} : memref<8x8x128xf32, #tpu.memory_space<vmem>>, vector<1x8x128xf32>,
    %cst_97 = arith.constant 0.000000e+00 : f32
    %454 = vector.shape_cast %445 : vector<8x1xi1> to vector<8x1xi1>
    %455 = vector.broadcast %454 : vector<8x1xi1> to vector<8x128xi1>
    %456 = vector.broadcast %cst_97 : f32 to vector<8x128xf32>
    %457 = arith.select %455, %439, %456 : vector<8x128xi1>, vector<8x128xf32>
    %458 = arith.index_cast %377 : i32 to index
    %c0_98 = arith.constant 0 : index
    %c0_99 = arith.constant 0 : index
    %459 = vector.load %arg9[%458, %c0_98, %c0_99] : memref<8x8x128xf32, #tpu.memory_space<vmem>>, vector<1x8x128xf32>
    %460 = vector.shape_cast %459 : vector<1x8x128xf32> to vector<8x128xf32>
    %461 = vector.shape_cast %457 : vector<8x128xf32> to vector<1x8x128xf32>
    tpu.vector_store %arg9[%458, %c0_98, %c0_99], %461 {strides = array<i32>} : memref<8x8x128xf32, #tpu.memory_space<vmem>>, vector<1x8x128xf32>,
    %462 = vector.shape_cast %442 : vector<8x1xi1> to vector<8x1xi1>
    %463 = vector.broadcast %462 : vector<8x1xi1> to vector<8x128xi1>
    %464 = arith.select %463, %408, %373 : vector<8x128xi1>, vector<8x128xf32>
    %465 = vector.shape_cast %445 : vector<8x1xi1> to vector<8x1xi1>
    %466 = vector.broadcast %465 : vector<8x1xi1> to vector<8x128xi1>
    %467 = arith.select %466, %439, %376 : vector<8x128xi1>, vector<8x128xf32>
    %c5_i32 = arith.constant 5 : i32
    %c7_i32_100 = arith.constant 7 : i32
    %468 = arith.subi %c7_i32_100, %c5_i32 : i32
    %469 = arith.index_cast %c5_i32 : i32 to index
    %c0_101 = arith.constant 0 : index
    %c0_102 = arith.constant 0 : index
    %470 = vector.load %arg2[%469, %c0_101, %c0_102] : memref<8x8x384xf32, #tpu.memory_space<vmem>>, vector<1x8x384xf32>
    %471 = vector.shape_cast %470 : vector<1x8x384xf32> to vector<8x384xf32>
    %472 = arith.truncf %464 : vector<8x128xf32> to vector<8x128xbf16>
    %cst_103 = arith.constant dense<0.000000e+00> : vector<8x384xf32>
    %473 = tpu.matmul %472, %4, %cst_103 {dimension_numbers = #tpu.dot_dimension_numbers<[1], [0], [0], [1], [0, 0, 1, 1], [], []>} : vector<8x128xbf16>, vector<128x384xbf16>, vector<8x384xf32> -> vector<8x384xf32>
    %474 = vector.extract_strided_slice %471 {offsets = [0, 0], sizes = [8, 128], strides = [1, 1]} : vector<8x384xf32> to vector<8x128xf32>
    %475 = vector.extract_strided_slice %473 {offsets = [0, 0], sizes = [8, 128], strides = [1, 1]} : vector<8x384xf32> to vector<8x128xf32>
    %476 = arith.addf %474, %475 : vector<8x128xf32>
    %477 = arith.negf %476 : vector<8x128xf32>
    %478 = math.exp %477 : vector<8x128xf32>
    %cst_104 = arith.constant 1.000000e+00 : f32
    %479 = vector.broadcast %cst_104 : f32 to vector<8x128xf32>
    %480 = arith.addf %479, %478 : vector<8x128xf32>
    %481 = arith.divf %479, %480 : vector<8x128xf32>
    %482 = vector.extract_strided_slice %471 {offsets = [0, 128], sizes = [8, 128], strides = [1, 1]} : vector<8x384xf32> to vector<8x128xf32>
    %483 = vector.extract_strided_slice %473 {offsets = [0, 128], sizes = [8, 128], strides = [1, 1]} : vector<8x384xf32> to vector<8x128xf32>
    %484 = arith.addf %482, %483 : vector<8x128xf32>
    %485 = arith.negf %484 : vector<8x128xf32>
    %486 = math.exp %485 : vector<8x128xf32>
    %cst_105 = arith.constant 1.000000e+00 : f32
    %487 = vector.broadcast %cst_105 : f32 to vector<8x128xf32>
    %488 = arith.addf %487, %486 : vector<8x128xf32>
    %489 = arith.divf %487, %488 : vector<8x128xf32>
    %490 = vector.extract_strided_slice %471 {offsets = [0, 256], sizes = [8, 128], strides = [1, 1]} : vector<8x384xf32> to vector<8x128xf32>
    %491 = vector.extract_strided_slice %473 {offsets = [0, 256], sizes = [8, 128], strides = [1, 1]} : vector<8x384xf32> to vector<8x128xf32>
    %492 = vector.broadcast %6 : vector<1x128xf32> to vector<8x128xf32>
    %493 = arith.addf %491, %492 : vector<8x128xf32>
    %494 = arith.mulf %481, %493 : vector<8x128xf32>
    %495 = arith.addf %490, %494 : vector<8x128xf32>
    %496 = math.tanh %495 : vector<8x128xf32>
    %497 = arith.subf %464, %496 : vector<8x128xf32>
    %498 = arith.mulf %489, %497 : vector<8x128xf32>
    %499 = arith.addf %496, %498 : vector<8x128xf32>
    %500 = arith.index_cast %468 : i32 to index
    %c0_106 = arith.constant 0 : index
    %c0_107 = arith.constant 0 : index
    %501 = vector.load %arg3[%500, %c0_106, %c0_107] : memref<8x8x384xf32, #tpu.memory_space<vmem>>, vector<1x8x384xf32>
    %502 = vector.shape_cast %501 : vector<1x8x384xf32> to vector<8x384xf32>
    %503 = arith.truncf %467 : vector<8x128xf32> to vector<8x128xbf16>
    %cst_108 = arith.constant dense<0.000000e+00> : vector<8x384xf32>
    %504 = tpu.matmul %503, %5, %cst_108 {dimension_numbers = #tpu.dot_dimension_numbers<[1], [0], [0], [1], [0, 0, 1, 1], [], []>} : vector<8x128xbf16>, vector<128x384xbf16>, vector<8x384xf32> -> vector<8x384xf32>
    %505 = vector.extract_strided_slice %502 {offsets = [0, 0], sizes = [8, 128], strides = [1, 1]} : vector<8x384xf32> to vector<8x128xf32>
    %506 = vector.extract_strided_slice %504 {offsets = [0, 0], sizes = [8, 128], strides = [1, 1]} : vector<8x384xf32> to vector<8x128xf32>
    %507 = arith.addf %505, %506 : vector<8x128xf32>
    %508 = arith.negf %507 : vector<8x128xf32>
    %509 = math.exp %508 : vector<8x128xf32>
    %cst_109 = arith.constant 1.000000e+00 : f32
    %510 = vector.broadcast %cst_109 : f32 to vector<8x128xf32>
    %511 = arith.addf %510, %509 : vector<8x128xf32>
    %512 = arith.divf %510, %511 : vector<8x128xf32>
    %513 = vector.extract_strided_slice %502 {offsets = [0, 128], sizes = [8, 128], strides = [1, 1]} : vector<8x384xf32> to vector<8x128xf32>
    %514 = vector.extract_strided_slice %504 {offsets = [0, 128], sizes = [8, 128], strides = [1, 1]} : vector<8x384xf32> to vector<8x128xf32>
    %515 = arith.addf %513, %514 : vector<8x128xf32>
    %516 = arith.negf %515 : vector<8x128xf32>
    %517 = math.exp %516 : vector<8x128xf32>
    %cst_110 = arith.constant 1.000000e+00 : f32
    %518 = vector.broadcast %cst_110 : f32 to vector<8x128xf32>
    %519 = arith.addf %518, %517 : vector<8x128xf32>
    %520 = arith.divf %518, %519 : vector<8x128xf32>
    %521 = vector.extract_strided_slice %502 {offsets = [0, 256], sizes = [8, 128], strides = [1, 1]} : vector<8x384xf32> to vector<8x128xf32>
    %522 = vector.extract_strided_slice %504 {offsets = [0, 256], sizes = [8, 128], strides = [1, 1]} : vector<8x384xf32> to vector<8x128xf32>
    %523 = vector.broadcast %7 : vector<1x128xf32> to vector<8x128xf32>
    %524 = arith.addf %522, %523 : vector<8x128xf32>
    %525 = arith.mulf %512, %524 : vector<8x128xf32>
    %526 = arith.addf %521, %525 : vector<8x128xf32>
    %527 = math.tanh %526 : vector<8x128xf32>
    %528 = arith.subf %467, %527 : vector<8x128xf32>
    %529 = arith.mulf %520, %528 : vector<8x128xf32>
    %530 = arith.addf %527, %529 : vector<8x128xf32>
    %531 = arith.addi %8, %c5_i32 : i32
    %532 = vector.broadcast %531 : i32 to vector<8x1xi32>
    %533 = arith.cmpi slt, %532, %3 : vector<8x1xi32>
    %534 = arith.addi %10, %468 : i32
    %535 = vector.broadcast %534 : i32 to vector<8x1xi32>
    %536 = arith.cmpi slt, %535, %3 : vector<8x1xi32>
    %cst_111 = arith.constant 0.000000e+00 : f32
    %537 = vector.shape_cast %533 : vector<8x1xi1> to vector<8x1xi1>
    %538 = vector.broadcast %537 : vector<8x1xi1> to vector<8x128xi1>
    %539 = vector.broadcast %cst_111 : f32 to vector<8x128xf32>
    %540 = arith.select %538, %499, %539 : vector<8x128xi1>, vector<8x128xf32>
    %541 = arith.index_cast %c5_i32 : i32 to index
    %c0_112 = arith.constant 0 : index
    %c0_113 = arith.constant 0 : index
    %542 = vector.load %arg8[%541, %c0_112, %c0_113] : memref<8x8x128xf32, #tpu.memory_space<vmem>>, vector<1x8x128xf32>
    %543 = vector.shape_cast %542 : vector<1x8x128xf32> to vector<8x128xf32>
    %544 = vector.shape_cast %540 : vector<8x128xf32> to vector<1x8x128xf32>
    tpu.vector_store %arg8[%541, %c0_112, %c0_113], %544 {strides = array<i32>} : memref<8x8x128xf32, #tpu.memory_space<vmem>>, vector<1x8x128xf32>,
    %cst_114 = arith.constant 0.000000e+00 : f32
    %545 = vector.shape_cast %536 : vector<8x1xi1> to vector<8x1xi1>
    %546 = vector.broadcast %545 : vector<8x1xi1> to vector<8x128xi1>
    %547 = vector.broadcast %cst_114 : f32 to vector<8x128xf32>
    %548 = arith.select %546, %530, %547 : vector<8x128xi1>, vector<8x128xf32>
    %549 = arith.index_cast %468 : i32 to index
    %c0_115 = arith.constant 0 : index
    %c0_116 = arith.constant 0 : index
    %550 = vector.load %arg9[%549, %c0_115, %c0_116] : memref<8x8x128xf32, #tpu.memory_space<vmem>>, vector<1x8x128xf32>
    %551 = vector.shape_cast %550 : vector<1x8x128xf32> to vector<8x128xf32>
    %552 = vector.shape_cast %548 : vector<8x128xf32> to vector<1x8x128xf32>
    tpu.vector_store %arg9[%549, %c0_115, %c0_116], %552 {strides = array<i32>} : memref<8x8x128xf32, #tpu.memory_space<vmem>>, vector<1x8x128xf32>,
    %553 = vector.shape_cast %533 : vector<8x1xi1> to vector<8x1xi1>
    %554 = vector.broadcast %553 : vector<8x1xi1> to vector<8x128xi1>
    %555 = arith.select %554, %499, %464 : vector<8x128xi1>, vector<8x128xf32>
    %556 = vector.shape_cast %536 : vector<8x1xi1> to vector<8x1xi1>
    %557 = vector.broadcast %556 : vector<8x1xi1> to vector<8x128xi1>
    %558 = arith.select %557, %530, %467 : vector<8x128xi1>, vector<8x128xf32>
    %c6_i32 = arith.constant 6 : i32
    %c7_i32_117 = arith.constant 7 : i32
    %559 = arith.subi %c7_i32_117, %c6_i32 : i32
    %560 = arith.index_cast %c6_i32 : i32 to index
    %c0_118 = arith.constant 0 : index
    %c0_119 = arith.constant 0 : index
    %561 = vector.load %arg2[%560, %c0_118, %c0_119] : memref<8x8x384xf32, #tpu.memory_space<vmem>>, vector<1x8x384xf32>
    %562 = vector.shape_cast %561 : vector<1x8x384xf32> to vector<8x384xf32>
    %563 = arith.truncf %555 : vector<8x128xf32> to vector<8x128xbf16>
    %cst_120 = arith.constant dense<0.000000e+00> : vector<8x384xf32>
    %564 = tpu.matmul %563, %4, %cst_120 {dimension_numbers = #tpu.dot_dimension_numbers<[1], [0], [0], [1], [0, 0, 1, 1], [], []>} : vector<8x128xbf16>, vector<128x384xbf16>, vector<8x384xf32> -> vector<8x384xf32>
    %565 = vector.extract_strided_slice %562 {offsets = [0, 0], sizes = [8, 128], strides = [1, 1]} : vector<8x384xf32> to vector<8x128xf32>
    %566 = vector.extract_strided_slice %564 {offsets = [0, 0], sizes = [8, 128], strides = [1, 1]} : vector<8x384xf32> to vector<8x128xf32>
    %567 = arith.addf %565, %566 : vector<8x128xf32>
    %568 = arith.negf %567 : vector<8x128xf32>
    %569 = math.exp %568 : vector<8x128xf32>
    %cst_121 = arith.constant 1.000000e+00 : f32
    %570 = vector.broadcast %cst_121 : f32 to vector<8x128xf32>
    %571 = arith.addf %570, %569 : vector<8x128xf32>
    %572 = arith.divf %570, %571 : vector<8x128xf32>
    %573 = vector.extract_strided_slice %562 {offsets = [0, 128], sizes = [8, 128], strides = [1, 1]} : vector<8x384xf32> to vector<8x128xf32>
    %574 = vector.extract_strided_slice %564 {offsets = [0, 128], sizes = [8, 128], strides = [1, 1]} : vector<8x384xf32> to vector<8x128xf32>
    %575 = arith.addf %573, %574 : vector<8x128xf32>
    %576 = arith.negf %575 : vector<8x128xf32>
    %577 = math.exp %576 : vector<8x128xf32>
    %cst_122 = arith.constant 1.000000e+00 : f32
    %578 = vector.broadcast %cst_122 : f32 to vector<8x128xf32>
    %579 = arith.addf %578, %577 : vector<8x128xf32>
    %580 = arith.divf %578, %579 : vector<8x128xf32>
    %581 = vector.extract_strided_slice %562 {offsets = [0, 256], sizes = [8, 128], strides = [1, 1]} : vector<8x384xf32> to vector<8x128xf32>
    %582 = vector.extract_strided_slice %564 {offsets = [0, 256], sizes = [8, 128], strides = [1, 1]} : vector<8x384xf32> to vector<8x128xf32>
    %583 = vector.broadcast %6 : vector<1x128xf32> to vector<8x128xf32>
    %584 = arith.addf %582, %583 : vector<8x128xf32>
    %585 = arith.mulf %572, %584 : vector<8x128xf32>
    %586 = arith.addf %581, %585 : vector<8x128xf32>
    %587 = math.tanh %586 : vector<8x128xf32>
    %588 = arith.subf %555, %587 : vector<8x128xf32>
    %589 = arith.mulf %580, %588 : vector<8x128xf32>
    %590 = arith.addf %587, %589 : vector<8x128xf32>
    %591 = arith.index_cast %559 : i32 to index
    %c0_123 = arith.constant 0 : index
    %c0_124 = arith.constant 0 : index
    %592 = vector.load %arg3[%591, %c0_123, %c0_124] : memref<8x8x384xf32, #tpu.memory_space<vmem>>, vector<1x8x384xf32>
    %593 = vector.shape_cast %592 : vector<1x8x384xf32> to vector<8x384xf32>
    %594 = arith.truncf %558 : vector<8x128xf32> to vector<8x128xbf16>
    %cst_125 = arith.constant dense<0.000000e+00> : vector<8x384xf32>
    %595 = tpu.matmul %594, %5, %cst_125 {dimension_numbers = #tpu.dot_dimension_numbers<[1], [0], [0], [1], [0, 0, 1, 1], [], []>} : vector<8x128xbf16>, vector<128x384xbf16>, vector<8x384xf32> -> vector<8x384xf32>
    %596 = vector.extract_strided_slice %593 {offsets = [0, 0], sizes = [8, 128], strides = [1, 1]} : vector<8x384xf32> to vector<8x128xf32>
    %597 = vector.extract_strided_slice %595 {offsets = [0, 0], sizes = [8, 128], strides = [1, 1]} : vector<8x384xf32> to vector<8x128xf32>
    %598 = arith.addf %596, %597 : vector<8x128xf32>
    %599 = arith.negf %598 : vector<8x128xf32>
    %600 = math.exp %599 : vector<8x128xf32>
    %cst_126 = arith.constant 1.000000e+00 : f32
    %601 = vector.broadcast %cst_126 : f32 to vector<8x128xf32>
    %602 = arith.addf %601, %600 : vector<8x128xf32>
    %603 = arith.divf %601, %602 : vector<8x128xf32>
    %604 = vector.extract_strided_slice %593 {offsets = [0, 128], sizes = [8, 128], strides = [1, 1]} : vector<8x384xf32> to vector<8x128xf32>
    %605 = vector.extract_strided_slice %595 {offsets = [0, 128], sizes = [8, 128], strides = [1, 1]} : vector<8x384xf32> to vector<8x128xf32>
    %606 = arith.addf %604, %605 : vector<8x128xf32>
    %607 = arith.negf %606 : vector<8x128xf32>
    %608 = math.exp %607 : vector<8x128xf32>
    %cst_127 = arith.constant 1.000000e+00 : f32
    %609 = vector.broadcast %cst_127 : f32 to vector<8x128xf32>
    %610 = arith.addf %609, %608 : vector<8x128xf32>
    %611 = arith.divf %609, %610 : vector<8x128xf32>
    %612 = vector.extract_strided_slice %593 {offsets = [0, 256], sizes = [8, 128], strides = [1, 1]} : vector<8x384xf32> to vector<8x128xf32>
    %613 = vector.extract_strided_slice %595 {offsets = [0, 256], sizes = [8, 128], strides = [1, 1]} : vector<8x384xf32> to vector<8x128xf32>
    %614 = vector.broadcast %7 : vector<1x128xf32> to vector<8x128xf32>
    %615 = arith.addf %613, %614 : vector<8x128xf32>
    %616 = arith.mulf %603, %615 : vector<8x128xf32>
    %617 = arith.addf %612, %616 : vector<8x128xf32>
    %618 = math.tanh %617 : vector<8x128xf32>
    %619 = arith.subf %558, %618 : vector<8x128xf32>
    %620 = arith.mulf %611, %619 : vector<8x128xf32>
    %621 = arith.addf %618, %620 : vector<8x128xf32>
    %622 = arith.addi %8, %c6_i32 : i32
    %623 = vector.broadcast %622 : i32 to vector<8x1xi32>
    %624 = arith.cmpi slt, %623, %3 : vector<8x1xi32>
    %625 = arith.addi %10, %559 : i32
    %626 = vector.broadcast %625 : i32 to vector<8x1xi32>
    %627 = arith.cmpi slt, %626, %3 : vector<8x1xi32>
    %cst_128 = arith.constant 0.000000e+00 : f32
    %628 = vector.shape_cast %624 : vector<8x1xi1> to vector<8x1xi1>
    %629 = vector.broadcast %628 : vector<8x1xi1> to vector<8x128xi1>
    %630 = vector.broadcast %cst_128 : f32 to vector<8x128xf32>
    %631 = arith.select %629, %590, %630 : vector<8x128xi1>, vector<8x128xf32>
    %632 = arith.index_cast %c6_i32 : i32 to index
    %c0_129 = arith.constant 0 : index
    %c0_130 = arith.constant 0 : index
    %633 = vector.load %arg8[%632, %c0_129, %c0_130] : memref<8x8x128xf32, #tpu.memory_space<vmem>>, vector<1x8x128xf32>
    %634 = vector.shape_cast %633 : vector<1x8x128xf32> to vector<8x128xf32>
    %635 = vector.shape_cast %631 : vector<8x128xf32> to vector<1x8x128xf32>
    tpu.vector_store %arg8[%632, %c0_129, %c0_130], %635 {strides = array<i32>} : memref<8x8x128xf32, #tpu.memory_space<vmem>>, vector<1x8x128xf32>,
    %cst_131 = arith.constant 0.000000e+00 : f32
    %636 = vector.shape_cast %627 : vector<8x1xi1> to vector<8x1xi1>
    %637 = vector.broadcast %636 : vector<8x1xi1> to vector<8x128xi1>
    %638 = vector.broadcast %cst_131 : f32 to vector<8x128xf32>
    %639 = arith.select %637, %621, %638 : vector<8x128xi1>, vector<8x128xf32>
    %640 = arith.index_cast %559 : i32 to index
    %c0_132 = arith.constant 0 : index
    %c0_133 = arith.constant 0 : index
    %641 = vector.load %arg9[%640, %c0_132, %c0_133] : memref<8x8x128xf32, #tpu.memory_space<vmem>>, vector<1x8x128xf32>
    %642 = vector.shape_cast %641 : vector<1x8x128xf32> to vector<8x128xf32>
    %643 = vector.shape_cast %639 : vector<8x128xf32> to vector<1x8x128xf32>
    tpu.vector_store %arg9[%640, %c0_132, %c0_133], %643 {strides = array<i32>} : memref<8x8x128xf32, #tpu.memory_space<vmem>>, vector<1x8x128xf32>,
    %644 = vector.shape_cast %624 : vector<8x1xi1> to vector<8x1xi1>
    %645 = vector.broadcast %644 : vector<8x1xi1> to vector<8x128xi1>
    %646 = arith.select %645, %590, %555 : vector<8x128xi1>, vector<8x128xf32>
    %647 = vector.shape_cast %627 : vector<8x1xi1> to vector<8x1xi1>
    %648 = vector.broadcast %647 : vector<8x1xi1> to vector<8x128xi1>
    %649 = arith.select %648, %621, %558 : vector<8x128xi1>, vector<8x128xf32>
    %c7_i32_134 = arith.constant 7 : i32
    %c7_i32_135 = arith.constant 7 : i32
    %650 = arith.subi %c7_i32_135, %c7_i32_134 : i32
    %651 = arith.index_cast %c7_i32_134 : i32 to index
    %c0_136 = arith.constant 0 : index
    %c0_137 = arith.constant 0 : index
    %652 = vector.load %arg2[%651, %c0_136, %c0_137] : memref<8x8x384xf32, #tpu.memory_space<vmem>>, vector<1x8x384xf32>
    %653 = vector.shape_cast %652 : vector<1x8x384xf32> to vector<8x384xf32>
    %654 = arith.truncf %646 : vector<8x128xf32> to vector<8x128xbf16>
    %cst_138 = arith.constant dense<0.000000e+00> : vector<8x384xf32>
    %655 = tpu.matmul %654, %4, %cst_138 {dimension_numbers = #tpu.dot_dimension_numbers<[1], [0], [0], [1], [0, 0, 1, 1], [], []>} : vector<8x128xbf16>, vector<128x384xbf16>, vector<8x384xf32> -> vector<8x384xf32>
    %656 = vector.extract_strided_slice %653 {offsets = [0, 0], sizes = [8, 128], strides = [1, 1]} : vector<8x384xf32> to vector<8x128xf32>
    %657 = vector.extract_strided_slice %655 {offsets = [0, 0], sizes = [8, 128], strides = [1, 1]} : vector<8x384xf32> to vector<8x128xf32>
    %658 = arith.addf %656, %657 : vector<8x128xf32>
    %659 = arith.negf %658 : vector<8x128xf32>
    %660 = math.exp %659 : vector<8x128xf32>
    %cst_139 = arith.constant 1.000000e+00 : f32
    %661 = vector.broadcast %cst_139 : f32 to vector<8x128xf32>
    %662 = arith.addf %661, %660 : vector<8x128xf32>
    %663 = arith.divf %661, %662 : vector<8x128xf32>
    %664 = vector.extract_strided_slice %653 {offsets = [0, 128], sizes = [8, 128], strides = [1, 1]} : vector<8x384xf32> to vector<8x128xf32>
    %665 = vector.extract_strided_slice %655 {offsets = [0, 128], sizes = [8, 128], strides = [1, 1]} : vector<8x384xf32> to vector<8x128xf32>
    %666 = arith.addf %664, %665 : vector<8x128xf32>
    %667 = arith.negf %666 : vector<8x128xf32>
    %668 = math.exp %667 : vector<8x128xf32>
    %cst_140 = arith.constant 1.000000e+00 : f32
    %669 = vector.broadcast %cst_140 : f32 to vector<8x128xf32>
    %670 = arith.addf %669, %668 : vector<8x128xf32>
    %671 = arith.divf %669, %670 : vector<8x128xf32>
    %672 = vector.extract_strided_slice %653 {offsets = [0, 256], sizes = [8, 128], strides = [1, 1]} : vector<8x384xf32> to vector<8x128xf32>
    %673 = vector.extract_strided_slice %655 {offsets = [0, 256], sizes = [8, 128], strides = [1, 1]} : vector<8x384xf32> to vector<8x128xf32>
    %674 = vector.broadcast %6 : vector<1x128xf32> to vector<8x128xf32>
    %675 = arith.addf %673, %674 : vector<8x128xf32>
    %676 = arith.mulf %663, %675 : vector<8x128xf32>
    %677 = arith.addf %672, %676 : vector<8x128xf32>
    %678 = math.tanh %677 : vector<8x128xf32>
    %679 = arith.subf %646, %678 : vector<8x128xf32>
    %680 = arith.mulf %671, %679 : vector<8x128xf32>
    %681 = arith.addf %678, %680 : vector<8x128xf32>
    %682 = arith.index_cast %650 : i32 to index
    %c0_141 = arith.constant 0 : index
    %c0_142 = arith.constant 0 : index
    %683 = vector.load %arg3[%682, %c0_141, %c0_142] : memref<8x8x384xf32, #tpu.memory_space<vmem>>, vector<1x8x384xf32>
    %684 = vector.shape_cast %683 : vector<1x8x384xf32> to vector<8x384xf32>
    %685 = arith.truncf %649 : vector<8x128xf32> to vector<8x128xbf16>
    %cst_143 = arith.constant dense<0.000000e+00> : vector<8x384xf32>
    %686 = tpu.matmul %685, %5, %cst_143 {dimension_numbers = #tpu.dot_dimension_numbers<[1], [0], [0], [1], [0, 0, 1, 1], [], []>} : vector<8x128xbf16>, vector<128x384xbf16>, vector<8x384xf32> -> vector<8x384xf32>
    %687 = vector.extract_strided_slice %684 {offsets = [0, 0], sizes = [8, 128], strides = [1, 1]} : vector<8x384xf32> to vector<8x128xf32>
    %688 = vector.extract_strided_slice %686 {offsets = [0, 0], sizes = [8, 128], strides = [1, 1]} : vector<8x384xf32> to vector<8x128xf32>
    %689 = arith.addf %687, %688 : vector<8x128xf32>
    %690 = arith.negf %689 : vector<8x128xf32>
    %691 = math.exp %690 : vector<8x128xf32>
    %cst_144 = arith.constant 1.000000e+00 : f32
    %692 = vector.broadcast %cst_144 : f32 to vector<8x128xf32>
    %693 = arith.addf %692, %691 : vector<8x128xf32>
    %694 = arith.divf %692, %693 : vector<8x128xf32>
    %695 = vector.extract_strided_slice %684 {offsets = [0, 128], sizes = [8, 128], strides = [1, 1]} : vector<8x384xf32> to vector<8x128xf32>
    %696 = vector.extract_strided_slice %686 {offsets = [0, 128], sizes = [8, 128], strides = [1, 1]} : vector<8x384xf32> to vector<8x128xf32>
    %697 = arith.addf %695, %696 : vector<8x128xf32>
    %698 = arith.negf %697 : vector<8x128xf32>
    %699 = math.exp %698 : vector<8x128xf32>
    %cst_145 = arith.constant 1.000000e+00 : f32
    %700 = vector.broadcast %cst_145 : f32 to vector<8x128xf32>
    %701 = arith.addf %700, %699 : vector<8x128xf32>
    %702 = arith.divf %700, %701 : vector<8x128xf32>
    %703 = vector.extract_strided_slice %684 {offsets = [0, 256], sizes = [8, 128], strides = [1, 1]} : vector<8x384xf32> to vector<8x128xf32>
    %704 = vector.extract_strided_slice %686 {offsets = [0, 256], sizes = [8, 128], strides = [1, 1]} : vector<8x384xf32> to vector<8x128xf32>
    %705 = vector.broadcast %7 : vector<1x128xf32> to vector<8x128xf32>
    %706 = arith.addf %704, %705 : vector<8x128xf32>
    %707 = arith.mulf %694, %706 : vector<8x128xf32>
    %708 = arith.addf %703, %707 : vector<8x128xf32>
    %709 = math.tanh %708 : vector<8x128xf32>
    %710 = arith.subf %649, %709 : vector<8x128xf32>
    %711 = arith.mulf %702, %710 : vector<8x128xf32>
    %712 = arith.addf %709, %711 : vector<8x128xf32>
    %713 = arith.addi %8, %c7_i32_134 : i32
    %714 = vector.broadcast %713 : i32 to vector<8x1xi32>
    %715 = arith.cmpi slt, %714, %3 : vector<8x1xi32>
    %716 = arith.addi %10, %650 : i32
    %717 = vector.broadcast %716 : i32 to vector<8x1xi32>
    %718 = arith.cmpi slt, %717, %3 : vector<8x1xi32>
    %cst_146 = arith.constant 0.000000e+00 : f32
    %719 = vector.shape_cast %715 : vector<8x1xi1> to vector<8x1xi1>
    %720 = vector.broadcast %719 : vector<8x1xi1> to vector<8x128xi1>
    %721 = vector.broadcast %cst_146 : f32 to vector<8x128xf32>
    %722 = arith.select %720, %681, %721 : vector<8x128xi1>, vector<8x128xf32>
    %723 = arith.index_cast %c7_i32_134 : i32 to index
    %c0_147 = arith.constant 0 : index
    %c0_148 = arith.constant 0 : index
    %724 = vector.load %arg8[%723, %c0_147, %c0_148] : memref<8x8x128xf32, #tpu.memory_space<vmem>>, vector<1x8x128xf32>
    %725 = vector.shape_cast %724 : vector<1x8x128xf32> to vector<8x128xf32>
    %726 = vector.shape_cast %722 : vector<8x128xf32> to vector<1x8x128xf32>
    tpu.vector_store %arg8[%723, %c0_147, %c0_148], %726 {strides = array<i32>} : memref<8x8x128xf32, #tpu.memory_space<vmem>>, vector<1x8x128xf32>,
    %cst_149 = arith.constant 0.000000e+00 : f32
    %727 = vector.shape_cast %718 : vector<8x1xi1> to vector<8x1xi1>
    %728 = vector.broadcast %727 : vector<8x1xi1> to vector<8x128xi1>
    %729 = vector.broadcast %cst_149 : f32 to vector<8x128xf32>
    %730 = arith.select %728, %712, %729 : vector<8x128xi1>, vector<8x128xf32>
    %731 = arith.index_cast %650 : i32 to index
    %c0_150 = arith.constant 0 : index
    %c0_151 = arith.constant 0 : index
    %732 = vector.load %arg9[%731, %c0_150, %c0_151] : memref<8x8x128xf32, #tpu.memory_space<vmem>>, vector<1x8x128xf32>
    %733 = vector.shape_cast %732 : vector<1x8x128xf32> to vector<8x128xf32>
    %734 = vector.shape_cast %730 : vector<8x128xf32> to vector<1x8x128xf32>
    tpu.vector_store %arg9[%731, %c0_150, %c0_151], %734 {strides = array<i32>} : memref<8x8x128xf32, #tpu.memory_space<vmem>>, vector<1x8x128xf32>,
    %735 = vector.shape_cast %715 : vector<8x1xi1> to vector<8x1xi1>
    %736 = vector.broadcast %735 : vector<8x1xi1> to vector<8x128xi1>
    %737 = arith.select %736, %681, %646 : vector<8x128xi1>, vector<8x128xf32>
    %738 = vector.shape_cast %718 : vector<8x1xi1> to vector<8x1xi1>
    %739 = vector.broadcast %738 : vector<8x1xi1> to vector<8x128xi1>
    %740 = arith.select %739, %712, %649 : vector<8x128xi1>, vector<8x128xf32>
    %c8_i32_152 = arith.constant 8 : i32
    %c0_153 = arith.constant 0 : index
    %c0_154 = arith.constant 0 : index
    %741 = vector.load %arg11[%c0_153, %c0_154] : memref<8x128xf32, #tpu.memory_space<vmem>>, vector<8x128xf32>
    tpu.vector_store %arg11[%c0_153, %c0_154], %737 {strides = array<i32>} : memref<8x128xf32, #tpu.memory_space<vmem>>, vector<8x128xf32>,
    %c0_155 = arith.constant 0 : index
    %c0_156 = arith.constant 0 : index
    %742 = vector.load %arg12[%c0_155, %c0_156] : memref<8x128xf32, #tpu.memory_space<vmem>>, vector<8x128xf32>
    tpu.vector_store %arg12[%c0_155, %c0_156], %740 {strides = array<i32>} : memref<8x128xf32, #tpu.memory_space<vmem>>, vector<8x128xf32>,
    %c0_157 = arith.constant 0 : index
    %c0_158 = arith.constant 0 : index
    %c0_159 = arith.constant 0 : index
    %743 = vector.load %arg10[%c0_157, %c0_158, %c0_159] : memref<2x8x128xf32, #tpu.memory_space<vmem>>, vector<1x8x128xf32>
    %744 = vector.shape_cast %743 : vector<1x8x128xf32> to vector<8x128xf32>
    %745 = vector.shape_cast %737 : vector<8x128xf32> to vector<1x8x128xf32>
    tpu.vector_store %arg10[%c0_157, %c0_158, %c0_159], %745 {strides = array<i32>} : memref<2x8x128xf32, #tpu.memory_space<vmem>>, vector<1x8x128xf32>,
    %c1 = arith.constant 1 : index
    %c0_160 = arith.constant 0 : index
    %c0_161 = arith.constant 0 : index
    %746 = vector.load %arg10[%c1, %c0_160, %c0_161] : memref<2x8x128xf32, #tpu.memory_space<vmem>>, vector<1x8x128xf32>
    %747 = vector.shape_cast %746 : vector<1x8x128xf32> to vector<8x128xf32>
    %748 = vector.shape_cast %740 : vector<8x128xf32> to vector<1x8x128xf32>
    tpu.vector_store %arg10[%c1, %c0_160, %c0_161], %748 {strides = array<i32>} : memref<2x8x128xf32, #tpu.memory_space<vmem>>, vector<1x8x128xf32>,
    return
  }
  func.func @transform_0(%arg0: i32) -> (i32, i32) {
    %c0_i32 = arith.constant 0 : i32
    %c0_i32_0 = arith.constant 0 : i32
    %c0_i32_1 = arith.constant 0 : i32
    return %c0_i32, %c0_i32_0 : i32, i32
  }
  func.func @transform_1(%arg0: i32) -> (i32, i32, i32) {
    %c0_i32 = arith.constant 0 : i32
    %c0_i32_0 = arith.constant 0 : i32
    %c0_i32_1 = arith.constant 0 : i32
    return %arg0, %c0_i32, %c0_i32_0 : i32, i32, i32
  }
  func.func @transform_2(%arg0: i32) -> (i32, i32, i32) {
    %c0_i32 = arith.constant 0 : i32
    %0 = arith.subi %c0_i32, %arg0 : i32
    %c0_i32_0 = arith.constant 0 : i32
    %c0_i32_1 = arith.constant 0 : i32
    %c0_i32_2 = arith.constant 0 : i32
    return %0, %c0_i32_0, %c0_i32_1 : i32, i32, i32
  }
  func.func @transform_3(%arg0: i32) -> (i32, i32) {
    %c0_i32 = arith.constant 0 : i32
    %c0_i32_0 = arith.constant 0 : i32
    %c0_i32_1 = arith.constant 0 : i32
    return %c0_i32, %c0_i32_0 : i32, i32
  }
  func.func @transform_4(%arg0: i32) -> (i32, i32) {
    %c0_i32 = arith.constant 0 : i32
    %c0_i32_0 = arith.constant 0 : i32
    %c0_i32_1 = arith.constant 0 : i32
    return %c0_i32, %c0_i32_0 : i32, i32
  }
  func.func @transform_5(%arg0: i32) -> (i32, i32) {
    %c0_i32 = arith.constant 0 : i32
    %c0_i32_0 = arith.constant 0 : i32
    %c0_i32_1 = arith.constant 0 : i32
    return %c0_i32, %c0_i32_0 : i32, i32
  }
  func.func @transform_6(%arg0: i32) -> (i32, i32) {
    %c0_i32 = arith.constant 0 : i32
    %c0_i32_0 = arith.constant 0 : i32
    %c0_i32_1 = arith.constant 0 : i32
    return %c0_i32, %c0_i32_0 : i32, i32
  }
  func.func @transform_7(%arg0: i32) -> (i32, i32, i32) {
    %c0_i32 = arith.constant 0 : i32
    %c0_i32_0 = arith.constant 0 : i32
    %c0_i32_1 = arith.constant 0 : i32
    return %arg0, %c0_i32, %c0_i32_0 : i32, i32, i32
  }
  func.func @transform_8(%arg0: i32) -> (i32, i32, i32) {
    %c0_i32 = arith.constant 0 : i32
    %0 = arith.subi %c0_i32, %arg0 : i32
    %c0_i32_0 = arith.constant 0 : i32
    %c0_i32_1 = arith.constant 0 : i32
    %c0_i32_2 = arith.constant 0 : i32
    return %0, %c0_i32_0, %c0_i32_1 : i32, i32, i32
  }
  func.func @transform_9(%arg0: i32) -> (i32, i32, i32) {
    %c0_i32 = arith.constant 0 : i32
    %c0_i32_0 = arith.constant 0 : i32
    %c0_i32_1 = arith.constant 0 : i32
    %c0_i32_2 = arith.constant 0 : i32
    return %c0_i32, %c0_i32_0, %c0_i32_1 : i32, i32, i32
  }
}

</mosaic_0001>

<llo_original>
// kernel: encoder_rnn_forward.1
$region0: #{encoder_rnn_forward.1}
  #allocation0 [shape = 'u32[]', space=smem, size = 0x4, offset = 0x4, fixed_abs, tag = 'smem constant byte address 0x4 - core index']
  #allocation1 [shape = 'u32[144,128]{1,0:T(1,128)}', space=vmem, size = 0x12000, scoped, tag = 'internal scratch']
  #allocation2 [shape = 'f32[8,128]{1,0:T(8,128)}', space=vmem, size = 0x1000, scoped, tag = 'scratch operand']
  #allocation3 [shape = 'f32[8,128]{1,0:T(8,128)}', space=vmem, size = 0x1000, scoped, tag = 'scratch operand']
  %s0 = inlined_call_operand.vmem [shape: s32[8,1], index: 0, kind: input, shape index: {}]
  %s1 = inlined_call_operand.vmem [shape: f32[8,8,384], index: 1, kind: input, shape index: {}]
  %s2 = inlined_call_operand.vmem [shape: f32[8,8,384], index: 2, kind: input, shape index: {}]
  %s3 = inlined_call_operand.vmem [shape: bf16[128,384], index: 3, kind: input, shape index: {}]
  %s4 = inlined_call_operand.vmem [shape: bf16[128,384], index: 4, kind: input, shape index: {}]
  %s5 = inlined_call_operand.vmem [shape: f32[1,128], index: 5, kind: input, shape index: {}]
  %s6 = inlined_call_operand.vmem [shape: f32[1,128], index: 6, kind: input, shape index: {}]
  %s7 = inlined_call_operand.vmem [shape: f32[8,8,128], index: 7, kind: output, shape index: {0}]
  %s8 = inlined_call_operand.vmem [shape: f32[8,8,128], index: 8, kind: output, shape index: {1}]
  %s9 = inlined_call_operand.vmem [shape: f32[2,8,128], index: 9, kind: output, shape index: {2}]
  %10 = xla_tuple %s7, %s8, %s9
  %s11 = sld [smem:[#allocation0]]
  $region58: #{encoder_rnn_forward.1} parent=0
    _
  %s13 = ssub.s32 1, %s11
  %s14 = scalar_select 0, %s13, %s11
  // Predicated region
  $region2: #{encoder_rnn_forward.1} parent=0 // pred_check
    _
  $region3: #{encoder_rnn_forward.1} parent=0 // pred_check_branch
    %16 = sbr.rel (0) target = $region5
  $region4: #{encoder_rnn_forward.1} parent=0 // pred_region
    _
  $region5: #{encoder_rnn_forward.1} parent=0 // pred_fallthru
    _
  // Predicated region
  $region6: #{encoder_rnn_forward.1} parent=0 // pred_check
    _
  $region7: #{encoder_rnn_forward.1} parent=0 // pred_check_branch
    %18 = sbr.rel (0) target = $region9
  $region8: #{encoder_rnn_forward.1} parent=0 // pred_region
    _
  $region9: #{encoder_rnn_forward.1} parent=0 // pred_fallthru
    _
  // Predicated region
  $region10: #{encoder_rnn_forward.1} parent=0 // pred_check
    _
  $region11: #{encoder_rnn_forward.1} parent=0 // pred_check_branch
    %20 = sbr.rel (0) target = $region13
  $region12: #{encoder_rnn_forward.1} parent=0 // pred_region
    %s21 = ssub.s32 0, 0
    %s22 = smul.u32 8, %s21
    %p23 = scmp.lt.s32.totalorder %s22, 7
    %s24 = scalar_select %p23, %s22, 7
    %s25 = smul.addr %s24, 3
    %s26 = smul.addr %s25, 8
    %s27 = scalar_lea.vmem %s2, %s26
    %s28 = ssub.s32 0, 0
    %s29 = smul.u32 8, %s28
  $region13: #{encoder_rnn_forward.1} parent=0 // pred_fallthru
    _
  // Predicated region
  $region14: #{encoder_rnn_forward.1} parent=0 // pred_check
    _
  $region15: #{encoder_rnn_forward.1} parent=0 // pred_check_branch
    %31 = sbr.rel (0) target = $region17
  $region16: #{encoder_rnn_forward.1} parent=0 // pred_region
    _
  $region17: #{encoder_rnn_forward.1} parent=0 // pred_fallthru
    _
  // Predicated region
  $region18: #{encoder_rnn_forward.1} parent=0 // pred_check
    _
  $region19: #{encoder_rnn_forward.1} parent=0 // pred_check_branch
    %33 = sbr.rel (0) target = $region21
  $region20: #{encoder_rnn_forward.1} parent=0 // pred_region
    _
  $region21: #{encoder_rnn_forward.1} parent=0 // pred_fallthru
    _
  // Predicated region
  $region22: #{encoder_rnn_forward.1} parent=0 // pred_check
    _
  $region23: #{encoder_rnn_forward.1} parent=0 // pred_check_branch
    %35 = sbr.rel (0) target = $region25
  $region24: #{encoder_rnn_forward.1} parent=0 // pred_region
    _
  $region25: #{encoder_rnn_forward.1} parent=0 // pred_fallthru
    _
  // Predicated region
  $region26: #{encoder_rnn_forward.1} parent=0 // pred_check
    _
  $region27: #{encoder_rnn_forward.1} parent=0 // pred_check_branch
    %37 = sbr.rel (0) target = $region29
  $region28: #{encoder_rnn_forward.1} parent=0 // pred_region
    _
  $region29: #{encoder_rnn_forward.1} parent=0 // pred_fallthru
    _
  %s38 = ssub.s32 0, 0
  %s39 = smul.u32 8, %s38
  %p40 = scmp.lt.s32.totalorder %s39, 7
  %s41 = scalar_select %p40, %s39, 7
  %s42 = smul.addr %s41, 3
  %s43 = smul.addr %s42, 8
  %s44 = scalar_lea.vmem %s2, %s43
  %s45 = ssub.s32 0, 0
  %s46 = smul.u32 8, %s45
  %p47 = scmp.lt.s32.totalorder %s46, 7
  %s48 = scalar_select %p47, %s46, 7
  %s49 = smul.addr %s48, 8
  %s50 = scalar_lea.vmem %s8, %s49
  %s51 = ssub.s32 0, 0
  %s52 = smul.u32 8, %s51
  %p53 = scmp.lt.s32.totalorder %s52, 7
  %s54 = scalar_select %p53, %s52, 7
  %s55 = smul.addr %s54, 3
  %s56 = smul.addr %s55, 8
  %s57 = scalar_lea.vmem %s2, %s56
  %s58 = ssub.s32 0, 0
  %s59 = smul.u32 8, %s58
  %s60 = ssub.s32 0, 0
  %s61 = smul.u32 8, %s60
  %p62 = scmp.lt.s32.totalorder %s61, 7
  %s63 = scalar_select %p62, %s61, 7
  %s64 = smul.addr %s63, 8
  %s65 = scalar_lea.vmem %s8, %s64
  %s66 = ssub.s32 0, 0
  %s67 = smul.u32 8, %s66
  %p69 = scmp.eq.s32.totalorder 0, 0
  // Predicated region
  $region30: #{encoder_rnn_forward.1} parent=0 // pred_check
    %p70 = pneg %p69
  $region31: #{encoder_rnn_forward.1} parent=0 // pred_check_branch
    %72 = sbr.rel (%p70) target = $region33
  $region32: #{encoder_rnn_forward.1} parent=0 // pred_region
    %73 = vst [vmem:[#allocation2] sm:$0xff] 0.0
    %74 = vst [vmem:[#allocation3] sm:$0xff] 0.0
  $region33: #{encoder_rnn_forward.1} parent=0 // pred_fallthru
    _
  %v75 = vld [vmem:[%s0] sm:$0xff]
  %v76 = vld [vmem:[%s3] sm:$0xff]
  %v77 = vld [vmem:[%s3 + $0x8] sm:$0xf]
  %v78 = vld [vmem:[%s3 + $0xc] sm:$0xff]
  %v79 = vld [vmem:[%s3 + $0x14] sm:$0xf]
  %v80 = vld [vmem:[%s3 + $0x18] sm:$0xff]
  %v81 = vld [vmem:[%s3 + $0x20] sm:$0xf]
  %v82 = vld [vmem:[%s3 + $0x24] sm:$0xff]
  %v83 = vld [vmem:[%s3 + $0x2c] sm:$0xf]
  %v84 = vld [vmem:[%s3 + $0x30] sm:$0xff]
  %v85 = vld [vmem:[%s3 + $0x38] sm:$0xf]
  %v86 = vld [vmem:[%s3 + $0x3c] sm:$0xff]
  %v87 = vld [vmem:[%s3 + $0x44] sm:$0xf]
  %v88 = vld [vmem:[%s3 + $0x48] sm:$0xff]
  %v89 = vld [vmem:[%s3 + $0x50] sm:$0xf]
  %v90 = vld [vmem:[%s3 + $0x54] sm:$0xff]
  %v91 = vld [vmem:[%s3 + $0x5c] sm:$0xf]
  %v92 = vld [vmem:[%s3 + $0x60] sm:$0xff]
  %v93 = vld [vmem:[%s3 + $0x68] sm:$0xf]
  %v94 = vld [vmem:[%s3 + $0x6c] sm:$0xff]
  %v95 = vld [vmem:[%s3 + $0x74] sm:$0xf]
  %v96 = vld [vmem:[%s3 + $0x78] sm:$0xff]
  %v97 = vld [vmem:[%s3 + $0x80] sm:$0xf]
  %v98 = vld [vmem:[%s3 + $0x84] sm:$0xff]
  %v99 = vld [vmem:[%s3 + $0x8c] sm:$0xf]
  %v100 = vld [vmem:[%s3 + $0x90] sm:$0xff]
  %v101 = vld [vmem:[%s3 + $0x98] sm:$0xf]
  %v102 = vld [vmem:[%s3 + $0x9c] sm:$0xff]
  %v103 = vld [vmem:[%s3 + $0xa4] sm:$0xf]
  %v104 = vld [vmem:[%s3 + $0xa8] sm:$0xff]
  %v105 = vld [vmem:[%s3 + $0xb0] sm:$0xf]
  %v106 = vld [vmem:[%s3 + $0xb4] sm:$0xff]
  %v107 = vld [vmem:[%s3 + $0xbc] sm:$0xf]
  %v108 = vld [vmem:[%s4] sm:$0xff]
  %v109 = vld [vmem:[%s4 + $0x8] sm:$0xf]
  %v110 = vld [vmem:[%s4 + $0xc] sm:$0xff]
  %v111 = vld [vmem:[%s4 + $0x14] sm:$0xf]
  %v112 = vld [vmem:[%s4 + $0x18] sm:$0xff]
  %v113 = vld [vmem:[%s4 + $0x20] sm:$0xf]
  %v114 = vld [vmem:[%s4 + $0x24] sm:$0xff]
  %v115 = vld [vmem:[%s4 + $0x2c] sm:$0xf]
  %v116 = vld [vmem:[%s4 + $0x30] sm:$0xff]
  %v117 = vld [vmem:[%s4 + $0x38] sm:$0xf]
  %v118 = vld [vmem:[%s4 + $0x3c] sm:$0xff]
  %v119 = vld [vmem:[%s4 + $0x44] sm:$0xf]
  %v120 = vld [vmem:[%s4 + $0x48] sm:$0xff]
  %v121 = vld [vmem:[%s4 + $0x50] sm:$0xf]
  %v122 = vld [vmem:[%s4 + $0x54] sm:$0xff]
  %v123 = vld [vmem:[%s4 + $0x5c] sm:$0xf]
  %v124 = vld [vmem:[%s4 + $0x60] sm:$0xff]
  %v125 = vld [vmem:[%s4 + $0x68] sm:$0xf]
  %v126 = vld [vmem:[%s4 + $0x6c] sm:$0xff]
  %v127 = vld [vmem:[%s4 + $0x74] sm:$0xf]
  %v128 = vld [vmem:[%s4 + $0x78] sm:$0xff]
  %v129 = vld [vmem:[%s4 + $0x80] sm:$0xf]
  %v130 = vld [vmem:[%s4 + $0x84] sm:$0xff]
  %v131 = vld [vmem:[%s4 + $0x8c] sm:$0xf]
  %v132 = vld [vmem:[%s4 + $0x90] sm:$0xff]
  %v133 = vld [vmem:[%s4 + $0x98] sm:$0xf]
  %v134 = vld [vmem:[%s4 + $0x9c] sm:$0xff]
  %v135 = vld [vmem:[%s4 + $0xa4] sm:$0xf]
  %v136 = vld [vmem:[%s4 + $0xa8] sm:$0xff]
  %v137 = vld [vmem:[%s4 + $0xb0] sm:$0xf]
  %v138 = vld [vmem:[%s4 + $0xb4] sm:$0xff]
  %v139 = vld [vmem:[%s4 + $0xbc] sm:$0xf]
  %v140 = vld [vmem:[%s5] sm:$0x1]
  %v141 = vld [vmem:[%s6] sm:$0x1]
  %s142 = smul.u32 0, 8
  %s143 = ssub.s32 0, 0
  %s144 = smul.u32 %s143, 8
  %v145 = vld [vmem:[#allocation2] sm:$0xff]
  %v146 = vld [vmem:[#allocation3] sm:$0xff]
  %v147 = vld [vmem:[%s1] sm:$0xff]
  %v148 = vld [vmem:[%s1 + $0x8] sm:$0xff]
  %v149 = vld [vmem:[%s1 + $0x10] sm:$0xff]
  %v150 = vpack.c.bf16 %v145, %v145
  %v183 = vunpack.c.l.b16 %v76
  %v184 = vunpack.c.h.b16 %v76
  %v185 = vunpack.c.l.b16 %v77
  %v186 = vunpack.c.l.b16 %v78
  %v187 = vunpack.c.h.b16 %v78
  %v188 = vunpack.c.l.b16 %v79
  %v189 = vunpack.c.l.b16 %v80
  %v190 = vunpack.c.h.b16 %v80
  %v191 = vunpack.c.l.b16 %v81
  %v192 = vunpack.c.l.b16 %v82
  %v193 = vunpack.c.h.b16 %v82
  %v194 = vunpack.c.l.b16 %v83
  %v195 = vunpack.c.l.b16 %v84
  %v196 = vunpack.c.h.b16 %v84
  %v197 = vunpack.c.l.b16 %v85
  %v198 = vunpack.c.l.b16 %v86
  %v199 = vunpack.c.h.b16 %v86
  %v200 = vunpack.c.l.b16 %v87
  %v201 = vunpack.c.l.b16 %v88
  %v202 = vunpack.c.h.b16 %v88
  %v203 = vunpack.c.l.b16 %v89
  %v204 = vunpack.c.l.b16 %v90
  %v205 = vunpack.c.h.b16 %v90
  %v206 = vunpack.c.l.b16 %v91
  %v207 = vunpack.c.l.b16 %v92
  %v208 = vunpack.c.h.b16 %v92
  %v209 = vunpack.c.l.b16 %v93
  %v210 = vunpack.c.l.b16 %v94
  %v211 = vunpack.c.h.b16 %v94
  %v212 = vunpack.c.l.b16 %v95
  %v213 = vunpack.c.l.b16 %v96
  %v214 = vunpack.c.h.b16 %v96
  %v215 = vunpack.c.l.b16 %v97
  %v216 = vunpack.c.l.b16 %v98
  %v217 = vunpack.c.h.b16 %v98
  %v218 = vunpack.c.l.b16 %v99
  %v219 = vunpack.c.l.b16 %v100
  %v220 = vunpack.c.h.b16 %v100
  %v221 = vunpack.c.l.b16 %v101
  %v222 = vunpack.c.l.b16 %v102
  %v223 = vunpack.c.h.b16 %v102
  %v224 = vunpack.c.l.b16 %v103
  %v225 = vunpack.c.l.b16 %v104
  %v226 = vunpack.c.h.b16 %v104
  %v227 = vunpack.c.l.b16 %v105
  %v228 = vunpack.c.l.b16 %v106
  %v229 = vunpack.c.h.b16 %v106
  %v230 = vunpack.c.l.b16 %v107
  %v231 = vpack.c.b16 %v186, %v183
  %v232 = vpack.c.b16 %v187, %v184
  %v233 = vpack.c.b16 %v188, %v185
  %v234 = vpack.c.b16 %v192, %v189
  %v235 = vpack.c.b16 %v193, %v190
  %v236 = vpack.c.b16 %v194, %v191
  %v237 = vpack.c.b16 %v198, %v195
  %v238 = vpack.c.b16 %v199, %v196
  %v239 = vpack.c.b16 %v200, %v197
  %v240 = vpack.c.b16 %v204, %v201
  %v241 = vpack.c.b16 %v205, %v202
  %v242 = vpack.c.b16 %v206, %v203
  %v243 = vpack.c.b16 %v210, %v207
  %v244 = vpack.c.b16 %v211, %v208
  %v245 = vpack.c.b16 %v212, %v209
  %v246 = vpack.c.b16 %v216, %v213
  %v247 = vpack.c.b16 %v217, %v214
  %v248 = vpack.c.b16 %v218, %v215
  %v249 = vpack.c.b16 %v222, %v219
  %v250 = vpack.c.b16 %v223, %v220
  %v251 = vpack.c.b16 %v224, %v221
  %v252 = vpack.c.b16 %v228, %v225
  %v253 = vpack.c.b16 %v229, %v226
  %v254 = vpack.c.b16 %v230, %v227
  %279 = vmatprep.subr.bf16.mxu0 %v232
  %280 = vmatpush1.bf16.msra.mxu0 %v231
  %281 = vmatprep.subr.bf16.mxu0 %v235
  %282 = vmatpush1.bf16.msra.mxu0 %v234
  %283 = vmatprep.subr.bf16.mxu0 %v238
  %284 = vmatpush1.bf16.msra.mxu0 %v237
  %285 = vmatprep.subr.bf16.mxu0 %v241
  %286 = vmatpush1.bf16.msra.mxu0 %v240
  %287 = vmatprep.subr.bf16.mxu0 %v244
  %288 = vmatpush1.bf16.msra.mxu0 %v243
  %289 = vmatprep.subr.bf16.mxu0 %v247
  %290 = vmatpush1.bf16.msra.mxu0 %v246
  %291 = vmatprep.subr.bf16.mxu0 %v250
  %292 = vmatpush1.bf16.msra.mxu0 %v249
  %293 = vmatprep.subr.bf16.mxu0 %v253
  %294 = vmatpush1.bf16.msra.mxu0 %v252
  %295 = vmatprep.subr.bf16.mxu0 0
  %296 = vmatpush1.bf16.msra.mxu0 0
  %297 = vmatprep.subr.bf16.mxu0 0
  %298 = vmatpush1.bf16.msra.mxu0 0
  %299 = vmatprep.subr.bf16.mxu0 0
  %300 = vmatpush1.bf16.msra.mxu0 0
  %301 = vmatprep.subr.bf16.mxu0 0
  %302 = vmatpush1.bf16.msra.mxu0 0
  %303 = vmatprep.subr.bf16.mxu0 0
  %304 = vmatpush1.bf16.msra.mxu0 0
  %305 = vmatprep.subr.bf16.mxu0 0
  %306 = vmatpush1.bf16.msra.mxu0 0
  %307 = vmatprep.subr.bf16.mxu0 0
  %308 = vmatpush1.bf16.msra.mxu0 0
  %309 = vmatprep.subr.bf16.mxu0 0
  %310 = vmatpush1.bf16.msra.mxu0 0
  %311 = vmatprep.mubr.bf16.mxu0 0
  %312 = vmatmul.mubr.bf16.gmra.mrb[0].mxu0 %v150
  %v313 = vpop.f32.mrb[0].mxu0
  %v314 = vadd.f32 0.0, %v313
  %v315 = vpop.f32.mrb[0].mxu0
  %v316 = vadd.f32 0.0, %v315
  %v317 = vpop.f32.mrb[0].mxu0
  %v318 = vpop.f32.mrb[0].mxu0
  %319 = vdwg.mxu0
  %320 = vmatprep.subr.bf16.mxu0 0
  %321 = vmatpush1.bf16.msra.mxu0 %v233
  %322 = vmatprep.subr.bf16.mxu0 0
  %323 = vmatpush1.bf16.msra.mxu0 %v236
  %324 = vmatprep.subr.bf16.mxu0 0
  %325 = vmatpush1.bf16.msra.mxu0 %v239
  %326 = vmatprep.subr.bf16.mxu0 0
  %327 = vmatpush1.bf16.msra.mxu0 %v242
  %328 = vmatprep.subr.bf16.mxu0 0
  %329 = vmatpush1.bf16.msra.mxu0 %v245
  %330 = vmatprep.subr.bf16.mxu0 0
  %331 = vmatpush1.bf16.msra.mxu0 %v248
  %332 = vmatprep.subr.bf16.mxu0 0
  %333 = vmatpush1.bf16.msra.mxu0 %v251
  %334 = vmatprep.subr.bf16.mxu0 0
  %335 = vmatpush1.bf16.msra.mxu0 %v254
  %336 = vmatprep.subr.bf16.mxu0 0
  %337 = vmatpush1.bf16.msra.mxu0 0
  %338 = vmatprep.subr.bf16.mxu0 0
  %339 = vmatpush1.bf16.msra.mxu0 0
  %340 = vmatprep.subr.bf16.mxu0 0
  %341 = vmatpush1.bf16.msra.mxu0 0
  %342 = vmatprep.subr.bf16.mxu0 0
  %343 = vmatpush1.bf16.msra.mxu0 0
  %344 = vmatprep.subr.bf16.mxu0 0
  %345 = vmatpush1.bf16.msra.mxu0 0
  %346 = vmatprep.subr.bf16.mxu0 0
  %347 = vmatpush1.bf16.msra.mxu0 0
  %348 = vmatprep.subr.bf16.mxu0 0
  %349 = vmatpush1.bf16.msra.mxu0 0
  %350 = vmatprep.subr.bf16.mxu0 0
  %351 = vmatpush1.bf16.msra.mxu0 0
  %352 = vmatprep.mubr.bf16.mxu0 0
  %353 = vmatmul.mubr.bf16.gmra.mrb[0].mxu0 %v150
  %v354 = vpop.f32.mrb[0].mxu0
  %v355 = vadd.f32 0.0, %v354
  %v356 = vpop.f32.mrb[0].mxu0
  %v357 = vpop.f32.mrb[0].mxu0
  %v358 = vpop.f32.mrb[0].mxu0
  %359 = vdwg.mxu0
  %v360 = vadd.f32 %v147, %v314
  %v361 = vxor.u32 %v360, 2147483648
  %v362 = vmul.f32 %v361, 1.442695
  %v363 = vpow.pop %v362
  %v364 = vadd.f32 %v363, 1.0
  %v365 = vrcp.pop %v364
  %v366 = vmul.f32 1.0, %v365
  %v367 = vadd.f32 %v148, %v316
  %v368 = vxor.u32 %v367, 2147483648
  %v369 = vmul.f32 %v368, 1.442695
  %v370 = vpow.pop %v369
  %v371 = vadd.f32 %v370, 1.0
  %v372 = vrcp.pop %v371
  %v373 = vmul.f32 1.0, %v372
  %v375 = vlaneseq
  %v376 = vshrl.u32 %v375, 7
  %v377 = vsub.s32 0, %v376
  %v378 = vrot.slane %v140, %v377
  %v380 = vadd.f32 %v355, %v378
  %v381 = vmul.f32 %v366, %v380
  %v382 = vadd.f32 %v149, %v381
  %v383 = vtanh.pop %v382
  %v384 = vsub.f32 %v145, %v383
  %v385 = vmul.f32 %v373, %v384
  %v386 = vadd.f32 %v383, %v385
  %s387 = scalar_lea.vmem %s57, 168
  %v388 = vld [vmem:[%s387] sm:$0xff]
  %v389 = vld [vmem:[%s387 + $0x8] sm:$0xff]
  %v390 = vld [vmem:[%s387 + $0x10] sm:$0xff]
  %v391 = vpack.c.bf16 %v146, %v146
  %v424 = vunpack.c.l.b16 %v108
  %v425 = vunpack.c.h.b16 %v108
  %v426 = vunpack.c.l.b16 %v109
  %v427 = vunpack.c.l.b16 %v110
  %v428 = vunpack.c.h.b16 %v110
  %v429 = vunpack.c.l.b16 %v111
  %v430 = vunpack.c.l.b16 %v112
  %v431 = vunpack.c.h.b16 %v112
  %v432 = vunpack.c.l.b16 %v113
  %v433 = vunpack.c.l.b16 %v114
  %v434 = vunpack.c.h.b16 %v114
  %v435 = vunpack.c.l.b16 %v115
  %v436 = vunpack.c.l.b16 %v116
  %v437 = vunpack.c.h.b16 %v116
  %v438 = vunpack.c.l.b16 %v117
  %v439 = vunpack.c.l.b16 %v118
  %v440 = vunpack.c.h.b16 %v118
  %v441 = vunpack.c.l.b16 %v119
  %v442 = vunpack.c.l.b16 %v120
  %v443 = vunpack.c.h.b16 %v120
  %v444 = vunpack.c.l.b16 %v121
  %v445 = vunpack.c.l.b16 %v122
  %v446 = vunpack.c.h.b16 %v122
  %v447 = vunpack.c.l.b16 %v123
  %v448 = vunpack.c.l.b16 %v124
  %v449 = vunpack.c.h.b16 %v124
  %v450 = vunpack.c.l.b16 %v125
  %v451 = vunpack.c.l.b16 %v126
  %v452 = vunpack.c.h.b16 %v126
  %v453 = vunpack.c.l.b16 %v127
  %v454 = vunpack.c.l.b16 %v128
  %v455 = vunpack.c.h.b16 %v128
  %v456 = vunpack.c.l.b16 %v129
  %v457 = vunpack.c.l.b16 %v130
  %v458 = vunpack.c.h.b16 %v130
  %v459 = vunpack.c.l.b16 %v131
  %v460 = vunpack.c.l.b16 %v132
  %v461 = vunpack.c.h.b16 %v132
  %v462 = vunpack.c.l.b16 %v133
  %v463 = vunpack.c.l.b16 %v134
  %v464 = vunpack.c.h.b16 %v134
  %v465 = vunpack.c.l.b16 %v135
  %v466 = vunpack.c.l.b16 %v136
  %v467 = vunpack.c.h.b16 %v136
  %v468 = vunpack.c.l.b16 %v137
  %v469 = vunpack.c.l.b16 %v138
  %v470 = vunpack.c.h.b16 %v138
  %v471 = vunpack.c.l.b16 %v139
  %v472 = vpack.c.b16 %v427, %v424
  %v473 = vpack.c.b16 %v428, %v425
  %v474 = vpack.c.b16 %v429, %v426
  %v475 = vpack.c.b16 %v433, %v430
  %v476 = vpack.c.b16 %v434, %v431
  %v477 = vpack.c.b16 %v435, %v432
  %v478 = vpack.c.b16 %v439, %v436
  %v479 = vpack.c.b16 %v440, %v437
  %v480 = vpack.c.b16 %v441, %v438
  %v481 = vpack.c.b16 %v445, %v442
  %v482 = vpack.c.b16 %v446, %v443
  %v483 = vpack.c.b16 %v447, %v444
  %v484 = vpack.c.b16 %v451, %v448
  %v485 = vpack.c.b16 %v452, %v449
  %v486 = vpack.c.b16 %v453, %v450
  %v487 = vpack.c.b16 %v457, %v454
  %v488 = vpack.c.b16 %v458, %v455
  %v489 = vpack.c.b16 %v459, %v456
  %v490 = vpack.c.b16 %v463, %v460
  %v491 = vpack.c.b16 %v464, %v461
  %v492 = vpack.c.b16 %v465, %v462
  %v493 = vpack.c.b16 %v469, %v466
  %v494 = vpack.c.b16 %v470, %v467
  %v495 = vpack.c.b16 %v471, %v468
  %520 = vmatprep.subr.bf16.mxu0 %v473
  %521 = vmatpush1.bf16.msra.mxu0 %v472
  %522 = vmatprep.subr.bf16.mxu0 %v476
  %523 = vmatpush1.bf16.msra.mxu0 %v475
  %524 = vmatprep.subr.bf16.mxu0 %v479
  %525 = vmatpush1.bf16.msra.mxu0 %v478
  %526 = vmatprep.subr.bf16.mxu0 %v482
  %527 = vmatpush1.bf16.msra.mxu0 %v481
  %528 = vmatprep.subr.bf16.mxu0 %v485
  %529 = vmatpush1.bf16.msra.mxu0 %v484
  %530 = vmatprep.subr.bf16.mxu0 %v488
  %531 = vmatpush1.bf16.msra.mxu0 %v487
  %532 = vmatprep.subr.bf16.mxu0 %v491
  %533 = vmatpush1.bf16.msra.mxu0 %v490
  %534 = vmatprep.subr.bf16.mxu0 %v494
  %535 = vmatpush1.bf16.msra.mxu0 %v493
  %536 = vmatprep.subr.bf16.mxu0 0
  %537 = vmatpush1.bf16.msra.mxu0 0
  %538 = vmatprep.subr.bf16.mxu0 0
  %539 = vmatpush1.bf16.msra.mxu0 0
  %540 = vmatprep.subr.bf16.mxu0 0
  %541 = vmatpush1.bf16.msra.mxu0 0
  %542 = vmatprep.subr.bf16.mxu0 0
  %543 = vmatpush1.bf16.msra.mxu0 0
  %544 = vmatprep.subr.bf16.mxu0 0
  %545 = vmatpush1.bf16.msra.mxu0 0
  %546 = vmatprep.subr.bf16.mxu0 0
  %547 = vmatpush1.bf16.msra.mxu0 0
  %548 = vmatprep.subr.bf16.mxu0 0
  %549 = vmatpush1.bf16.msra.mxu0 0
  %550 = vmatprep.subr.bf16.mxu0 0
  %551 = vmatpush1.bf16.msra.mxu0 0
  %552 = vmatprep.mubr.bf16.mxu0 0
  %553 = vmatmul.mubr.bf16.gmra.mrb[0].mxu0 %v391
  %v554 = vpop.f32.mrb[0].mxu0
  %v555 = vadd.f32 0.0, %v554
  %v556 = vpop.f32.mrb[0].mxu0
  %v557 = vadd.f32 0.0, %v556
  %v558 = vpop.f32.mrb[0].mxu0
  %v559 = vpop.f32.mrb[0].mxu0
  %560 = vdwg.mxu0
  %561 = vmatprep.subr.bf16.mxu0 0
  %562 = vmatpush1.bf16.msra.mxu0 %v474
  %563 = vmatprep.subr.bf16.mxu0 0
  %564 = vmatpush1.bf16.msra.mxu0 %v477
  %565 = vmatprep.subr.bf16.mxu0 0
  %566 = vmatpush1.bf16.msra.mxu0 %v480
  %567 = vmatprep.subr.bf16.mxu0 0
  %568 = vmatpush1.bf16.msra.mxu0 %v483
  %569 = vmatprep.subr.bf16.mxu0 0
  %570 = vmatpush1.bf16.msra.mxu0 %v486
  %571 = vmatprep.subr.bf16.mxu0 0
  %572 = vmatpush1.bf16.msra.mxu0 %v489
  %573 = vmatprep.subr.bf16.mxu0 0
  %574 = vmatpush1.bf16.msra.mxu0 %v492
  %575 = vmatprep.subr.bf16.mxu0 0
  %576 = vmatpush1.bf16.msra.mxu0 %v495
  %577 = vmatprep.subr.bf16.mxu0 0
  %578 = vmatpush1.bf16.msra.mxu0 0
  %579 = vmatprep.subr.bf16.mxu0 0
  %580 = vmatpush1.bf16.msra.mxu0 0
  %581 = vmatprep.subr.bf16.mxu0 0
  %582 = vmatpush1.bf16.msra.mxu0 0
  %583 = vmatprep.subr.bf16.mxu0 0
  %584 = vmatpush1.bf16.msra.mxu0 0
  %585 = vmatprep.subr.bf16.mxu0 0
  %586 = vmatpush1.bf16.msra.mxu0 0
  %587 = vmatprep.subr.bf16.mxu0 0
  %588 = vmatpush1.bf16.msra.mxu0 0
  %589 = vmatprep.subr.bf16.mxu0 0
  %590 = vmatpush1.bf16.msra.mxu0 0
  %591 = vmatprep.subr.bf16.mxu0 0
  %592 = vmatpush1.bf16.msra.mxu0 0
  %593 = vmatprep.mubr.bf16.mxu0 0
  %594 = vmatmul.mubr.bf16.gmra.mrb[0].mxu0 %v391
  %v595 = vpop.f32.mrb[0].mxu0
  %v596 = vadd.f32 0.0, %v595
  %v597 = vpop.f32.mrb[0].mxu0
  %v598 = vpop.f32.mrb[0].mxu0
  %v599 = vpop.f32.mrb[0].mxu0
  %600 = vdwg.mxu0
  %v601 = vadd.f32 %v388, %v555
  %v602 = vxor.u32 %v601, 2147483648
  %v603 = vmul.f32 %v602, 1.442695
  %v604 = vpow.pop %v603
  %v605 = vadd.f32 %v604, 1.0
  %v606 = vrcp.pop %v605
  %v607 = vmul.f32 1.0, %v606
  %v608 = vadd.f32 %v389, %v557
  %v609 = vxor.u32 %v608, 2147483648
  %v610 = vmul.f32 %v609, 1.442695
  %v611 = vpow.pop %v610
  %v612 = vadd.f32 %v611, 1.0
  %v613 = vrcp.pop %v612
  %v614 = vmul.f32 1.0, %v613
  %v616 = vlaneseq
  %v617 = vshrl.u32 %v616, 7
  %v618 = vsub.s32 0, %v617
  %v619 = vrot.slane %v141, %v618
  %v621 = vadd.f32 %v596, %v619
  %v622 = vmul.f32 %v607, %v621
  %v623 = vadd.f32 %v390, %v622
  %v624 = vtanh.pop %v623
  %v625 = vsub.f32 %v146, %v624
  %v626 = vmul.f32 %v614, %v625
  %v627 = vadd.f32 %v624, %v626
  %v628 = vstv %s142
  %vm629 = vcmp.lt.s32.totalorder %v628, %v75
  %s630 = sadd.s32 %s144, 7
  %v631 = vstv %s630
  %vm632 = vcmp.lt.s32.totalorder %v631, %v75
  %v633 = vsel %vm629, 1, 0
  %634 = vset.pattern.permute.xlu0 0
  %635 = vperm.xlu0 %634, %v633
  %v636 = vpop.permute.xlu0 %635
  %vm637 = vcmp.eq.s32.totalorder %v636, 1
  %v638 = vsel %vm637, %v386, 0.0
  %639 = vst [vmem:[%s7] sm:$0xff] %v638
  %v640 = vsel %vm632, 1, 0
  %641 = vset.pattern.permute.xlu0 0
  %642 = vperm.xlu0 %641, %v640
  %v643 = vpop.permute.xlu0 %642
  %vm644 = vcmp.eq.s32.totalorder %v643, 1
  %v645 = vsel %vm644, %v627, 0.0
  %s646 = scalar_lea.vmem %s65, 56
  %647 = vst [vmem:[%s646] sm:$0xff] %v645
  %v648 = vsel %vm637, %v386, %v145
  %v649 = vsel %vm644, %v627, %v146
  %s650 = scalar_lea.vmem %s1, 24
  %v651 = vld [vmem:[%s650] sm:$0xff]
  %v652 = vld [vmem:[%s650 + $0x8] sm:$0xff]
  %v653 = vld [vmem:[%s650 + $0x10] sm:$0xff]
  %v654 = vpack.c.bf16 %v648, %v648
  %655 = vmatprep.subr.bf16.mxu0 %v232
  %656 = vmatpush1.bf16.msra.mxu0 %v231
  %657 = vmatprep.subr.bf16.mxu0 %v235
  %658 = vmatpush1.bf16.msra.mxu0 %v234
  %659 = vmatprep.subr.bf16.mxu0 %v238
  %660 = vmatpush1.bf16.msra.mxu0 %v237
  %661 = vmatprep.subr.bf16.mxu0 %v241
  %662 = vmatpush1.bf16.msra.mxu0 %v240
  %663 = vmatprep.subr.bf16.mxu0 %v244
  %664 = vmatpush1.bf16.msra.mxu0 %v243
  %665 = vmatprep.subr.bf16.mxu0 %v247
  %666 = vmatpush1.bf16.msra.mxu0 %v246
  %667 = vmatprep.subr.bf16.mxu0 %v250
  %668 = vmatpush1.bf16.msra.mxu0 %v249
  %669 = vmatprep.subr.bf16.mxu0 %v253
  %670 = vmatpush1.bf16.msra.mxu0 %v252
  %671 = vmatprep.subr.bf16.mxu0 0
  %672 = vmatpush1.bf16.msra.mxu0 0
  %673 = vmatprep.subr.bf16.mxu0 0
  %674 = vmatpush1.bf16.msra.mxu0 0
  %675 = vmatprep.subr.bf16.mxu0 0
  %676 = vmatpush1.bf16.msra.mxu0 0
  %677 = vmatprep.subr.bf16.mxu0 0
  %678 = vmatpush1.bf16.msra.mxu0 0
  %679 = vmatprep.subr.bf16.mxu0 0
  %680 = vmatpush1.bf16.msra.mxu0 0
  %681 = vmatprep.subr.bf16.mxu0 0
  %682 = vmatpush1.bf16.msra.mxu0 0
  %683 = vmatprep.subr.bf16.mxu0 0
  %684 = vmatpush1.bf16.msra.mxu0 0
  %685 = vmatprep.subr.bf16.mxu0 0
  %686 = vmatpush1.bf16.msra.mxu0 0
  %687 = vmatprep.mubr.bf16.mxu0 0
  %688 = vmatmul.mubr.bf16.gmra.mrb[0].mxu0 %v654
  %v689 = vpop.f32.mrb[0].mxu0
  %v690 = vadd.f32 0.0, %v689
  %v691 = vpop.f32.mrb[0].mxu0
  %v692 = vadd.f32 0.0, %v691
  %v693 = vpop.f32.mrb[0].mxu0
  %v694 = vpop.f32.mrb[0].mxu0
  %695 = vdwg.mxu0
  %696 = vmatprep.subr.bf16.mxu0 0
  %697 = vmatpush1.bf16.msra.mxu0 %v233
  %698 = vmatprep.subr.bf16.mxu0 0
  %699 = vmatpush1.bf16.msra.mxu0 %v236
  %700 = vmatprep.subr.bf16.mxu0 0
  %701 = vmatpush1.bf16.msra.mxu0 %v239
  %702 = vmatprep.subr.bf16.mxu0 0
  %703 = vmatpush1.bf16.msra.mxu0 %v242
  %704 = vmatprep.subr.bf16.mxu0 0
  %705 = vmatpush1.bf16.msra.mxu0 %v245
  %706 = vmatprep.subr.bf16.mxu0 0
  %707 = vmatpush1.bf16.msra.mxu0 %v248
  %708 = vmatprep.subr.bf16.mxu0 0
  %709 = vmatpush1.bf16.msra.mxu0 %v251
  %710 = vmatprep.subr.bf16.mxu0 0
  %711 = vmatpush1.bf16.msra.mxu0 %v254
  %712 = vmatprep.subr.bf16.mxu0 0
  %713 = vmatpush1.bf16.msra.mxu0 0
  %714 = vmatprep.subr.bf16.mxu0 0
  %715 = vmatpush1.bf16.msra.mxu0 0
  %716 = vmatprep.subr.bf16.mxu0 0
  %717 = vmatpush1.bf16.msra.mxu0 0
  %718 = vmatprep.subr.bf16.mxu0 0
  %719 = vmatpush1.bf16.msra.mxu0 0
  %720 = vmatprep.subr.bf16.mxu0 0
  %721 = vmatpush1.bf16.msra.mxu0 0
  %722 = vmatprep.subr.bf16.mxu0 0
  %723 = vmatpush1.bf16.msra.mxu0 0
  %724 = vmatprep.subr.bf16.mxu0 0
  %725 = vmatpush1.bf16.msra.mxu0 0
  %726 = vmatprep.subr.bf16.mxu0 0
  %727 = vmatpush1.bf16.msra.mxu0 0
  %728 = vmatprep.mubr.bf16.mxu0 0
  %729 = vmatmul.mubr.bf16.gmra.mrb[0].mxu0 %v654
  %v730 = vpop.f32.mrb[0].mxu0
  %v731 = vadd.f32 0.0, %v730
  %v732 = vpop.f32.mrb[0].mxu0
  %v733 = vpop.f32.mrb[0].mxu0
  %v734 = vpop.f32.mrb[0].mxu0
  %735 = vdwg.mxu0
  %v736 = vadd.f32 %v651, %v690
  %v737 = vxor.u32 %v736, 2147483648
  %v738 = vmul.f32 %v737, 1.442695
  %v739 = vpow.pop %v738
  %v740 = vadd.f32 %v739, 1.0
  %v741 = vrcp.pop %v740
  %v742 = vmul.f32 1.0, %v741
  %v743 = vadd.f32 %v652, %v692
  %v744 = vxor.u32 %v743, 2147483648
  %v745 = vmul.f32 %v744, 1.442695
  %v746 = vpow.pop %v745
  %v747 = vadd.f32 %v746, 1.0
  %v748 = vrcp.pop %v747
  %v749 = vmul.f32 1.0, %v748
  %v750 = vadd.f32 %v731, %v378
  %v751 = vmul.f32 %v742, %v750
  %v752 = vadd.f32 %v653, %v751
  %v753 = vtanh.pop %v752
  %v754 = vsub.f32 %v648, %v753
  %v755 = vmul.f32 %v749, %v754
  %v756 = vadd.f32 %v753, %v755
  %s757 = scalar_lea.vmem %s57, 144
  %v758 = vld [vmem:[%s757] sm:$0xff]
  %v759 = vld [vmem:[%s757 + $0x8] sm:$0xff]
  %v760 = vld [vmem:[%s757 + $0x10] sm:$0xff]
  %v761 = vpack.c.bf16 %v649, %v649
  %762 = vmatprep.subr.bf16.mxu0 %v473
  %763 = vmatpush1.bf16.msra.mxu0 %v472
  %764 = vmatprep.subr.bf16.mxu0 %v476
  %765 = vmatpush1.bf16.msra.mxu0 %v475
  %766 = vmatprep.subr.bf16.mxu0 %v479
  %767 = vmatpush1.bf16.msra.mxu0 %v478
  %768 = vmatprep.subr.bf16.mxu0 %v482
  %769 = vmatpush1.bf16.msra.mxu0 %v481
  %770 = vmatprep.subr.bf16.mxu0 %v485
  %771 = vmatpush1.bf16.msra.mxu0 %v484
  %772 = vmatprep.subr.bf16.mxu0 %v488
  %773 = vmatpush1.bf16.msra.mxu0 %v487
  %774 = vmatprep.subr.bf16.mxu0 %v491
  %775 = vmatpush1.bf16.msra.mxu0 %v490
  %776 = vmatprep.subr.bf16.mxu0 %v494
  %777 = vmatpush1.bf16.msra.mxu0 %v493
  %778 = vmatprep.subr.bf16.mxu0 0
  %779 = vmatpush1.bf16.msra.mxu0 0
  %780 = vmatprep.subr.bf16.mxu0 0
  %781 = vmatpush1.bf16.msra.mxu0 0
  %782 = vmatprep.subr.bf16.mxu0 0
  %783 = vmatpush1.bf16.msra.mxu0 0
  %784 = vmatprep.subr.bf16.mxu0 0
  %785 = vmatpush1.bf16.msra.mxu0 0
  %786 = vmatprep.subr.bf16.mxu0 0
  %787 = vmatpush1.bf16.msra.mxu0 0
  %788 = vmatprep.subr.bf16.mxu0 0
  %789 = vmatpush1.bf16.msra.mxu0 0
  %790 = vmatprep.subr.bf16.mxu0 0
  %791 = vmatpush1.bf16.msra.mxu0 0
  %792 = vmatprep.subr.bf16.mxu0 0
  %793 = vmatpush1.bf16.msra.mxu0 0
  %794 = vmatprep.mubr.bf16.mxu0 0
  %795 = vmatmul.mubr.bf16.gmra.mrb[0].mxu0 %v761
  %v796 = vpop.f32.mrb[0].mxu0
  %v797 = vadd.f32 0.0, %v796
  %v798 = vpop.f32.mrb[0].mxu0
  %v799 = vadd.f32 0.0, %v798
  %v800 = vpop.f32.mrb[0].mxu0
  %v801 = vpop.f32.mrb[0].mxu0
  %802 = vdwg.mxu0
  %803 = vmatprep.subr.bf16.mxu0 0
  %804 = vmatpush1.bf16.msra.mxu0 %v474
  %805 = vmatprep.subr.bf16.mxu0 0
  %806 = vmatpush1.bf16.msra.mxu0 %v477
  %807 = vmatprep.subr.bf16.mxu0 0
  %808 = vmatpush1.bf16.msra.mxu0 %v480
  %809 = vmatprep.subr.bf16.mxu0 0
  %810 = vmatpush1.bf16.msra.mxu0 %v483
  %811 = vmatprep.subr.bf16.mxu0 0
  %812 = vmatpush1.bf16.msra.mxu0 %v486
  %813 = vmatprep.subr.bf16.mxu0 0
  %814 = vmatpush1.bf16.msra.mxu0 %v489
  %815 = vmatprep.subr.bf16.mxu0 0
  %816 = vmatpush1.bf16.msra.mxu0 %v492
  %817 = vmatprep.subr.bf16.mxu0 0
  %818 = vmatpush1.bf16.msra.mxu0 %v495
  %819 = vmatprep.subr.bf16.mxu0 0
  %820 = vmatpush1.bf16.msra.mxu0 0
  %821 = vmatprep.subr.bf16.mxu0 0
  %822 = vmatpush1.bf16.msra.mxu0 0
  %823 = vmatprep.subr.bf16.mxu0 0
  %824 = vmatpush1.bf16.msra.mxu0 0
  %825 = vmatprep.subr.bf16.mxu0 0
  %826 = vmatpush1.bf16.msra.mxu0 0
  %827 = vmatprep.subr.bf16.mxu0 0
  %828 = vmatpush1.bf16.msra.mxu0 0
  %829 = vmatprep.subr.bf16.mxu0 0
  %830 = vmatpush1.bf16.msra.mxu0 0
  %831 = vmatprep.subr.bf16.mxu0 0
  %832 = vmatpush1.bf16.msra.mxu0 0
  %833 = vmatprep.subr.bf16.mxu0 0
  %834 = vmatpush1.bf16.msra.mxu0 0
  %835 = vmatprep.mubr.bf16.mxu0 0
  %836 = vmatmul.mubr.bf16.gmra.mrb[0].mxu0 %v761
  %v837 = vpop.f32.mrb[0].mxu0
  %v838 = vadd.f32 0.0, %v837
  %v839 = vpop.f32.mrb[0].mxu0
  %v840 = vpop.f32.mrb[0].mxu0
  %v841 = vpop.f32.mrb[0].mxu0
  %842 = vdwg.mxu0
  %v843 = vadd.f32 %v758, %v797
  %v844 = vxor.u32 %v843, 2147483648
  %v845 = vmul.f32 %v844, 1.442695
  %v846 = vpow.pop %v845
  %v847 = vadd.f32 %v846, 1.0
  %v848 = vrcp.pop %v847
  %v849 = vmul.f32 1.0, %v848
  %v850 = vadd.f32 %v759, %v799
  %v851 = vxor.u32 %v850, 2147483648
  %v852 = vmul.f32 %v851, 1.442695
  %v853 = vpow.pop %v852
  %v854 = vadd.f32 %v853, 1.0
  %v855 = vrcp.pop %v854
  %v856 = vmul.f32 1.0, %v855
  %v857 = vadd.f32 %v838, %v619
  %v858 = vmul.f32 %v849, %v857
  %v859 = vadd.f32 %v760, %v858
  %v860 = vtanh.pop %v859
  %v861 = vsub.f32 %v649, %v860
  %v862 = vmul.f32 %v856, %v861
  %v863 = vadd.f32 %v860, %v862
  %s864 = sadd.s32 %s142, 1
  %v865 = vstv %s864
  %vm866 = vcmp.lt.s32.totalorder %v865, %v75
  %s867 = sadd.s32 %s144, 6
  %v868 = vstv %s867
  %vm869 = vcmp.lt.s32.totalorder %v868, %v75
  %v870 = vsel %vm866, 1, 0
  %871 = vset.pattern.permute.xlu0 0
  %872 = vperm.xlu0 %871, %v870
  %v873 = vpop.permute.xlu0 %872
  %vm874 = vcmp.eq.s32.totalorder %v873, 1
  %v875 = vsel %vm874, %v756, 0.0
  %s876 = scalar_lea.vmem %s7, 8
  %877 = vst [vmem:[%s876] sm:$0xff] %v875
  %v878 = vsel %vm869, 1, 0
  %879 = vset.pattern.permute.xlu0 0
  %880 = vperm.xlu0 %879, %v878
  %v881 = vpop.permute.xlu0 %880
  %vm882 = vcmp.eq.s32.totalorder %v881, 1
  %v883 = vsel %vm882, %v863, 0.0
  %s884 = scalar_lea.vmem %s65, 48
  %885 = vst [vmem:[%s884] sm:$0xff] %v883
  %v886 = vsel %vm874, %v756, %v648
  %v887 = vsel %vm882, %v863, %v649
  %s888 = scalar_lea.vmem %s1, 48
  %v889 = vld [vmem:[%s888] sm:$0xff]
  %v890 = vld [vmem:[%s888 + $0x8] sm:$0xff]
  %v891 = vld [vmem:[%s888 + $0x10] sm:$0xff]
  %v892 = vpack.c.bf16 %v886, %v886
  %893 = vmatprep.subr.bf16.mxu0 %v232
  %894 = vmatpush1.bf16.msra.mxu0 %v231
  %895 = vmatprep.subr.bf16.mxu0 %v235
  %896 = vmatpush1.bf16.msra.mxu0 %v234
  %897 = vmatprep.subr.bf16.mxu0 %v238
  %898 = vmatpush1.bf16.msra.mxu0 %v237
  %899 = vmatprep.subr.bf16.mxu0 %v241
  %900 = vmatpush1.bf16.msra.mxu0 %v240
  %901 = vmatprep.subr.bf16.mxu0 %v244
  %902 = vmatpush1.bf16.msra.mxu0 %v243
  %903 = vmatprep.subr.bf16.mxu0 %v247
  %904 = vmatpush1.bf16.msra.mxu0 %v246
  %905 = vmatprep.subr.bf16.mxu0 %v250
  %906 = vmatpush1.bf16.msra.mxu0 %v249
  %907 = vmatprep.subr.bf16.mxu0 %v253
  %908 = vmatpush1.bf16.msra.mxu0 %v252
  %909 = vmatprep.subr.bf16.mxu0 0
  %910 = vmatpush1.bf16.msra.mxu0 0
  %911 = vmatprep.subr.bf16.mxu0 0
  %912 = vmatpush1.bf16.msra.mxu0 0
  %913 = vmatprep.subr.bf16.mxu0 0
  %914 = vmatpush1.bf16.msra.mxu0 0
  %915 = vmatprep.subr.bf16.mxu0 0
  %916 = vmatpush1.bf16.msra.mxu0 0
  %917 = vmatprep.subr.bf16.mxu0 0
  %918 = vmatpush1.bf16.msra.mxu0 0
  %919 = vmatprep.subr.bf16.mxu0 0
  %920 = vmatpush1.bf16.msra.mxu0 0
  %921 = vmatprep.subr.bf16.mxu0 0
  %922 = vmatpush1.bf16.msra.mxu0 0
  %923 = vmatprep.subr.bf16.mxu0 0
  %924 = vmatpush1.bf16.msra.mxu0 0
  %925 = vmatprep.mubr.bf16.mxu0 0
  %926 = vmatmul.mubr.bf16.gmra.mrb[0].mxu0 %v892
  %v927 = vpop.f32.mrb[0].mxu0
  %v928 = vadd.f32 0.0, %v927
  %v929 = vpop.f32.mrb[0].mxu0
  %v930 = vadd.f32 0.0, %v929
  %v931 = vpop.f32.mrb[0].mxu0
  %v932 = vpop.f32.mrb[0].mxu0
  %933 = vdwg.mxu0
  %934 = vmatprep.subr.bf16.mxu0 0
  %935 = vmatpush1.bf16.msra.mxu0 %v233
  %936 = vmatprep.subr.bf16.mxu0 0
  %937 = vmatpush1.bf16.msra.mxu0 %v236
  %938 = vmatprep.subr.bf16.mxu0 0
  %939 = vmatpush1.bf16.msra.mxu0 %v239
  %940 = vmatprep.subr.bf16.mxu0 0
  %941 = vmatpush1.bf16.msra.mxu0 %v242
  %942 = vmatprep.subr.bf16.mxu0 0
  %943 = vmatpush1.bf16.msra.mxu0 %v245
  %944 = vmatprep.subr.bf16.mxu0 0
  %945 = vmatpush1.bf16.msra.mxu0 %v248
  %946 = vmatprep.subr.bf16.mxu0 0
  %947 = vmatpush1.bf16.msra.mxu0 %v251
  %948 = vmatprep.subr.bf16.mxu0 0
  %949 = vmatpush1.bf16.msra.mxu0 %v254
  %950 = vmatprep.subr.bf16.mxu0 0
  %951 = vmatpush1.bf16.msra.mxu0 0
  %952 = vmatprep.subr.bf16.mxu0 0
  %953 = vmatpush1.bf16.msra.mxu0 0
  %954 = vmatprep.subr.bf16.mxu0 0
  %955 = vmatpush1.bf16.msra.mxu0 0
  %956 = vmatprep.subr.bf16.mxu0 0
  %957 = vmatpush1.bf16.msra.mxu0 0
  %958 = vmatprep.subr.bf16.mxu0 0
  %959 = vmatpush1.bf16.msra.mxu0 0
  %960 = vmatprep.subr.bf16.mxu0 0
  %961 = vmatpush1.bf16.msra.mxu0 0
  %962 = vmatprep.subr.bf16.mxu0 0
  %963 = vmatpush1.bf16.msra.mxu0 0
  %964 = vmatprep.subr.bf16.mxu0 0
  %965 = vmatpush1.bf16.msra.mxu0 0
  %966 = vmatprep.mubr.bf16.mxu0 0
  %967 = vmatmul.mubr.bf16.gmra.mrb[0].mxu0 %v892
  %v968 = vpop.f32.mrb[0].mxu0
  %v969 = vadd.f32 0.0, %v968
  %v970 = vpop.f32.mrb[0].mxu0
  %v971 = vpop.f32.mrb[0].mxu0
  %v972 = vpop.f32.mrb[0].mxu0
  %973 = vdwg.mxu0
  %v974 = vadd.f32 %v889, %v928
  %v975 = vxor.u32 %v974, 2147483648
  %v976 = vmul.f32 %v975, 1.442695
  %v977 = vpow.pop %v976
  %v978 = vadd.f32 %v977, 1.0
  %v979 = vrcp.pop %v978
  %v980 = vmul.f32 1.0, %v979
  %v981 = vadd.f32 %v890, %v930
  %v982 = vxor.u32 %v981, 2147483648
  %v983 = vmul.f32 %v982, 1.442695
  %v984 = vpow.pop %v983
  %v985 = vadd.f32 %v984, 1.0
  %v986 = vrcp.pop %v985
  %v987 = vmul.f32 1.0, %v986
  %v988 = vadd.f32 %v969, %v378
  %v989 = vmul.f32 %v980, %v988
  %v990 = vadd.f32 %v891, %v989
  %v991 = vtanh.pop %v990
  %v992 = vsub.f32 %v886, %v991
  %v993 = vmul.f32 %v987, %v992
  %v994 = vadd.f32 %v991, %v993
  %s995 = scalar_lea.vmem %s57, 120
  %v996 = vld [vmem:[%s995] sm:$0xff]
  %v997 = vld [vmem:[%s995 + $0x8] sm:$0xff]
  %v998 = vld [vmem:[%s995 + $0x10] sm:$0xff]
  %v999 = vpack.c.bf16 %v887, %v887
  %1000 = vmatprep.subr.bf16.mxu0 %v473
  %1001 = vmatpush1.bf16.msra.mxu0 %v472
  %1002 = vmatprep.subr.bf16.mxu0 %v476
  %1003 = vmatpush1.bf16.msra.mxu0 %v475
  %1004 = vmatprep.subr.bf16.mxu0 %v479
  %1005 = vmatpush1.bf16.msra.mxu0 %v478
  %1006 = vmatprep.subr.bf16.mxu0 %v482
  %1007 = vmatpush1.bf16.msra.mxu0 %v481
  %1008 = vmatprep.subr.bf16.mxu0 %v485
  %1009 = vmatpush1.bf16.msra.mxu0 %v484
  %1010 = vmatprep.subr.bf16.mxu0 %v488
  %1011 = vmatpush1.bf16.msra.mxu0 %v487
  %1012 = vmatprep.subr.bf16.mxu0 %v491
  %1013 = vmatpush1.bf16.msra.mxu0 %v490
  %1014 = vmatprep.subr.bf16.mxu0 %v494
  %1015 = vmatpush1.bf16.msra.mxu0 %v493
  %1016 = vmatprep.subr.bf16.mxu0 0
  %1017 = vmatpush1.bf16.msra.mxu0 0
  %1018 = vmatprep.subr.bf16.mxu0 0
  %1019 = vmatpush1.bf16.msra.mxu0 0
  %1020 = vmatprep.subr.bf16.mxu0 0
  %1021 = vmatpush1.bf16.msra.mxu0 0
  %1022 = vmatprep.subr.bf16.mxu0 0
  %1023 = vmatpush1.bf16.msra.mxu0 0
  %1024 = vmatprep.subr.bf16.mxu0 0
  %1025 = vmatpush1.bf16.msra.mxu0 0
  %1026 = vmatprep.subr.bf16.mxu0 0
  %1027 = vmatpush1.bf16.msra.mxu0 0
  %1028 = vmatprep.subr.bf16.mxu0 0
  %1029 = vmatpush1.bf16.msra.mxu0 0
  %1030 = vmatprep.subr.bf16.mxu0 0
  %1031 = vmatpush1.bf16.msra.mxu0 0
  %1032 = vmatprep.mubr.bf16.mxu0 0
  %1033 = vmatmul.mubr.bf16.gmra.mrb[0].mxu0 %v999
  %v1034 = vpop.f32.mrb[0].mxu0
  %v1035 = vadd.f32 0.0, %v1034
  %v1036 = vpop.f32.mrb[0].mxu0
  %v1037 = vadd.f32 0.0, %v1036
  %v1038 = vpop.f32.mrb[0].mxu0
  %v1039 = vpop.f32.mrb[0].mxu0
  %1040 = vdwg.mxu0
  %1041 = vmatprep.subr.bf16.mxu0 0
  %1042 = vmatpush1.bf16.msra.mxu0 %v474
  %1043 = vmatprep.subr.bf16.mxu0 0
  %1044 = vmatpush1.bf16.msra.mxu0 %v477
  %1045 = vmatprep.subr.bf16.mxu0 0
  %1046 = vmatpush1.bf16.msra.mxu0 %v480
  %1047 = vmatprep.subr.bf16.mxu0 0
  %1048 = vmatpush1.bf16.msra.mxu0 %v483
  %1049 = vmatprep.subr.bf16.mxu0 0
  %1050 = vmatpush1.bf16.msra.mxu0 %v486
  %1051 = vmatprep.subr.bf16.mxu0 0
  %1052 = vmatpush1.bf16.msra.mxu0 %v489
  %1053 = vmatprep.subr.bf16.mxu0 0
  %1054 = vmatpush1.bf16.msra.mxu0 %v492
  %1055 = vmatprep.subr.bf16.mxu0 0
  %1056 = vmatpush1.bf16.msra.mxu0 %v495
  %1057 = vmatprep.subr.bf16.mxu0 0
  %1058 = vmatpush1.bf16.msra.mxu0 0
  %1059 = vmatprep.subr.bf16.mxu0 0
  %1060 = vmatpush1.bf16.msra.mxu0 0
  %1061 = vmatprep.subr.bf16.mxu0 0
  %1062 = vmatpush1.bf16.msra.mxu0 0
  %1063 = vmatprep.subr.bf16.mxu0 0
  %1064 = vmatpush1.bf16.msra.mxu0 0
  %1065 = vmatprep.subr.bf16.mxu0 0
  %1066 = vmatpush1.bf16.msra.mxu0 0
  %1067 = vmatprep.subr.bf16.mxu0 0
  %1068 = vmatpush1.bf16.msra.mxu0 0
  %1069 = vmatprep.subr.bf16.mxu0 0
  %1070 = vmatpush1.bf16.msra.mxu0 0
  %1071 = vmatprep.subr.bf16.mxu0 0
  %1072 = vmatpush1.bf16.msra.mxu0 0
  %1073 = vmatprep.mubr.bf16.mxu0 0
  %1074 = vmatmul.mubr.bf16.gmra.mrb[0].mxu0 %v999
  %v1075 = vpop.f32.mrb[0].mxu0
  %v1076 = vadd.f32 0.0, %v1075
  %v1077 = vpop.f32.mrb[0].mxu0
  %v1078 = vpop.f32.mrb[0].mxu0
  %v1079 = vpop.f32.mrb[0].mxu0
  %1080 = vdwg.mxu0
  %v1081 = vadd.f32 %v996, %v1035
  %v1082 = vxor.u32 %v1081, 2147483648
  %v1083 = vmul.f32 %v1082, 1.442695
  %v1084 = vpow.pop %v1083
  %v1085 = vadd.f32 %v1084, 1.0
  %v1086 = vrcp.pop %v1085
  %v1087 = vmul.f32 1.0, %v1086
  %v1088 = vadd.f32 %v997, %v1037
  %v1089 = vxor.u32 %v1088, 2147483648
  %v1090 = vmul.f32 %v1089, 1.442695
  %v1091 = vpow.pop %v1090
  %v1092 = vadd.f32 %v1091, 1.0
  %v1093 = vrcp.pop %v1092
  %v1094 = vmul.f32 1.0, %v1093
  %v1095 = vadd.f32 %v1076, %v619
  %v1096 = vmul.f32 %v1087, %v1095
  %v1097 = vadd.f32 %v998, %v1096
  %v1098 = vtanh.pop %v1097
  %v1099 = vsub.f32 %v887, %v1098
  %v1100 = vmul.f32 %v1094, %v1099
  %v1101 = vadd.f32 %v1098, %v1100
  %s1102 = sadd.s32 %s142, 2
  %v1103 = vstv %s1102
  %vm1104 = vcmp.lt.s32.totalorder %v1103, %v75
  %s1105 = sadd.s32 %s144, 5
  %v1106 = vstv %s1105
  %vm1107 = vcmp.lt.s32.totalorder %v1106, %v75
  %v1108 = vsel %vm1104, 1, 0
  %1109 = vset.pattern.permute.xlu0 0
  %1110 = vperm.xlu0 %1109, %v1108
  %v1111 = vpop.permute.xlu0 %1110
  %vm1112 = vcmp.eq.s32.totalorder %v1111, 1
  %v1113 = vsel %vm1112, %v994, 0.0
  %s1114 = scalar_lea.vmem %s7, 16
  %1115 = vst [vmem:[%s1114] sm:$0xff] %v1113
  %v1116 = vsel %vm1107, 1, 0
  %1117 = vset.pattern.permute.xlu0 0
  %1118 = vperm.xlu0 %1117, %v1116
  %v1119 = vpop.permute.xlu0 %1118
  %vm1120 = vcmp.eq.s32.totalorder %v1119, 1
  %v1121 = vsel %vm1120, %v1101, 0.0
  %s1122 = scalar_lea.vmem %s65, 40
  %1123 = vst [vmem:[%s1122] sm:$0xff] %v1121
  %v1124 = vsel %vm1112, %v994, %v886
  %v1125 = vsel %vm1120, %v1101, %v887
  %s1126 = scalar_lea.vmem %s1, 72
  %v1127 = vld [vmem:[%s1126] sm:$0xff]
  %v1128 = vld [vmem:[%s1126 + $0x8] sm:$0xff]
  %v1129 = vld [vmem:[%s1126 + $0x10] sm:$0xff]
  %v1130 = vpack.c.bf16 %v1124, %v1124
  %1131 = vmatprep.subr.bf16.mxu0 %v232
  %1132 = vmatpush1.bf16.msra.mxu0 %v231
  %1133 = vmatprep.subr.bf16.mxu0 %v235
  %1134 = vmatpush1.bf16.msra.mxu0 %v234
  %1135 = vmatprep.subr.bf16.mxu0 %v238
  %1136 = vmatpush1.bf16.msra.mxu0 %v237
  %1137 = vmatprep.subr.bf16.mxu0 %v241
  %1138 = vmatpush1.bf16.msra.mxu0 %v240
  %1139 = vmatprep.subr.bf16.mxu0 %v244
  %1140 = vmatpush1.bf16.msra.mxu0 %v243
  %1141 = vmatprep.subr.bf16.mxu0 %v247
  %1142 = vmatpush1.bf16.msra.mxu0 %v246
  %1143 = vmatprep.subr.bf16.mxu0 %v250
  %1144 = vmatpush1.bf16.msra.mxu0 %v249
  %1145 = vmatprep.subr.bf16.mxu0 %v253
  %1146 = vmatpush1.bf16.msra.mxu0 %v252
  %1147 = vmatprep.subr.bf16.mxu0 0
  %1148 = vmatpush1.bf16.msra.mxu0 0
  %1149 = vmatprep.subr.bf16.mxu0 0
  %1150 = vmatpush1.bf16.msra.mxu0 0
  %1151 = vmatprep.subr.bf16.mxu0 0
  %1152 = vmatpush1.bf16.msra.mxu0 0
  %1153 = vmatprep.subr.bf16.mxu0 0
  %1154 = vmatpush1.bf16.msra.mxu0 0
  %1155 = vmatprep.subr.bf16.mxu0 0
  %1156 = vmatpush1.bf16.msra.mxu0 0
  %1157 = vmatprep.subr.bf16.mxu0 0
  %1158 = vmatpush1.bf16.msra.mxu0 0
  %1159 = vmatprep.subr.bf16.mxu0 0
  %1160 = vmatpush1.bf16.msra.mxu0 0
  %1161 = vmatprep.subr.bf16.mxu0 0
  %1162 = vmatpush1.bf16.msra.mxu0 0
  %1163 = vmatprep.mubr.bf16.mxu0 0
  %1164 = vmatmul.mubr.bf16.gmra.mrb[0].mxu0 %v1130
  %v1165 = vpop.f32.mrb[0].mxu0
  %v1166 = vadd.f32 0.0, %v1165
  %v1167 = vpop.f32.mrb[0].mxu0
  %v1168 = vadd.f32 0.0, %v1167
  %v1169 = vpop.f32.mrb[0].mxu0
  %v1170 = vpop.f32.mrb[0].mxu0
  %1171 = vdwg.mxu0
  %1172 = vmatprep.subr.bf16.mxu0 0
  %1173 = vmatpush1.bf16.msra.mxu0 %v233
  %1174 = vmatprep.subr.bf16.mxu0 0
  %1175 = vmatpush1.bf16.msra.mxu0 %v236
  %1176 = vmatprep.subr.bf16.mxu0 0
  %1177 = vmatpush1.bf16.msra.mxu0 %v239
  %1178 = vmatprep.subr.bf16.mxu0 0
  %1179 = vmatpush1.bf16.msra.mxu0 %v242
  %1180 = vmatprep.subr.bf16.mxu0 0
  %1181 = vmatpush1.bf16.msra.mxu0 %v245
  %1182 = vmatprep.subr.bf16.mxu0 0
  %1183 = vmatpush1.bf16.msra.mxu0 %v248
  %1184 = vmatprep.subr.bf16.mxu0 0
  %1185 = vmatpush1.bf16.msra.mxu0 %v251
  %1186 = vmatprep.subr.bf16.mxu0 0
  %1187 = vmatpush1.bf16.msra.mxu0 %v254
  %1188 = vmatprep.subr.bf16.mxu0 0
  %1189 = vmatpush1.bf16.msra.mxu0 0
  %1190 = vmatprep.subr.bf16.mxu0 0
  %1191 = vmatpush1.bf16.msra.mxu0 0
  %1192 = vmatprep.subr.bf16.mxu0 0
  %1193 = vmatpush1.bf16.msra.mxu0 0
  %1194 = vmatprep.subr.bf16.mxu0 0
  %1195 = vmatpush1.bf16.msra.mxu0 0
  %1196 = vmatprep.subr.bf16.mxu0 0
  %1197 = vmatpush1.bf16.msra.mxu0 0
  %1198 = vmatprep.subr.bf16.mxu0 0
  %1199 = vmatpush1.bf16.msra.mxu0 0
  %1200 = vmatprep.subr.bf16.mxu0 0
  %1201 = vmatpush1.bf16.msra.mxu0 0
  %1202 = vmatprep.subr.bf16.mxu0 0
  %1203 = vmatpush1.bf16.msra.mxu0 0
  %1204 = vmatprep.mubr.bf16.mxu0 0
  %1205 = vmatmul.mubr.bf16.gmra.mrb[0].mxu0 %v1130
  %v1206 = vpop.f32.mrb[0].mxu0
  %v1207 = vadd.f32 0.0, %v1206
  %v1208 = vpop.f32.mrb[0].mxu0
  %v1209 = vpop.f32.mrb[0].mxu0
  %v1210 = vpop.f32.mrb[0].mxu0
  %1211 = vdwg.mxu0
  %v1212 = vadd.f32 %v1127, %v1166
  %v1213 = vxor.u32 %v1212, 2147483648
  %v1214 = vmul.f32 %v1213, 1.442695
  %v1215 = vpow.pop %v1214
  %v1216 = vadd.f32 %v1215, 1.0
  %v1217 = vrcp.pop %v1216
  %v1218 = vmul.f32 1.0, %v1217
  %v1219 = vadd.f32 %v1128, %v1168
  %v1220 = vxor.u32 %v1219, 2147483648
  %v1221 = vmul.f32 %v1220, 1.442695
  %v1222 = vpow.pop %v1221
  %v1223 = vadd.f32 %v1222, 1.0
  %v1224 = vrcp.pop %v1223
  %v1225 = vmul.f32 1.0, %v1224
  %v1226 = vadd.f32 %v1207, %v378
  %v1227 = vmul.f32 %v1218, %v1226
  %v1228 = vadd.f32 %v1129, %v1227
  %v1229 = vtanh.pop %v1228
  %v1230 = vsub.f32 %v1124, %v1229
  %v1231 = vmul.f32 %v1225, %v1230
  %v1232 = vadd.f32 %v1229, %v1231
  %s1233 = scalar_lea.vmem %s57, 96
  %v1234 = vld [vmem:[%s1233] sm:$0xff]
  %v1235 = vld [vmem:[%s1233 + $0x8] sm:$0xff]
  %v1236 = vld [vmem:[%s1233 + $0x10] sm:$0xff]
  %v1237 = vpack.c.bf16 %v1125, %v1125
  %1238 = vmatprep.subr.bf16.mxu0 %v473
  %1239 = vmatpush1.bf16.msra.mxu0 %v472
  %1240 = vmatprep.subr.bf16.mxu0 %v476
  %1241 = vmatpush1.bf16.msra.mxu0 %v475
  %1242 = vmatprep.subr.bf16.mxu0 %v479
  %1243 = vmatpush1.bf16.msra.mxu0 %v478
  %1244 = vmatprep.subr.bf16.mxu0 %v482
  %1245 = vmatpush1.bf16.msra.mxu0 %v481
  %1246 = vmatprep.subr.bf16.mxu0 %v485
  %1247 = vmatpush1.bf16.msra.mxu0 %v484
  %1248 = vmatprep.subr.bf16.mxu0 %v488
  %1249 = vmatpush1.bf16.msra.mxu0 %v487
  %1250 = vmatprep.subr.bf16.mxu0 %v491
  %1251 = vmatpush1.bf16.msra.mxu0 %v490
  %1252 = vmatprep.subr.bf16.mxu0 %v494
  %1253 = vmatpush1.bf16.msra.mxu0 %v493
  %1254 = vmatprep.subr.bf16.mxu0 0
  %1255 = vmatpush1.bf16.msra.mxu0 0
  %1256 = vmatprep.subr.bf16.mxu0 0
  %1257 = vmatpush1.bf16.msra.mxu0 0
  %1258 = vmatprep.subr.bf16.mxu0 0
  %1259 = vmatpush1.bf16.msra.mxu0 0
  %1260 = vmatprep.subr.bf16.mxu0 0
  %1261 = vmatpush1.bf16.msra.mxu0 0
  %1262 = vmatprep.subr.bf16.mxu0 0
  %1263 = vmatpush1.bf16.msra.mxu0 0
  %1264 = vmatprep.subr.bf16.mxu0 0
  %1265 = vmatpush1.bf16.msra.mxu0 0
  %1266 = vmatprep.subr.bf16.mxu0 0
  %1267 = vmatpush1.bf16.msra.mxu0 0
  %1268 = vmatprep.subr.bf16.mxu0 0
  %1269 = vmatpush1.bf16.msra.mxu0 0
  %1270 = vmatprep.mubr.bf16.mxu0 0
  %1271 = vmatmul.mubr.bf16.gmra.mrb[0].mxu0 %v1237
  %v1272 = vpop.f32.mrb[0].mxu0
  %v1273 = vadd.f32 0.0, %v1272
  %v1274 = vpop.f32.mrb[0].mxu0
  %v1275 = vadd.f32 0.0, %v1274
  %v1276 = vpop.f32.mrb[0].mxu0
  %v1277 = vpop.f32.mrb[0].mxu0
  %1278 = vdwg.mxu0
  %1279 = vmatprep.subr.bf16.mxu0 0
  %1280 = vmatpush1.bf16.msra.mxu0 %v474
  %1281 = vmatprep.subr.bf16.mxu0 0
  %1282 = vmatpush1.bf16.msra.mxu0 %v477
  %1283 = vmatprep.subr.bf16.mxu0 0
  %1284 = vmatpush1.bf16.msra.mxu0 %v480
  %1285 = vmatprep.subr.bf16.mxu0 0
  %1286 = vmatpush1.bf16.msra.mxu0 %v483
  %1287 = vmatprep.subr.bf16.mxu0 0
  %1288 = vmatpush1.bf16.msra.mxu0 %v486
  %1289 = vmatprep.subr.bf16.mxu0 0
  %1290 = vmatpush1.bf16.msra.mxu0 %v489
  %1291 = vmatprep.subr.bf16.mxu0 0
  %1292 = vmatpush1.bf16.msra.mxu0 %v492
  %1293 = vmatprep.subr.bf16.mxu0 0
  %1294 = vmatpush1.bf16.msra.mxu0 %v495
  %1295 = vmatprep.subr.bf16.mxu0 0
  %1296 = vmatpush1.bf16.msra.mxu0 0
  %1297 = vmatprep.subr.bf16.mxu0 0
  %1298 = vmatpush1.bf16.msra.mxu0 0
  %1299 = vmatprep.subr.bf16.mxu0 0
  %1300 = vmatpush1.bf16.msra.mxu0 0
  %1301 = vmatprep.subr.bf16.mxu0 0
  %1302 = vmatpush1.bf16.msra.mxu0 0
  %1303 = vmatprep.subr.bf16.mxu0 0
  %1304 = vmatpush1.bf16.msra.mxu0 0
  %1305 = vmatprep.subr.bf16.mxu0 0
  %1306 = vmatpush1.bf16.msra.mxu0 0
  %1307 = vmatprep.subr.bf16.mxu0 0
  %1308 = vmatpush1.bf16.msra.mxu0 0
  %1309 = vmatprep.subr.bf16.mxu0 0
  %1310 = vmatpush1.bf16.msra.mxu0 0
  %1311 = vmatprep.mubr.bf16.mxu0 0
  %1312 = vmatmul.mubr.bf16.gmra.mrb[0].mxu0 %v1237
  %v1313 = vpop.f32.mrb[0].mxu0
  %v1314 = vadd.f32 0.0, %v1313
  %v1315 = vpop.f32.mrb[0].mxu0
  %v1316 = vpop.f32.mrb[0].mxu0
  %v1317 = vpop.f32.mrb[0].mxu0
  %1318 = vdwg.mxu0
  %v1319 = vadd.f32 %v1234, %v1273
  %v1320 = vxor.u32 %v1319, 2147483648
  %v1321 = vmul.f32 %v1320, 1.442695
  %v1322 = vpow.pop %v1321
  %v1323 = vadd.f32 %v1322, 1.0
  %v1324 = vrcp.pop %v1323
  %v1325 = vmul.f32 1.0, %v1324
  %v1326 = vadd.f32 %v1235, %v1275
  %v1327 = vxor.u32 %v1326, 2147483648
  %v1328 = vmul.f32 %v1327, 1.442695
  %v1329 = vpow.pop %v1328
  %v1330 = vadd.f32 %v1329, 1.0
  %v1331 = vrcp.pop %v1330
  %v1332 = vmul.f32 1.0, %v1331
  %v1333 = vadd.f32 %v1314, %v619
  %v1334 = vmul.f32 %v1325, %v1333
  %v1335 = vadd.f32 %v1236, %v1334
  %v1336 = vtanh.pop %v1335
  %v1337 = vsub.f32 %v1125, %v1336
  %v1338 = vmul.f32 %v1332, %v1337
  %v1339 = vadd.f32 %v1336, %v1338
  %s1340 = sadd.s32 %s142, 3
  %v1341 = vstv %s1340
  %vm1342 = vcmp.lt.s32.totalorder %v1341, %v75
  %s1343 = sadd.s32 %s144, 4
  %v1344 = vstv %s1343
  %vm1345 = vcmp.lt.s32.totalorder %v1344, %v75
  %v1346 = vsel %vm1342, 1, 0
  %1347 = vset.pattern.permute.xlu0 0
  %1348 = vperm.xlu0 %1347, %v1346
  %v1349 = vpop.permute.xlu0 %1348
  %vm1350 = vcmp.eq.s32.totalorder %v1349, 1
  %v1351 = vsel %vm1350, %v1232, 0.0
  %s1352 = scalar_lea.vmem %s7, 24
  %1353 = vst [vmem:[%s1352] sm:$0xff] %v1351
  %v1354 = vsel %vm1345, 1, 0
  %1355 = vset.pattern.permute.xlu0 0
  %1356 = vperm.xlu0 %1355, %v1354
  %v1357 = vpop.permute.xlu0 %1356
  %vm1358 = vcmp.eq.s32.totalorder %v1357, 1
  %v1359 = vsel %vm1358, %v1339, 0.0
  %s1360 = scalar_lea.vmem %s65, 32
  %1361 = vst [vmem:[%s1360] sm:$0xff] %v1359
  %v1362 = vsel %vm1350, %v1232, %v1124
  %v1363 = vsel %vm1358, %v1339, %v1125
  %s1364 = scalar_lea.vmem %s1, 96
  %v1365 = vld [vmem:[%s1364] sm:$0xff]
  %v1366 = vld [vmem:[%s1364 + $0x8] sm:$0xff]
  %v1367 = vld [vmem:[%s1364 + $0x10] sm:$0xff]
  %v1368 = vpack.c.bf16 %v1362, %v1362
  %1369 = vmatprep.subr.bf16.mxu0 %v232
  %1370 = vmatpush1.bf16.msra.mxu0 %v231
  %1371 = vmatprep.subr.bf16.mxu0 %v235
  %1372 = vmatpush1.bf16.msra.mxu0 %v234
  %1373 = vmatprep.subr.bf16.mxu0 %v238
  %1374 = vmatpush1.bf16.msra.mxu0 %v237
  %1375 = vmatprep.subr.bf16.mxu0 %v241
  %1376 = vmatpush1.bf16.msra.mxu0 %v240
  %1377 = vmatprep.subr.bf16.mxu0 %v244
  %1378 = vmatpush1.bf16.msra.mxu0 %v243
  %1379 = vmatprep.subr.bf16.mxu0 %v247
  %1380 = vmatpush1.bf16.msra.mxu0 %v246
  %1381 = vmatprep.subr.bf16.mxu0 %v250
  %1382 = vmatpush1.bf16.msra.mxu0 %v249
  %1383 = vmatprep.subr.bf16.mxu0 %v253
  %1384 = vmatpush1.bf16.msra.mxu0 %v252
  %1385 = vmatprep.subr.bf16.mxu0 0
  %1386 = vmatpush1.bf16.msra.mxu0 0
  %1387 = vmatprep.subr.bf16.mxu0 0
  %1388 = vmatpush1.bf16.msra.mxu0 0
  %1389 = vmatprep.subr.bf16.mxu0 0
  %1390 = vmatpush1.bf16.msra.mxu0 0
  %1391 = vmatprep.subr.bf16.mxu0 0
  %1392 = vmatpush1.bf16.msra.mxu0 0
  %1393 = vmatprep.subr.bf16.mxu0 0
  %1394 = vmatpush1.bf16.msra.mxu0 0
  %1395 = vmatprep.subr.bf16.mxu0 0
  %1396 = vmatpush1.bf16.msra.mxu0 0
  %1397 = vmatprep.subr.bf16.mxu0 0
  %1398 = vmatpush1.bf16.msra.mxu0 0
  %1399 = vmatprep.subr.bf16.mxu0 0
  %1400 = vmatpush1.bf16.msra.mxu0 0
  %1401 = vmatprep.mubr.bf16.mxu0 0
  %1402 = vmatmul.mubr.bf16.gmra.mrb[0].mxu0 %v1368
  %v1403 = vpop.f32.mrb[0].mxu0
  %v1404 = vadd.f32 0.0, %v1403
  %v1405 = vpop.f32.mrb[0].mxu0
  %v1406 = vadd.f32 0.0, %v1405
  %v1407 = vpop.f32.mrb[0].mxu0
  %v1408 = vpop.f32.mrb[0].mxu0
  %1409 = vdwg.mxu0
  %1410 = vmatprep.subr.bf16.mxu0 0
  %1411 = vmatpush1.bf16.msra.mxu0 %v233
  %1412 = vmatprep.subr.bf16.mxu0 0
  %1413 = vmatpush1.bf16.msra.mxu0 %v236
  %1414 = vmatprep.subr.bf16.mxu0 0
  %1415 = vmatpush1.bf16.msra.mxu0 %v239
  %1416 = vmatprep.subr.bf16.mxu0 0
  %1417 = vmatpush1.bf16.msra.mxu0 %v242
  %1418 = vmatprep.subr.bf16.mxu0 0
  %1419 = vmatpush1.bf16.msra.mxu0 %v245
  %1420 = vmatprep.subr.bf16.mxu0 0
  %1421 = vmatpush1.bf16.msra.mxu0 %v248
  %1422 = vmatprep.subr.bf16.mxu0 0
  %1423 = vmatpush1.bf16.msra.mxu0 %v251
  %1424 = vmatprep.subr.bf16.mxu0 0
  %1425 = vmatpush1.bf16.msra.mxu0 %v254
  %1426 = vmatprep.subr.bf16.mxu0 0
  %1427 = vmatpush1.bf16.msra.mxu0 0
  %1428 = vmatprep.subr.bf16.mxu0 0
  %1429 = vmatpush1.bf16.msra.mxu0 0
  %1430 = vmatprep.subr.bf16.mxu0 0
  %1431 = vmatpush1.bf16.msra.mxu0 0
  %1432 = vmatprep.subr.bf16.mxu0 0
  %1433 = vmatpush1.bf16.msra.mxu0 0
  %1434 = vmatprep.subr.bf16.mxu0 0
  %1435 = vmatpush1.bf16.msra.mxu0 0
  %1436 = vmatprep.subr.bf16.mxu0 0
  %1437 = vmatpush1.bf16.msra.mxu0 0
  %1438 = vmatprep.subr.bf16.mxu0 0
  %1439 = vmatpush1.bf16.msra.mxu0 0
  %1440 = vmatprep.subr.bf16.mxu0 0
  %1441 = vmatpush1.bf16.msra.mxu0 0
  %1442 = vmatprep.mubr.bf16.mxu0 0
  %1443 = vmatmul.mubr.bf16.gmra.mrb[0].mxu0 %v1368
  %v1444 = vpop.f32.mrb[0].mxu0
  %v1445 = vadd.f32 0.0, %v1444
  %v1446 = vpop.f32.mrb[0].mxu0
  %v1447 = vpop.f32.mrb[0].mxu0
  %v1448 = vpop.f32.mrb[0].mxu0
  %1449 = vdwg.mxu0
  %v1450 = vadd.f32 %v1365, %v1404
  %v1451 = vxor.u32 %v1450, 2147483648
  %v1452 = vmul.f32 %v1451, 1.442695
  %v1453 = vpow.pop %v1452
  %v1454 = vadd.f32 %v1453, 1.0
  %v1455 = vrcp.pop %v1454
  %v1456 = vmul.f32 1.0, %v1455
  %v1457 = vadd.f32 %v1366, %v1406
  %v1458 = vxor.u32 %v1457, 2147483648
  %v1459 = vmul.f32 %v1458, 1.442695
  %v1460 = vpow.pop %v1459
  %v1461 = vadd.f32 %v1460, 1.0
  %v1462 = vrcp.pop %v1461
  %v1463 = vmul.f32 1.0, %v1462
  %v1464 = vadd.f32 %v1445, %v378
  %v1465 = vmul.f32 %v1456, %v1464
  %v1466 = vadd.f32 %v1367, %v1465
  %v1467 = vtanh.pop %v1466
  %v1468 = vsub.f32 %v1362, %v1467
  %v1469 = vmul.f32 %v1463, %v1468
  %v1470 = vadd.f32 %v1467, %v1469
  %s1471 = scalar_lea.vmem %s57, 72
  %v1472 = vld [vmem:[%s1471] sm:$0xff]
  %v1473 = vld [vmem:[%s1471 + $0x8] sm:$0xff]
  %v1474 = vld [vmem:[%s1471 + $0x10] sm:$0xff]
  %v1475 = vpack.c.bf16 %v1363, %v1363
  %1476 = vmatprep.subr.bf16.mxu0 %v473
  %1477 = vmatpush1.bf16.msra.mxu0 %v472
  %1478 = vmatprep.subr.bf16.mxu0 %v476
  %1479 = vmatpush1.bf16.msra.mxu0 %v475
  %1480 = vmatprep.subr.bf16.mxu0 %v479
  %1481 = vmatpush1.bf16.msra.mxu0 %v478
  %1482 = vmatprep.subr.bf16.mxu0 %v482
  %1483 = vmatpush1.bf16.msra.mxu0 %v481
  %1484 = vmatprep.subr.bf16.mxu0 %v485
  %1485 = vmatpush1.bf16.msra.mxu0 %v484
  %1486 = vmatprep.subr.bf16.mxu0 %v488
  %1487 = vmatpush1.bf16.msra.mxu0 %v487
  %1488 = vmatprep.subr.bf16.mxu0 %v491
  %1489 = vmatpush1.bf16.msra.mxu0 %v490
  %1490 = vmatprep.subr.bf16.mxu0 %v494
  %1491 = vmatpush1.bf16.msra.mxu0 %v493
  %1492 = vmatprep.subr.bf16.mxu0 0
  %1493 = vmatpush1.bf16.msra.mxu0 0
  %1494 = vmatprep.subr.bf16.mxu0 0
  %1495 = vmatpush1.bf16.msra.mxu0 0
  %1496 = vmatprep.subr.bf16.mxu0 0
  %1497 = vmatpush1.bf16.msra.mxu0 0
  %1498 = vmatprep.subr.bf16.mxu0 0
  %1499 = vmatpush1.bf16.msra.mxu0 0
  %1500 = vmatprep.subr.bf16.mxu0 0
  %1501 = vmatpush1.bf16.msra.mxu0 0
  %1502 = vmatprep.subr.bf16.mxu0 0
  %1503 = vmatpush1.bf16.msra.mxu0 0
  %1504 = vmatprep.subr.bf16.mxu0 0
  %1505 = vmatpush1.bf16.msra.mxu0 0
  %1506 = vmatprep.subr.bf16.mxu0 0
  %1507 = vmatpush1.bf16.msra.mxu0 0
  %1508 = vmatprep.mubr.bf16.mxu0 0
  %1509 = vmatmul.mubr.bf16.gmra.mrb[0].mxu0 %v1475
  %v1510 = vpop.f32.mrb[0].mxu0
  %v1511 = vadd.f32 0.0, %v1510
  %v1512 = vpop.f32.mrb[0].mxu0
  %v1513 = vadd.f32 0.0, %v1512
  %v1514 = vpop.f32.mrb[0].mxu0
  %v1515 = vpop.f32.mrb[0].mxu0
  %1516 = vdwg.mxu0
  %1517 = vmatprep.subr.bf16.mxu0 0
  %1518 = vmatpush1.bf16.msra.mxu0 %v474
  %1519 = vmatprep.subr.bf16.mxu0 0
  %1520 = vmatpush1.bf16.msra.mxu0 %v477
  %1521 = vmatprep.subr.bf16.mxu0 0
  %1522 = vmatpush1.bf16.msra.mxu0 %v480
  %1523 = vmatprep.subr.bf16.mxu0 0
  %1524 = vmatpush1.bf16.msra.mxu0 %v483
  %1525 = vmatprep.subr.bf16.mxu0 0
  %1526 = vmatpush1.bf16.msra.mxu0 %v486
  %1527 = vmatprep.subr.bf16.mxu0 0
  %1528 = vmatpush1.bf16.msra.mxu0 %v489
  %1529 = vmatprep.subr.bf16.mxu0 0
  %1530 = vmatpush1.bf16.msra.mxu0 %v492
  %1531 = vmatprep.subr.bf16.mxu0 0
  %1532 = vmatpush1.bf16.msra.mxu0 %v495
  %1533 = vmatprep.subr.bf16.mxu0 0
  %1534 = vmatpush1.bf16.msra.mxu0 0
  %1535 = vmatprep.subr.bf16.mxu0 0
  %1536 = vmatpush1.bf16.msra.mxu0 0
  %1537 = vmatprep.subr.bf16.mxu0 0
  %1538 = vmatpush1.bf16.msra.mxu0 0
  %1539 = vmatprep.subr.bf16.mxu0 0
  %1540 = vmatpush1.bf16.msra.mxu0 0
  %1541 = vmatprep.subr.bf16.mxu0 0
  %1542 = vmatpush1.bf16.msra.mxu0 0
  %1543 = vmatprep.subr.bf16.mxu0 0
  %1544 = vmatpush1.bf16.msra.mxu0 0
  %1545 = vmatprep.subr.bf16.mxu0 0
  %1546 = vmatpush1.bf16.msra.mxu0 0
  %1547 = vmatprep.subr.bf16.mxu0 0
  %1548 = vmatpush1.bf16.msra.mxu0 0
  %1549 = vmatprep.mubr.bf16.mxu0 0
  %1550 = vmatmul.mubr.bf16.gmra.mrb[0].mxu0 %v1475
  %v1551 = vpop.f32.mrb[0].mxu0
  %v1552 = vadd.f32 0.0, %v1551
  %v1553 = vpop.f32.mrb[0].mxu0
  %v1554 = vpop.f32.mrb[0].mxu0
  %v1555 = vpop.f32.mrb[0].mxu0
  %1556 = vdwg.mxu0
  %v1557 = vadd.f32 %v1472, %v1511
  %v1558 = vxor.u32 %v1557, 2147483648
  %v1559 = vmul.f32 %v1558, 1.442695
  %v1560 = vpow.pop %v1559
  %v1561 = vadd.f32 %v1560, 1.0
  %v1562 = vrcp.pop %v1561
  %v1563 = vmul.f32 1.0, %v1562
  %v1564 = vadd.f32 %v1473, %v1513
  %v1565 = vxor.u32 %v1564, 2147483648
  %v1566 = vmul.f32 %v1565, 1.442695
  %v1567 = vpow.pop %v1566
  %v1568 = vadd.f32 %v1567, 1.0
  %v1569 = vrcp.pop %v1568
  %v1570 = vmul.f32 1.0, %v1569
  %v1571 = vadd.f32 %v1552, %v619
  %v1572 = vmul.f32 %v1563, %v1571
  %v1573 = vadd.f32 %v1474, %v1572
  %v1574 = vtanh.pop %v1573
  %v1575 = vsub.f32 %v1363, %v1574
  %v1576 = vmul.f32 %v1570, %v1575
  %v1577 = vadd.f32 %v1574, %v1576
  %s1578 = sadd.s32 %s142, 4
  %v1579 = vstv %s1578
  %vm1580 = vcmp.lt.s32.totalorder %v1579, %v75
  %s1581 = sadd.s32 %s144, 3
  %v1582 = vstv %s1581
  %vm1583 = vcmp.lt.s32.totalorder %v1582, %v75
  %v1584 = vsel %vm1580, 1, 0
  %1585 = vset.pattern.permute.xlu0 0
  %1586 = vperm.xlu0 %1585, %v1584
  %v1587 = vpop.permute.xlu0 %1586
  %vm1588 = vcmp.eq.s32.totalorder %v1587, 1
  %v1589 = vsel %vm1588, %v1470, 0.0
  %s1590 = scalar_lea.vmem %s7, 32
  %1591 = vst [vmem:[%s1590] sm:$0xff] %v1589
  %v1592 = vsel %vm1583, 1, 0
  %1593 = vset.pattern.permute.xlu0 0
  %1594 = vperm.xlu0 %1593, %v1592
  %v1595 = vpop.permute.xlu0 %1594
  %vm1596 = vcmp.eq.s32.totalorder %v1595, 1
  %v1597 = vsel %vm1596, %v1577, 0.0
  %s1598 = scalar_lea.vmem %s65, 24
  %1599 = vst [vmem:[%s1598] sm:$0xff] %v1597
  %v1600 = vsel %vm1588, %v1470, %v1362
  %v1601 = vsel %vm1596, %v1577, %v1363
  %s1602 = scalar_lea.vmem %s1, 120
  %v1603 = vld [vmem:[%s1602] sm:$0xff]
  %v1604 = vld [vmem:[%s1602 + $0x8] sm:$0xff]
  %v1605 = vld [vmem:[%s1602 + $0x10] sm:$0xff]
  %v1606 = vpack.c.bf16 %v1600, %v1600
  %1607 = vmatprep.subr.bf16.mxu0 %v232
  %1608 = vmatpush1.bf16.msra.mxu0 %v231
  %1609 = vmatprep.subr.bf16.mxu0 %v235
  %1610 = vmatpush1.bf16.msra.mxu0 %v234
  %1611 = vmatprep.subr.bf16.mxu0 %v238
  %1612 = vmatpush1.bf16.msra.mxu0 %v237
  %1613 = vmatprep.subr.bf16.mxu0 %v241
  %1614 = vmatpush1.bf16.msra.mxu0 %v240
  %1615 = vmatprep.subr.bf16.mxu0 %v244
  %1616 = vmatpush1.bf16.msra.mxu0 %v243
  %1617 = vmatprep.subr.bf16.mxu0 %v247
  %1618 = vmatpush1.bf16.msra.mxu0 %v246
  %1619 = vmatprep.subr.bf16.mxu0 %v250
  %1620 = vmatpush1.bf16.msra.mxu0 %v249
  %1621 = vmatprep.subr.bf16.mxu0 %v253
  %1622 = vmatpush1.bf16.msra.mxu0 %v252
  %1623 = vmatprep.subr.bf16.mxu0 0
  %1624 = vmatpush1.bf16.msra.mxu0 0
  %1625 = vmatprep.subr.bf16.mxu0 0
  %1626 = vmatpush1.bf16.msra.mxu0 0
  %1627 = vmatprep.subr.bf16.mxu0 0
  %1628 = vmatpush1.bf16.msra.mxu0 0
  %1629 = vmatprep.subr.bf16.mxu0 0
  %1630 = vmatpush1.bf16.msra.mxu0 0
  %1631 = vmatprep.subr.bf16.mxu0 0
  %1632 = vmatpush1.bf16.msra.mxu0 0
  %1633 = vmatprep.subr.bf16.mxu0 0
  %1634 = vmatpush1.bf16.msra.mxu0 0
  %1635 = vmatprep.subr.bf16.mxu0 0
  %1636 = vmatpush1.bf16.msra.mxu0 0
  %1637 = vmatprep.subr.bf16.mxu0 0
  %1638 = vmatpush1.bf16.msra.mxu0 0
  %1639 = vmatprep.mubr.bf16.mxu0 0
  %1640 = vmatmul.mubr.bf16.gmra.mrb[0].mxu0 %v1606
  %v1641 = vpop.f32.mrb[0].mxu0
  %v1642 = vadd.f32 0.0, %v1641
  %v1643 = vpop.f32.mrb[0].mxu0
  %v1644 = vadd.f32 0.0, %v1643
  %v1645 = vpop.f32.mrb[0].mxu0
  %v1646 = vpop.f32.mrb[0].mxu0
  %1647 = vdwg.mxu0
  %1648 = vmatprep.subr.bf16.mxu0 0
  %1649 = vmatpush1.bf16.msra.mxu0 %v233
  %1650 = vmatprep.subr.bf16.mxu0 0
  %1651 = vmatpush1.bf16.msra.mxu0 %v236
  %1652 = vmatprep.subr.bf16.mxu0 0
  %1653 = vmatpush1.bf16.msra.mxu0 %v239
  %1654 = vmatprep.subr.bf16.mxu0 0
  %1655 = vmatpush1.bf16.msra.mxu0 %v242
  %1656 = vmatprep.subr.bf16.mxu0 0
  %1657 = vmatpush1.bf16.msra.mxu0 %v245
  %1658 = vmatprep.subr.bf16.mxu0 0
  %1659 = vmatpush1.bf16.msra.mxu0 %v248
  %1660 = vmatprep.subr.bf16.mxu0 0
  %1661 = vmatpush1.bf16.msra.mxu0 %v251
  %1662 = vmatprep.subr.bf16.mxu0 0
  %1663 = vmatpush1.bf16.msra.mxu0 %v254
  %1664 = vmatprep.subr.bf16.mxu0 0
  %1665 = vmatpush1.bf16.msra.mxu0 0
  %1666 = vmatprep.subr.bf16.mxu0 0
  %1667 = vmatpush1.bf16.msra.mxu0 0
  %1668 = vmatprep.subr.bf16.mxu0 0
  %1669 = vmatpush1.bf16.msra.mxu0 0
  %1670 = vmatprep.subr.bf16.mxu0 0
  %1671 = vmatpush1.bf16.msra.mxu0 0
  %1672 = vmatprep.subr.bf16.mxu0 0
  %1673 = vmatpush1.bf16.msra.mxu0 0
  %1674 = vmatprep.subr.bf16.mxu0 0
  %1675 = vmatpush1.bf16.msra.mxu0 0
  %1676 = vmatprep.subr.bf16.mxu0 0
  %1677 = vmatpush1.bf16.msra.mxu0 0
  %1678 = vmatprep.subr.bf16.mxu0 0
  %1679 = vmatpush1.bf16.msra.mxu0 0
  %1680 = vmatprep.mubr.bf16.mxu0 0
  %1681 = vmatmul.mubr.bf16.gmra.mrb[0].mxu0 %v1606
  %v1682 = vpop.f32.mrb[0].mxu0
  %v1683 = vadd.f32 0.0, %v1682
  %v1684 = vpop.f32.mrb[0].mxu0
  %v1685 = vpop.f32.mrb[0].mxu0
  %v1686 = vpop.f32.mrb[0].mxu0
  %1687 = vdwg.mxu0
  %v1688 = vadd.f32 %v1603, %v1642
  %v1689 = vxor.u32 %v1688, 2147483648
  %v1690 = vmul.f32 %v1689, 1.442695
  %v1691 = vpow.pop %v1690
  %v1692 = vadd.f32 %v1691, 1.0
  %v1693 = vrcp.pop %v1692
  %v1694 = vmul.f32 1.0, %v1693
  %v1695 = vadd.f32 %v1604, %v1644
  %v1696 = vxor.u32 %v1695, 2147483648
  %v1697 = vmul.f32 %v1696, 1.442695
  %v1698 = vpow.pop %v1697
  %v1699 = vadd.f32 %v1698, 1.0
  %v1700 = vrcp.pop %v1699
  %v1701 = vmul.f32 1.0, %v1700
  %v1702 = vadd.f32 %v1683, %v378
  %v1703 = vmul.f32 %v1694, %v1702
  %v1704 = vadd.f32 %v1605, %v1703
  %v1705 = vtanh.pop %v1704
  %v1706 = vsub.f32 %v1600, %v1705
  %v1707 = vmul.f32 %v1701, %v1706
  %v1708 = vadd.f32 %v1705, %v1707
  %s1709 = scalar_lea.vmem %s57, 48
  %v1710 = vld [vmem:[%s1709] sm:$0xff]
  %v1711 = vld [vmem:[%s1709 + $0x8] sm:$0xff]
  %v1712 = vld [vmem:[%s1709 + $0x10] sm:$0xff]
  %v1713 = vpack.c.bf16 %v1601, %v1601
  %1714 = vmatprep.subr.bf16.mxu0 %v473
  %1715 = vmatpush1.bf16.msra.mxu0 %v472
  %1716 = vmatprep.subr.bf16.mxu0 %v476
  %1717 = vmatpush1.bf16.msra.mxu0 %v475
  %1718 = vmatprep.subr.bf16.mxu0 %v479
  %1719 = vmatpush1.bf16.msra.mxu0 %v478
  %1720 = vmatprep.subr.bf16.mxu0 %v482
  %1721 = vmatpush1.bf16.msra.mxu0 %v481
  %1722 = vmatprep.subr.bf16.mxu0 %v485
  %1723 = vmatpush1.bf16.msra.mxu0 %v484
  %1724 = vmatprep.subr.bf16.mxu0 %v488
  %1725 = vmatpush1.bf16.msra.mxu0 %v487
  %1726 = vmatprep.subr.bf16.mxu0 %v491
  %1727 = vmatpush1.bf16.msra.mxu0 %v490
  %1728 = vmatprep.subr.bf16.mxu0 %v494
  %1729 = vmatpush1.bf16.msra.mxu0 %v493
  %1730 = vmatprep.subr.bf16.mxu0 0
  %1731 = vmatpush1.bf16.msra.mxu0 0
  %1732 = vmatprep.subr.bf16.mxu0 0
  %1733 = vmatpush1.bf16.msra.mxu0 0
  %1734 = vmatprep.subr.bf16.mxu0 0
  %1735 = vmatpush1.bf16.msra.mxu0 0
  %1736 = vmatprep.subr.bf16.mxu0 0
  %1737 = vmatpush1.bf16.msra.mxu0 0
  %1738 = vmatprep.subr.bf16.mxu0 0
  %1739 = vmatpush1.bf16.msra.mxu0 0
  %1740 = vmatprep.subr.bf16.mxu0 0
  %1741 = vmatpush1.bf16.msra.mxu0 0
  %1742 = vmatprep.subr.bf16.mxu0 0
  %1743 = vmatpush1.bf16.msra.mxu0 0
  %1744 = vmatprep.subr.bf16.mxu0 0
  %1745 = vmatpush1.bf16.msra.mxu0 0
  %1746 = vmatprep.mubr.bf16.mxu0 0
  %1747 = vmatmul.mubr.bf16.gmra.mrb[0].mxu0 %v1713
  %v1748 = vpop.f32.mrb[0].mxu0
  %v1749 = vadd.f32 0.0, %v1748
  %v1750 = vpop.f32.mrb[0].mxu0
  %v1751 = vadd.f32 0.0, %v1750
  %v1752 = vpop.f32.mrb[0].mxu0
  %v1753 = vpop.f32.mrb[0].mxu0
  %1754 = vdwg.mxu0
  %1755 = vmatprep.subr.bf16.mxu0 0
  %1756 = vmatpush1.bf16.msra.mxu0 %v474
  %1757 = vmatprep.subr.bf16.mxu0 0
  %1758 = vmatpush1.bf16.msra.mxu0 %v477
  %1759 = vmatprep.subr.bf16.mxu0 0
  %1760 = vmatpush1.bf16.msra.mxu0 %v480
  %1761 = vmatprep.subr.bf16.mxu0 0
  %1762 = vmatpush1.bf16.msra.mxu0 %v483
  %1763 = vmatprep.subr.bf16.mxu0 0
  %1764 = vmatpush1.bf16.msra.mxu0 %v486
  %1765 = vmatprep.subr.bf16.mxu0 0
  %1766 = vmatpush1.bf16.msra.mxu0 %v489
  %1767 = vmatprep.subr.bf16.mxu0 0
  %1768 = vmatpush1.bf16.msra.mxu0 %v492
  %1769 = vmatprep.subr.bf16.mxu0 0
  %1770 = vmatpush1.bf16.msra.mxu0 %v495
  %1771 = vmatprep.subr.bf16.mxu0 0
  %1772 = vmatpush1.bf16.msra.mxu0 0
  %1773 = vmatprep.subr.bf16.mxu0 0
  %1774 = vmatpush1.bf16.msra.mxu0 0
  %1775 = vmatprep.subr.bf16.mxu0 0
  %1776 = vmatpush1.bf16.msra.mxu0 0
  %1777 = vmatprep.subr.bf16.mxu0 0
  %1778 = vmatpush1.bf16.msra.mxu0 0
  %1779 = vmatprep.subr.bf16.mxu0 0
  %1780 = vmatpush1.bf16.msra.mxu0 0
  %1781 = vmatprep.subr.bf16.mxu0 0
  %1782 = vmatpush1.bf16.msra.mxu0 0
  %1783 = vmatprep.subr.bf16.mxu0 0
  %1784 = vmatpush1.bf16.msra.mxu0 0
  %1785 = vmatprep.subr.bf16.mxu0 0
  %1786 = vmatpush1.bf16.msra.mxu0 0
  %1787 = vmatprep.mubr.bf16.mxu0 0
  %1788 = vmatmul.mubr.bf16.gmra.mrb[0].mxu0 %v1713
  %v1789 = vpop.f32.mrb[0].mxu0
  %v1790 = vadd.f32 0.0, %v1789
  %v1791 = vpop.f32.mrb[0].mxu0
  %v1792 = vpop.f32.mrb[0].mxu0
  %v1793 = vpop.f32.mrb[0].mxu0
  %1794 = vdwg.mxu0
  %v1795 = vadd.f32 %v1710, %v1749
  %v1796 = vxor.u32 %v1795, 2147483648
  %v1797 = vmul.f32 %v1796, 1.442695
  %v1798 = vpow.pop %v1797
  %v1799 = vadd.f32 %v1798, 1.0
  %v1800 = vrcp.pop %v1799
  %v1801 = vmul.f32 1.0, %v1800
  %v1802 = vadd.f32 %v1711, %v1751
  %v1803 = vxor.u32 %v1802, 2147483648
  %v1804 = vmul.f32 %v1803, 1.442695
  %v1805 = vpow.pop %v1804
  %v1806 = vadd.f32 %v1805, 1.0
  %v1807 = vrcp.pop %v1806
  %v1808 = vmul.f32 1.0, %v1807
  %v1809 = vadd.f32 %v1790, %v619
  %v1810 = vmul.f32 %v1801, %v1809
  %v1811 = vadd.f32 %v1712, %v1810
  %v1812 = vtanh.pop %v1811
  %v1813 = vsub.f32 %v1601, %v1812
  %v1814 = vmul.f32 %v1808, %v1813
  %v1815 = vadd.f32 %v1812, %v1814
  %s1816 = sadd.s32 %s142, 5
  %v1817 = vstv %s1816
  %vm1818 = vcmp.lt.s32.totalorder %v1817, %v75
  %s1819 = sadd.s32 %s144, 2
  %v1820 = vstv %s1819
  %vm1821 = vcmp.lt.s32.totalorder %v1820, %v75
  %v1822 = vsel %vm1818, 1, 0
  %1823 = vset.pattern.permute.xlu0 0
  %1824 = vperm.xlu0 %1823, %v1822
  %v1825 = vpop.permute.xlu0 %1824
  %vm1826 = vcmp.eq.s32.totalorder %v1825, 1
  %v1827 = vsel %vm1826, %v1708, 0.0
  %s1828 = scalar_lea.vmem %s7, 40
  %1829 = vst [vmem:[%s1828] sm:$0xff] %v1827
  %v1830 = vsel %vm1821, 1, 0
  %1831 = vset.pattern.permute.xlu0 0
  %1832 = vperm.xlu0 %1831, %v1830
  %v1833 = vpop.permute.xlu0 %1832
  %vm1834 = vcmp.eq.s32.totalorder %v1833, 1
  %v1835 = vsel %vm1834, %v1815, 0.0
  %s1836 = scalar_lea.vmem %s65, 16
  %1837 = vst [vmem:[%s1836] sm:$0xff] %v1835
  %v1838 = vsel %vm1826, %v1708, %v1600
  %v1839 = vsel %vm1834, %v1815, %v1601
  %s1840 = scalar_lea.vmem %s1, 144
  %v1841 = vld [vmem:[%s1840] sm:$0xff]
  %v1842 = vld [vmem:[%s1840 + $0x8] sm:$0xff]
  %v1843 = vld [vmem:[%s1840 + $0x10] sm:$0xff]
  %v1844 = vpack.c.bf16 %v1838, %v1838
  %1845 = vmatprep.subr.bf16.mxu0 %v232
  %1846 = vmatpush1.bf16.msra.mxu0 %v231
  %1847 = vmatprep.subr.bf16.mxu0 %v235
  %1848 = vmatpush1.bf16.msra.mxu0 %v234
  %1849 = vmatprep.subr.bf16.mxu0 %v238
  %1850 = vmatpush1.bf16.msra.mxu0 %v237
  %1851 = vmatprep.subr.bf16.mxu0 %v241
  %1852 = vmatpush1.bf16.msra.mxu0 %v240
  %1853 = vmatprep.subr.bf16.mxu0 %v244
  %1854 = vmatpush1.bf16.msra.mxu0 %v243
  %1855 = vmatprep.subr.bf16.mxu0 %v247
  %1856 = vmatpush1.bf16.msra.mxu0 %v246
  %1857 = vmatprep.subr.bf16.mxu0 %v250
  %1858 = vmatpush1.bf16.msra.mxu0 %v249
  %1859 = vmatprep.subr.bf16.mxu0 %v253
  %1860 = vmatpush1.bf16.msra.mxu0 %v252
  %1861 = vmatprep.subr.bf16.mxu0 0
  %1862 = vmatpush1.bf16.msra.mxu0 0
  %1863 = vmatprep.subr.bf16.mxu0 0
  %1864 = vmatpush1.bf16.msra.mxu0 0
  %1865 = vmatprep.subr.bf16.mxu0 0
  %1866 = vmatpush1.bf16.msra.mxu0 0
  %1867 = vmatprep.subr.bf16.mxu0 0
  %1868 = vmatpush1.bf16.msra.mxu0 0
  %1869 = vmatprep.subr.bf16.mxu0 0
  %1870 = vmatpush1.bf16.msra.mxu0 0
  %1871 = vmatprep.subr.bf16.mxu0 0
  %1872 = vmatpush1.bf16.msra.mxu0 0
  %1873 = vmatprep.subr.bf16.mxu0 0
  %1874 = vmatpush1.bf16.msra.mxu0 0
  %1875 = vmatprep.subr.bf16.mxu0 0
  %1876 = vmatpush1.bf16.msra.mxu0 0
  %1877 = vmatprep.mubr.bf16.mxu0 0
  %1878 = vmatmul.mubr.bf16.gmra.mrb[0].mxu0 %v1844
  %v1879 = vpop.f32.mrb[0].mxu0
  %v1880 = vadd.f32 0.0, %v1879
  %v1881 = vpop.f32.mrb[0].mxu0
  %v1882 = vadd.f32 0.0, %v1881
  %v1883 = vpop.f32.mrb[0].mxu0
  %v1884 = vpop.f32.mrb[0].mxu0
  %1885 = vdwg.mxu0
  %1886 = vmatprep.subr.bf16.mxu0 0
  %1887 = vmatpush1.bf16.msra.mxu0 %v233
  %1888 = vmatprep.subr.bf16.mxu0 0
  %1889 = vmatpush1.bf16.msra.mxu0 %v236
  %1890 = vmatprep.subr.bf16.mxu0 0
  %1891 = vmatpush1.bf16.msra.mxu0 %v239
  %1892 = vmatprep.subr.bf16.mxu0 0
  %1893 = vmatpush1.bf16.msra.mxu0 %v242
  %1894 = vmatprep.subr.bf16.mxu0 0
  %1895 = vmatpush1.bf16.msra.mxu0 %v245
  %1896 = vmatprep.subr.bf16.mxu0 0
  %1897 = vmatpush1.bf16.msra.mxu0 %v248
  %1898 = vmatprep.subr.bf16.mxu0 0
  %1899 = vmatpush1.bf16.msra.mxu0 %v251
  %1900 = vmatprep.subr.bf16.mxu0 0
  %1901 = vmatpush1.bf16.msra.mxu0 %v254
  %1902 = vmatprep.subr.bf16.mxu0 0
  %1903 = vmatpush1.bf16.msra.mxu0 0
  %1904 = vmatprep.subr.bf16.mxu0 0
  %1905 = vmatpush1.bf16.msra.mxu0 0
  %1906 = vmatprep.subr.bf16.mxu0 0
  %1907 = vmatpush1.bf16.msra.mxu0 0
  %1908 = vmatprep.subr.bf16.mxu0 0
  %1909 = vmatpush1.bf16.msra.mxu0 0
  %1910 = vmatprep.subr.bf16.mxu0 0
  %1911 = vmatpush1.bf16.msra.mxu0 0
  %1912 = vmatprep.subr.bf16.mxu0 0
  %1913 = vmatpush1.bf16.msra.mxu0 0
  %1914 = vmatprep.subr.bf16.mxu0 0
  %1915 = vmatpush1.bf16.msra.mxu0 0
  %1916 = vmatprep.subr.bf16.mxu0 0
  %1917 = vmatpush1.bf16.msra.mxu0 0
  %1918 = vmatprep.mubr.bf16.mxu0 0
  %1919 = vmatmul.mubr.bf16.gmra.mrb[0].mxu0 %v1844
  %v1920 = vpop.f32.mrb[0].mxu0
  %v1921 = vadd.f32 0.0, %v1920
  %v1922 = vpop.f32.mrb[0].mxu0
  %v1923 = vpop.f32.mrb[0].mxu0
  %v1924 = vpop.f32.mrb[0].mxu0
  %1925 = vdwg.mxu0
  %v1926 = vadd.f32 %v1841, %v1880
  %v1927 = vxor.u32 %v1926, 2147483648
  %v1928 = vmul.f32 %v1927, 1.442695
  %v1929 = vpow.pop %v1928
  %v1930 = vadd.f32 %v1929, 1.0
  %v1931 = vrcp.pop %v1930
  %v1932 = vmul.f32 1.0, %v1931
  %v1933 = vadd.f32 %v1842, %v1882
  %v1934 = vxor.u32 %v1933, 2147483648
  %v1935 = vmul.f32 %v1934, 1.442695
  %v1936 = vpow.pop %v1935
  %v1937 = vadd.f32 %v1936, 1.0
  %v1938 = vrcp.pop %v1937
  %v1939 = vmul.f32 1.0, %v1938
  %v1940 = vadd.f32 %v1921, %v378
  %v1941 = vmul.f32 %v1932, %v1940
  %v1942 = vadd.f32 %v1843, %v1941
  %v1943 = vtanh.pop %v1942
  %v1944 = vsub.f32 %v1838, %v1943
  %v1945 = vmul.f32 %v1939, %v1944
  %v1946 = vadd.f32 %v1943, %v1945
  %s1947 = scalar_lea.vmem %s57, 24
  %v1948 = vld [vmem:[%s1947] sm:$0xff]
  %v1949 = vld [vmem:[%s1947 + $0x8] sm:$0xff]
  %v1950 = vld [vmem:[%s1947 + $0x10] sm:$0xff]
  %v1951 = vpack.c.bf16 %v1839, %v1839
  %1952 = vmatprep.subr.bf16.mxu0 %v473
  %1953 = vmatpush1.bf16.msra.mxu0 %v472
  %1954 = vmatprep.subr.bf16.mxu0 %v476
  %1955 = vmatpush1.bf16.msra.mxu0 %v475
  %1956 = vmatprep.subr.bf16.mxu0 %v479
  %1957 = vmatpush1.bf16.msra.mxu0 %v478
  %1958 = vmatprep.subr.bf16.mxu0 %v482
  %1959 = vmatpush1.bf16.msra.mxu0 %v481
  %1960 = vmatprep.subr.bf16.mxu0 %v485
  %1961 = vmatpush1.bf16.msra.mxu0 %v484
  %1962 = vmatprep.subr.bf16.mxu0 %v488
  %1963 = vmatpush1.bf16.msra.mxu0 %v487
  %1964 = vmatprep.subr.bf16.mxu0 %v491
  %1965 = vmatpush1.bf16.msra.mxu0 %v490
  %1966 = vmatprep.subr.bf16.mxu0 %v494
  %1967 = vmatpush1.bf16.msra.mxu0 %v493
  %1968 = vmatprep.subr.bf16.mxu0 0
  %1969 = vmatpush1.bf16.msra.mxu0 0
  %1970 = vmatprep.subr.bf16.mxu0 0
  %1971 = vmatpush1.bf16.msra.mxu0 0
  %1972 = vmatprep.subr.bf16.mxu0 0
  %1973 = vmatpush1.bf16.msra.mxu0 0
  %1974 = vmatprep.subr.bf16.mxu0 0
  %1975 = vmatpush1.bf16.msra.mxu0 0
  %1976 = vmatprep.subr.bf16.mxu0 0
  %1977 = vmatpush1.bf16.msra.mxu0 0
  %1978 = vmatprep.subr.bf16.mxu0 0
  %1979 = vmatpush1.bf16.msra.mxu0 0
  %1980 = vmatprep.subr.bf16.mxu0 0
  %1981 = vmatpush1.bf16.msra.mxu0 0
  %1982 = vmatprep.subr.bf16.mxu0 0
  %1983 = vmatpush1.bf16.msra.mxu0 0
  %1984 = vmatprep.mubr.bf16.mxu0 0
  %1985 = vmatmul.mubr.bf16.gmra.mrb[0].mxu0 %v1951
  %v1986 = vpop.f32.mrb[0].mxu0
  %v1987 = vadd.f32 0.0, %v1986
  %v1988 = vpop.f32.mrb[0].mxu0
  %v1989 = vadd.f32 0.0, %v1988
  %v1990 = vpop.f32.mrb[0].mxu0
  %v1991 = vpop.f32.mrb[0].mxu0
  %1992 = vdwg.mxu0
  %1993 = vmatprep.subr.bf16.mxu0 0
  %1994 = vmatpush1.bf16.msra.mxu0 %v474
  %1995 = vmatprep.subr.bf16.mxu0 0
  %1996 = vmatpush1.bf16.msra.mxu0 %v477
  %1997 = vmatprep.subr.bf16.mxu0 0
  %1998 = vmatpush1.bf16.msra.mxu0 %v480
  %1999 = vmatprep.subr.bf16.mxu0 0
  %2000 = vmatpush1.bf16.msra.mxu0 %v483
  %2001 = vmatprep.subr.bf16.mxu0 0
  %2002 = vmatpush1.bf16.msra.mxu0 %v486
  %2003 = vmatprep.subr.bf16.mxu0 0
  %2004 = vmatpush1.bf16.msra.mxu0 %v489
  %2005 = vmatprep.subr.bf16.mxu0 0
  %2006 = vmatpush1.bf16.msra.mxu0 %v492
  %2007 = vmatprep.subr.bf16.mxu0 0
  %2008 = vmatpush1.bf16.msra.mxu0 %v495
  %2009 = vmatprep.subr.bf16.mxu0 0
  %2010 = vmatpush1.bf16.msra.mxu0 0
  %2011 = vmatprep.subr.bf16.mxu0 0
  %2012 = vmatpush1.bf16.msra.mxu0 0
  %2013 = vmatprep.subr.bf16.mxu0 0
  %2014 = vmatpush1.bf16.msra.mxu0 0
  %2015 = vmatprep.subr.bf16.mxu0 0
  %2016 = vmatpush1.bf16.msra.mxu0 0
  %2017 = vmatprep.subr.bf16.mxu0 0
  %2018 = vmatpush1.bf16.msra.mxu0 0
  %2019 = vmatprep.subr.bf16.mxu0 0
  %2020 = vmatpush1.bf16.msra.mxu0 0
  %2021 = vmatprep.subr.bf16.mxu0 0
  %2022 = vmatpush1.bf16.msra.mxu0 0
  %2023 = vmatprep.subr.bf16.mxu0 0
  %2024 = vmatpush1.bf16.msra.mxu0 0
  %2025 = vmatprep.mubr.bf16.mxu0 0
  %2026 = vmatmul.mubr.bf16.gmra.mrb[0].mxu0 %v1951
  %v2027 = vpop.f32.mrb[0].mxu0
  %v2028 = vadd.f32 0.0, %v2027
  %v2029 = vpop.f32.mrb[0].mxu0
  %v2030 = vpop.f32.mrb[0].mxu0
  %v2031 = vpop.f32.mrb[0].mxu0
  %2032 = vdwg.mxu0
  %v2033 = vadd.f32 %v1948, %v1987
  %v2034 = vxor.u32 %v2033, 2147483648
  %v2035 = vmul.f32 %v2034, 1.442695
  %v2036 = vpow.pop %v2035
  %v2037 = vadd.f32 %v2036, 1.0
  %v2038 = vrcp.pop %v2037
  %v2039 = vmul.f32 1.0, %v2038
  %v2040 = vadd.f32 %v1949, %v1989
  %v2041 = vxor.u32 %v2040, 2147483648
  %v2042 = vmul.f32 %v2041, 1.442695
  %v2043 = vpow.pop %v2042
  %v2044 = vadd.f32 %v2043, 1.0
  %v2045 = vrcp.pop %v2044
  %v2046 = vmul.f32 1.0, %v2045
  %v2047 = vadd.f32 %v2028, %v619
  %v2048 = vmul.f32 %v2039, %v2047
  %v2049 = vadd.f32 %v1950, %v2048
  %v2050 = vtanh.pop %v2049
  %v2051 = vsub.f32 %v1839, %v2050
  %v2052 = vmul.f32 %v2046, %v2051
  %v2053 = vadd.f32 %v2050, %v2052
  %s2054 = sadd.s32 %s142, 6
  %v2055 = vstv %s2054
  %vm2056 = vcmp.lt.s32.totalorder %v2055, %v75
  %s2057 = sadd.s32 %s144, 1
  %v2058 = vstv %s2057
  %vm2059 = vcmp.lt.s32.totalorder %v2058, %v75
  %v2060 = vsel %vm2056, 1, 0
  %2061 = vset.pattern.permute.xlu0 0
  %2062 = vperm.xlu0 %2061, %v2060
  %v2063 = vpop.permute.xlu0 %2062
  %vm2064 = vcmp.eq.s32.totalorder %v2063, 1
  %v2065 = vsel %vm2064, %v1946, 0.0
  %s2066 = scalar_lea.vmem %s7, 48
  %2067 = vst [vmem:[%s2066] sm:$0xff] %v2065
  %v2068 = vsel %vm2059, 1, 0
  %2069 = vset.pattern.permute.xlu0 0
  %2070 = vperm.xlu0 %2069, %v2068
  %v2071 = vpop.permute.xlu0 %2070
  %vm2072 = vcmp.eq.s32.totalorder %v2071, 1
  %v2073 = vsel %vm2072, %v2053, 0.0
  %s2074 = scalar_lea.vmem %s65, 8
  %2075 = vst [vmem:[%s2074] sm:$0xff] %v2073
  %v2076 = vsel %vm2064, %v1946, %v1838
  %v2077 = vsel %vm2072, %v2053, %v1839
  %s2078 = scalar_lea.vmem %s1, 168
  %v2079 = vld [vmem:[%s2078] sm:$0xff]
  %v2080 = vld [vmem:[%s2078 + $0x8] sm:$0xff]
  %v2081 = vld [vmem:[%s2078 + $0x10] sm:$0xff]
  %v2082 = vpack.c.bf16 %v2076, %v2076
  %2083 = vmatprep.subr.bf16.mxu0 %v232
  %2084 = vmatpush1.bf16.msra.mxu0 %v231
  %2085 = vmatprep.subr.bf16.mxu0 %v235
  %2086 = vmatpush1.bf16.msra.mxu0 %v234
  %2087 = vmatprep.subr.bf16.mxu0 %v238
  %2088 = vmatpush1.bf16.msra.mxu0 %v237
  %2089 = vmatprep.subr.bf16.mxu0 %v241
  %2090 = vmatpush1.bf16.msra.mxu0 %v240
  %2091 = vmatprep.subr.bf16.mxu0 %v244
  %2092 = vmatpush1.bf16.msra.mxu0 %v243
  %2093 = vmatprep.subr.bf16.mxu0 %v247
  %2094 = vmatpush1.bf16.msra.mxu0 %v246
  %2095 = vmatprep.subr.bf16.mxu0 %v250
  %2096 = vmatpush1.bf16.msra.mxu0 %v249
  %2097 = vmatprep.subr.bf16.mxu0 %v253
  %2098 = vmatpush1.bf16.msra.mxu0 %v252
  %2099 = vmatprep.subr.bf16.mxu0 0
  %2100 = vmatpush1.bf16.msra.mxu0 0
  %2101 = vmatprep.subr.bf16.mxu0 0
  %2102 = vmatpush1.bf16.msra.mxu0 0
  %2103 = vmatprep.subr.bf16.mxu0 0
  %2104 = vmatpush1.bf16.msra.mxu0 0
  %2105 = vmatprep.subr.bf16.mxu0 0
  %2106 = vmatpush1.bf16.msra.mxu0 0
  %2107 = vmatprep.subr.bf16.mxu0 0
  %2108 = vmatpush1.bf16.msra.mxu0 0
  %2109 = vmatprep.subr.bf16.mxu0 0
  %2110 = vmatpush1.bf16.msra.mxu0 0
  %2111 = vmatprep.subr.bf16.mxu0 0
  %2112 = vmatpush1.bf16.msra.mxu0 0
  %2113 = vmatprep.subr.bf16.mxu0 0
  %2114 = vmatpush1.bf16.msra.mxu0 0
  %2115 = vmatprep.mubr.bf16.mxu0 0
  %2116 = vmatmul.mubr.bf16.gmra.mrb[0].mxu0 %v2082
  %v2117 = vpop.f32.mrb[0].mxu0
  %v2118 = vadd.f32 0.0, %v2117
  %v2119 = vpop.f32.mrb[0].mxu0
  %v2120 = vadd.f32 0.0, %v2119
  %v2121 = vpop.f32.mrb[0].mxu0
  %v2122 = vpop.f32.mrb[0].mxu0
  %2123 = vdwg.mxu0
  %2124 = vmatprep.subr.bf16.mxu0 0
  %2125 = vmatpush1.bf16.msra.mxu0 %v233
  %2126 = vmatprep.subr.bf16.mxu0 0
  %2127 = vmatpush1.bf16.msra.mxu0 %v236
  %2128 = vmatprep.subr.bf16.mxu0 0
  %2129 = vmatpush1.bf16.msra.mxu0 %v239
  %2130 = vmatprep.subr.bf16.mxu0 0
  %2131 = vmatpush1.bf16.msra.mxu0 %v242
  %2132 = vmatprep.subr.bf16.mxu0 0
  %2133 = vmatpush1.bf16.msra.mxu0 %v245
  %2134 = vmatprep.subr.bf16.mxu0 0
  %2135 = vmatpush1.bf16.msra.mxu0 %v248
  %2136 = vmatprep.subr.bf16.mxu0 0
  %2137 = vmatpush1.bf16.msra.mxu0 %v251
  %2138 = vmatprep.subr.bf16.mxu0 0
  %2139 = vmatpush1.bf16.msra.mxu0 %v254
  %2140 = vmatprep.subr.bf16.mxu0 0
  %2141 = vmatpush1.bf16.msra.mxu0 0
  %2142 = vmatprep.subr.bf16.mxu0 0
  %2143 = vmatpush1.bf16.msra.mxu0 0
  %2144 = vmatprep.subr.bf16.mxu0 0
  %2145 = vmatpush1.bf16.msra.mxu0 0
  %2146 = vmatprep.subr.bf16.mxu0 0
  %2147 = vmatpush1.bf16.msra.mxu0 0
  %2148 = vmatprep.subr.bf16.mxu0 0
  %2149 = vmatpush1.bf16.msra.mxu0 0
  %2150 = vmatprep.subr.bf16.mxu0 0
  %2151 = vmatpush1.bf16.msra.mxu0 0
  %2152 = vmatprep.subr.bf16.mxu0 0
  %2153 = vmatpush1.bf16.msra.mxu0 0
  %2154 = vmatprep.subr.bf16.mxu0 0
  %2155 = vmatpush1.bf16.msra.mxu0 0
  %2156 = vmatprep.mubr.bf16.mxu0 0
  %2157 = vmatmul.mubr.bf16.gmra.mrb[0].mxu0 %v2082
  %v2158 = vpop.f32.mrb[0].mxu0
  %v2159 = vadd.f32 0.0, %v2158
  %v2160 = vpop.f32.mrb[0].mxu0
  %v2161 = vpop.f32.mrb[0].mxu0
  %v2162 = vpop.f32.mrb[0].mxu0
  %2163 = vdwg.mxu0
  %v2164 = vadd.f32 %v2079, %v2118
  %v2165 = vxor.u32 %v2164, 2147483648
  %v2166 = vmul.f32 %v2165, 1.442695
  %v2167 = vpow.pop %v2166
  %v2168 = vadd.f32 %v2167, 1.0
  %v2169 = vrcp.pop %v2168
  %v2170 = vmul.f32 1.0, %v2169
  %v2171 = vadd.f32 %v2080, %v2120
  %v2172 = vxor.u32 %v2171, 2147483648
  %v2173 = vmul.f32 %v2172, 1.442695
  %v2174 = vpow.pop %v2173
  %v2175 = vadd.f32 %v2174, 1.0
  %v2176 = vrcp.pop %v2175
  %v2177 = vmul.f32 1.0, %v2176
  %v2178 = vadd.f32 %v2159, %v378
  %v2179 = vmul.f32 %v2170, %v2178
  %v2180 = vadd.f32 %v2081, %v2179
  %v2181 = vtanh.pop %v2180
  %v2182 = vsub.f32 %v2076, %v2181
  %v2183 = vmul.f32 %v2177, %v2182
  %v2184 = vadd.f32 %v2181, %v2183
  %v2185 = vld [vmem:[%s57] sm:$0xff]
  %v2186 = vld [vmem:[%s57 + $0x8] sm:$0xff]
  %v2187 = vld [vmem:[%s57 + $0x10] sm:$0xff]
  %v2188 = vpack.c.bf16 %v2077, %v2077
  %2189 = vmatprep.subr.bf16.mxu0 %v473
  %2190 = vmatpush1.bf16.msra.mxu0 %v472
  %2191 = vmatprep.subr.bf16.mxu0 %v476
  %2192 = vmatpush1.bf16.msra.mxu0 %v475
  %2193 = vmatprep.subr.bf16.mxu0 %v479
  %2194 = vmatpush1.bf16.msra.mxu0 %v478
  %2195 = vmatprep.subr.bf16.mxu0 %v482
  %2196 = vmatpush1.bf16.msra.mxu0 %v481
  %2197 = vmatprep.subr.bf16.mxu0 %v485
  %2198 = vmatpush1.bf16.msra.mxu0 %v484
  %2199 = vmatprep.subr.bf16.mxu0 %v488
  %2200 = vmatpush1.bf16.msra.mxu0 %v487
  %2201 = vmatprep.subr.bf16.mxu0 %v491
  %2202 = vmatpush1.bf16.msra.mxu0 %v490
  %2203 = vmatprep.subr.bf16.mxu0 %v494
  %2204 = vmatpush1.bf16.msra.mxu0 %v493
  %2205 = vmatprep.subr.bf16.mxu0 0
  %2206 = vmatpush1.bf16.msra.mxu0 0
  %2207 = vmatprep.subr.bf16.mxu0 0
  %2208 = vmatpush1.bf16.msra.mxu0 0
  %2209 = vmatprep.subr.bf16.mxu0 0
  %2210 = vmatpush1.bf16.msra.mxu0 0
  %2211 = vmatprep.subr.bf16.mxu0 0
  %2212 = vmatpush1.bf16.msra.mxu0 0
  %2213 = vmatprep.subr.bf16.mxu0 0
  %2214 = vmatpush1.bf16.msra.mxu0 0
  %2215 = vmatprep.subr.bf16.mxu0 0
  %2216 = vmatpush1.bf16.msra.mxu0 0
  %2217 = vmatprep.subr.bf16.mxu0 0
  %2218 = vmatpush1.bf16.msra.mxu0 0
  %2219 = vmatprep.subr.bf16.mxu0 0
  %2220 = vmatpush1.bf16.msra.mxu0 0
  %2221 = vmatprep.mubr.bf16.mxu0 0
  %2222 = vmatmul.mubr.bf16.gmra.mrb[0].mxu0 %v2188
  %v2223 = vpop.f32.mrb[0].mxu0
  %v2224 = vadd.f32 0.0, %v2223
  %v2225 = vpop.f32.mrb[0].mxu0
  %v2226 = vadd.f32 0.0, %v2225
  %v2227 = vpop.f32.mrb[0].mxu0
  %v2228 = vpop.f32.mrb[0].mxu0
  %2229 = vdwg.mxu0
  %2230 = vmatprep.subr.bf16.mxu0 0
  %2231 = vmatpush1.bf16.msra.mxu0 %v474
  %2232 = vmatprep.subr.bf16.mxu0 0
  %2233 = vmatpush1.bf16.msra.mxu0 %v477
  %2234 = vmatprep.subr.bf16.mxu0 0
  %2235 = vmatpush1.bf16.msra.mxu0 %v480
  %2236 = vmatprep.subr.bf16.mxu0 0
  %2237 = vmatpush1.bf16.msra.mxu0 %v483
  %2238 = vmatprep.subr.bf16.mxu0 0
  %2239 = vmatpush1.bf16.msra.mxu0 %v486
  %2240 = vmatprep.subr.bf16.mxu0 0
  %2241 = vmatpush1.bf16.msra.mxu0 %v489
  %2242 = vmatprep.subr.bf16.mxu0 0
  %2243 = vmatpush1.bf16.msra.mxu0 %v492
  %2244 = vmatprep.subr.bf16.mxu0 0
  %2245 = vmatpush1.bf16.msra.mxu0 %v495
  %2246 = vmatprep.subr.bf16.mxu0 0
  %2247 = vmatpush1.bf16.msra.mxu0 0
  %2248 = vmatprep.subr.bf16.mxu0 0
  %2249 = vmatpush1.bf16.msra.mxu0 0
  %2250 = vmatprep.subr.bf16.mxu0 0
  %2251 = vmatpush1.bf16.msra.mxu0 0
  %2252 = vmatprep.subr.bf16.mxu0 0
  %2253 = vmatpush1.bf16.msra.mxu0 0
  %2254 = vmatprep.subr.bf16.mxu0 0
  %2255 = vmatpush1.bf16.msra.mxu0 0
  %2256 = vmatprep.subr.bf16.mxu0 0
  %2257 = vmatpush1.bf16.msra.mxu0 0
  %2258 = vmatprep.subr.bf16.mxu0 0
  %2259 = vmatpush1.bf16.msra.mxu0 0
  %2260 = vmatprep.subr.bf16.mxu0 0
  %2261 = vmatpush1.bf16.msra.mxu0 0
  %2262 = vmatprep.mubr.bf16.mxu0 0
  %2263 = vmatmul.mubr.bf16.gmra.mrb[0].mxu0 %v2188
  %v2264 = vpop.f32.mrb[0].mxu0
  %v2265 = vadd.f32 0.0, %v2264
  %v2266 = vpop.f32.mrb[0].mxu0
  %v2267 = vpop.f32.mrb[0].mxu0
  %v2268 = vpop.f32.mrb[0].mxu0
  %2269 = vdwg.mxu0
  %v2270 = vadd.f32 %v2185, %v2224
  %v2271 = vxor.u32 %v2270, 2147483648
  %v2272 = vmul.f32 %v2271, 1.442695
  %v2273 = vpow.pop %v2272
  %v2274 = vadd.f32 %v2273, 1.0
  %v2275 = vrcp.pop %v2274
  %v2276 = vmul.f32 1.0, %v2275
  %v2277 = vadd.f32 %v2186, %v2226
  %v2278 = vxor.u32 %v2277, 2147483648
  %v2279 = vmul.f32 %v2278, 1.442695
  %v2280 = vpow.pop %v2279
  %v2281 = vadd.f32 %v2280, 1.0
  %v2282 = vrcp.pop %v2281
  %v2283 = vmul.f32 1.0, %v2282
  %v2284 = vadd.f32 %v2265, %v619
  %v2285 = vmul.f32 %v2276, %v2284
  %v2286 = vadd.f32 %v2187, %v2285
  %v2287 = vtanh.pop %v2286
  %v2288 = vsub.f32 %v2077, %v2287
  %v2289 = vmul.f32 %v2283, %v2288
  %v2290 = vadd.f32 %v2287, %v2289
  %s2291 = sadd.s32 %s142, 7
  %v2292 = vstv %s2291
  %vm2293 = vcmp.lt.s32.totalorder %v2292, %v75
  %v2294 = vstv %s144
  %vm2295 = vcmp.lt.s32.totalorder %v2294, %v75
  %v2296 = vsel %vm2293, 1, 0
  %2297 = vset.pattern.permute.xlu0 0
  %2298 = vperm.xlu0 %2297, %v2296
  %v2299 = vpop.permute.xlu0 %2298
  %vm2300 = vcmp.eq.s32.totalorder %v2299, 1
  %v2301 = vsel %vm2300, %v2184, 0.0
  %s2302 = scalar_lea.vmem %s7, 56
  %2303 = vst [vmem:[%s2302] sm:$0xff] %v2301
  %v2304 = vsel %vm2295, 1, 0
  %2305 = vset.pattern.permute.xlu0 0
  %2306 = vperm.xlu0 %2305, %v2304
  %v2307 = vpop.permute.xlu0 %2306
  %vm2308 = vcmp.eq.s32.totalorder %v2307, 1
  %v2309 = vsel %vm2308, %v2290, 0.0
  %2310 = vst [vmem:[%s65] sm:$0xff] %v2309
  %v2311 = vsel %vm2300, %v2184, %v2076
  %v2312 = vsel %vm2308, %v2290, %v2077
  %2313 = vst [vmem:[#allocation2] sm:$0xff] %v2311
  %2314 = vst [vmem:[#allocation3] sm:$0xff] %v2312
  %2315 = vst [vmem:[%s9] sm:$0xff] %v2311
  %s2316 = scalar_lea.vmem %s9, 8
  %2317 = vst [vmem:[%s2316] sm:$0xff] %v2312
  %s2318 = ssub.s32 0, 0
  %s2319 = smul.u32 8, %s2318
  %p2320 = scmp.lt.s32.totalorder %s2319, 7
  %s2321 = scalar_select %p2320, %s2319, 7
  %s2322 = smul.addr %s2321, 8
  %s2323 = scalar_lea.vmem %s8, %s2322
  // Predicated region
  $region34: #{encoder_rnn_forward.1} parent=0 // pred_check
    _
  $region35: #{encoder_rnn_forward.1} parent=0 // pred_check_branch
    %2325 = sbr.rel (0) target = $region37
  $region36: #{encoder_rnn_forward.1} parent=0 // pred_region
    _
  $region37: #{encoder_rnn_forward.1} parent=0 // pred_fallthru
    _
  // Predicated region
  $region38: #{encoder_rnn_forward.1} parent=0 // pred_check
    _
  $region39: #{encoder_rnn_forward.1} parent=0 // pred_check_branch
    %2327 = sbr.rel (0) target = $region41
  $region40: #{encoder_rnn_forward.1} parent=0 // pred_region
    %s2328 = ssub.s32 0, 0
    %s2329 = smul.u32 8, %s2328
  $region41: #{encoder_rnn_forward.1} parent=0 // pred_fallthru
    _
  // Predicated region
  $region42: #{encoder_rnn_forward.1} parent=0 // pred_check
    _
  $region43: #{encoder_rnn_forward.1} parent=0 // pred_check_branch
    %2331 = sbr.rel (0) target = $region45
  $region44: #{encoder_rnn_forward.1} parent=0 // pred_region
    _
  $region45: #{encoder_rnn_forward.1} parent=0 // pred_fallthru
    _
  // Predicated region
  $region46: #{encoder_rnn_forward.1} parent=0 // pred_check
    _
  $region47: #{encoder_rnn_forward.1} parent=0 // pred_check_branch
    %2333 = sbr.rel (0) target = $region49
  $region48: #{encoder_rnn_forward.1} parent=0 // pred_region
    _
  $region49: #{encoder_rnn_forward.1} parent=0 // pred_fallthru
    _
  // Predicated region
  $region50: #{encoder_rnn_forward.1} parent=0 // pred_check
    _
  $region51: #{encoder_rnn_forward.1} parent=0 // pred_check_branch
    %2335 = sbr.rel (0) target = $region53
  $region52: #{encoder_rnn_forward.1} parent=0 // pred_region
    %s2336 = ssub.s32 0, 0
    %s2337 = smul.u32 8, %s2336
    %p2338 = scmp.lt.s32.totalorder %s2337, 7
    %s2339 = scalar_select %p2338, %s2337, 7
    %s2340 = smul.addr %s2339, 8
    %s2341 = scalar_lea.vmem %s8, %s2340
  $region53: #{encoder_rnn_forward.1} parent=0 // pred_fallthru
    _
  // Predicated region
  $region54: #{encoder_rnn_forward.1} parent=0 // pred_check
    _
  $region55: #{encoder_rnn_forward.1} parent=0 // pred_check_branch
    %2343 = sbr.rel (0) target = $region57
  $region56: #{encoder_rnn_forward.1} parent=0 // pred_region
    _
  $region57: #{encoder_rnn_forward.1} parent=0 // pred_fallthru
    _

</llo_original>
